<compile_context>
chip_gen: v5e
topology: v5e:2x2
jax: 0.10.0
libtpu: 0.0.40
codegen_flags: <defaults>
</compile_context>

<pallas_src>
import functools

import jax
import jax.numpy as jnp
from jax.experimental import pallas as pl
from jax.experimental.pallas import tpu as pltpu

# --- module-consistent sizes -------------------------------------------------
E = 32     # embedding_size
H = 32     # hidden_size
V1 = 64    # vocab_size_l1
V2 = 64    # vocab_size_l2
T1 = 8     # len(words_l1)
T2 = 6     # len(words_l2)
VSUM = V1 + V2          # 128 lanes: [f logits | g logits]

BATCH = 16              # sentence pairs per call
NUM_CHUNKS = 2          # grid steps (megacore-parallel on v7x); B/NUM_CHUNKS folds into M


# --- kernel-side math helpers ------------------------------------------------
def _sigmoid(x):
    # exact sigmoid: keep the approximate reciprocal off the recurrent path.
    return 1.0 / (1.0 + jnp.exp(-x))


def _softplus(x):
    return jnp.maximum(x, 0.0) + jnp.log(1.0 + jnp.exp(-jnp.abs(x)))


def _fold_rows(x, nblocks, rows):
    # (nblocks*rows, 1) -> (rows, 1): static, sublane-aligned block sum.
    acc = x[0:rows, :]
    for k in range(1, nblocks):
        acc = acc + x[k * rows:(k + 1) * rows, :]
    return acc


# --- the Pallas kernel (bc sentence pairs folded into the M dimension) --------
def _make_kernel(bc):
    rows_h = T1 * bc              # LSTM-state rows per chunk (time-major: t*bc + b)
    rows_z = (T2 + 1) * rows_h    # z rows per chunk: f block then T2 g blocks

    def kernel(
        x_ref,      # (rows_h, 2E) bf16   row t*bc+b = [emb[b,t] | emb[b,T1-1-t]]
        win_ref,    # (2E, 8H)     bf16   packed input->gate weights (block-diag, interleaved)
        bin_ref,    # (1, 8H)      f32    packed gate biases
        wrec_ref,   # (2H, 8H)     bf16   packed recurrent weights
        wus_ref,    # (2H, 2H)     bf16   [wU.T | wS.T]
        bus_ref,    # (1, 2H)      f32    [bU | bS]
        wfg_ref,    # (H, VSUM)    bf16   [wf.T | wg.T]
        bfg_ref,    # (1, VSUM)    f32    [bf | bg]
        eps_ref,    # (rows_z, H)  f32    N(0,1) noise (f block then g blocks)
        idx_ref,    # (rows_z, 1)  i32    target column per z row
        out_ref,    # (bc, 1)      f32    per-example loss
    ):
        # (1) input->gate pre-activations for all (t, b) rows, both directions.
        gx = jnp.dot(x_ref[...], win_ref[...],
                     preferred_element_type=jnp.float32) + bin_ref[...]   # (rows_h, 8H)

        # TODO(synk): on v6e/v7x consider pinning w_rec in the MXU across the
        # unrolled recurrence (pltpu.matmul_push_rhs/matmul_acc_lhs/matmul_pop)
        # once a bundle dump confirms Mosaic re-pushes the RHS every step.
        w_rec = wrec_ref[...]                                             # (2H, 8H) bf16

        # (2) fused bidirectional recurrence; one (bc,2H)@(2H,8H) dot per step,
        #     fully unrolled (T1 static).  Carry packs [h_fwd | h_bwd]; gate
        #     lanes are [i_f,i_b,f_f,f_b,g_f,g_b,o_f,o_b] (32 lanes each).
        h = jnp.zeros((bc, 2 * H), jnp.float32)
        c = jnp.zeros((bc, 2 * H), jnp.float32)
        hs = []
        for t in range(T1):
            gates = gx[t * bc:(t + 1) * bc, :] + jnp.dot(
                h.astype(jnp.bfloat16), w_rec, preferred_element_type=jnp.float32)
            sig = _sigmoid(gates)                        # one full-row sigmoid
            i_g = sig[:, 0:2 * H]
            f_g = sig[:, 2 * H:4 * H]
            g_g = jnp.tanh(gates[:, 4 * H:6 * H])        # one 2H-lane tanh
            o_g = sig[:, 6 * H:8 * H]
            c = f_g * c + i_g * g_g
            h = o_g * jnp.tanh(c)
            hs.append(h)      # fwd half belongs to time t, bwd half to time T1-1-t

        # (3) reassemble time-major hidden states with static slices (bwd half
        #     reversed here, off the dependent chain; no masked stores in loop).
        h_tm = jnp.concatenate(
            [jnp.concatenate([hs[t][:, 0:H], hs[T1 - 1 - t][:, H:2 * H]], axis=1)
             for t in range(T1)], axis=0)                                  # (rows_h, 2H)

        # (4) fused U/S projection.
        us = jnp.dot(h_tm.astype(jnp.bfloat16), wus_ref[...],
                     preferred_element_type=jnp.float32) + bus_ref[...]    # (rows_h, 2H)
        u = us[:, 0:H]
        s = _softplus(us[:, H:2 * H])

        # (5) per-example KL( N(u_t, diag(s_t^2)) || N(0, I) ).
        kl_row = jnp.sum(s * s + u * u - 1.0 - 2.0 * jnp.log(s),
                         axis=1, keepdims=True)                            # (rows_h, 1)
        kl_col = 0.5 * _fold_rows(kl_row, T1, bc)                          # (bc, 1)

        # (6) fused f/g heads on stacked reparameterized samples z = u + s*eps.
        z = (jnp.tile(u, (T2 + 1, 1))
             + jnp.tile(s, (T2 + 1, 1)) * eps_ref[...])                    # (rows_z, H)
        logits = jnp.dot(z.astype(jnp.bfloat16), wfg_ref[...],
                         preferred_element_type=jnp.float32) + bfg_ref[...]

        # (7) group-masked softmax (f rows -> lanes [0,V1), g rows -> [V1,VSUM))
        #     + integer-index selection (replaces the dense one-hot selector).
        row = jax.lax.broadcasted_iota(jnp.int32, logits.shape, 0)
        col = jax.lax.broadcasted_iota(jnp.int32, logits.shape, 1)
        valid = jnp.logical_xor(row < rows_h, col >= V1)
        masked = jnp.where(valid, logits, jnp.float32(-1e30))
        m = jnp.max(masked, axis=-1, keepdims=True)
        e = jnp.exp(masked - m)
        denom = jnp.sum(e, axis=-1, keepdims=True)
        hit = jnp.sum(jnp.where(col == idx_ref[...], e, 0.0),
                      axis=-1, keepdims=True)
        sel = hit * pl.reciprocal(denom, approx=True)    # p[row, idx[row]], (rows_z, 1)

        f_col = _fold_rows(sel[0:rows_h, :], T1, bc)                       # (bc, 1)
        g_col = _fold_rows(_fold_rows(sel[rows_h:rows_z, :], T2, rows_h),
                           T1, bc)                                         # (bc, 1)

        # forward() returns -loss + kl_loss = 2*kl - f_term - g_term/T2
        out_ref[...] = 2.0 * kl_col - f_col - g_col * (1.0 / T2)

    return kernel


# --- wrapper-side weight packing (pure JAX glue) ------------------------------
def _interleave_gates(a, b):
    """a, b: (R, 4H) with gate-major cols [i,f,g,o] ->
    (R, 8H) with cols [i_a,i_b,f_a,f_b,g_a,g_b,o_a,o_b]."""
    blocks = []
    for g in range(4):
        blocks.append(a[:, g * H:(g + 1) * H])
        blocks.append(b[:, g * H:(g + 1) * H])
    return jnp.concatenate(blocks, axis=1)


def _pack_weights(params):
    zE = jnp.zeros((E, 4 * H), jnp.float32)
    zH = jnp.zeros((H, 4 * H), jnp.float32)
    w_in = jnp.concatenate([
        _interleave_gates(params["wih_f"].T, zE),
        _interleave_gates(zE, params["wih_b"].T),
    ], axis=0)                                                           # (2E, 8H)
    b_in = _interleave_gates(
        (params["bih_f"] + params["bhh_f"]).reshape(1, -1),
        (params["bih_b"] + params["bhh_b"]).reshape(1, -1))              # (1, 8H)
    w_rec = jnp.concatenate([
        _interleave_gates(params["whh_f"].T, zH),
        _interleave_gates(zH, params["whh_b"].T),
    ], axis=0)                                                           # (2H, 8H)
    w_us = jnp.concatenate([params["wU"].T, params["wS"].T], axis=1)     # (2H, 2H)
    b_us = jnp.concatenate([params["bU"], params["bS"]]).reshape(1, -1)  # (1, 2H)
    w_fg = jnp.concatenate([params["wf"].T, params["wg"].T], axis=1)     # (H, VSUM)
    b_fg = jnp.concatenate([params["bf"], params["bg"]]).reshape(1, -1)  # (1, VSUM)
    bf16 = jnp.bfloat16
    return (w_in.astype(bf16), b_in, w_rec.astype(bf16),
            w_us.astype(bf16), b_us, w_fg.astype(bf16), b_fg)


@functools.partial(jax.jit, static_argnames=("num_chunks",))
def aligned_embeddings_forward(params, words_l1, words_l2, eps_f, eps_g,
                               *, num_chunks=NUM_CHUNKS):
    """Batched forward.  words_l1: (B,T1) int32, words_l2: (B,T2) int32,
    eps_f: (B,T1,H), eps_g: (B,T2*T1,H) N(0,1) noise.  Returns (B,) losses."""
    bsz = words_l1.shape[0]
    assert bsz % num_chunks == 0, "batch must divide evenly into grid chunks"
    bc = bsz // num_chunks
    rows_h = T1 * bc
    rows_z = (T2 + 1) * rows_h

    w_in, b_in, w_rec, w_us, b_us, w_fg, b_fg = _pack_weights(params)

    # TODO(synk): torch.distributions MultivariateNormal sampling has no Pallas
    # equivalent; it is reparameterized with host-supplied N(0,1) noise and
    # z = u + s*eps is computed in-kernel.
    emb = params["emb_table"][words_l1].astype(jnp.float32)              # (B,T1,E)
    xcat = jnp.concatenate([emb, emb[:, ::-1, :]], axis=-1)              # (B,T1,2E)
    x_packed = (xcat.reshape(num_chunks, bc, T1, 2 * E)
                    .transpose(0, 2, 1, 3)
                    .reshape(num_chunks, rows_h, 2 * E)
                    .astype(jnp.bfloat16))

    eps_stack = jnp.concatenate(
        [eps_f[:, None, :, :], eps_g.reshape(bsz, T2, T1, H)], axis=1)   # (B,T2+1,T1,H)
    eps_all = (eps_stack.reshape(num_chunks, bc, T2 + 1, T1, H)
                        .transpose(0, 2, 3, 1, 4)
                        .reshape(num_chunks, rows_z, H)
                        .astype(jnp.float32))

    # Integer target column per z row (f rows -> word_l1[t], g rows -> V1+word_l2[j]);
    # replaces the old dense (rows_z, 128) one-hot selector input (~80% of DMA bytes).
    idx_g = jnp.broadcast_to((V1 + words_l2)[:, :, None], (bsz, T2, T1))
    idx_stack = jnp.concatenate([words_l1[:, None, :], idx_g], axis=1)   # (B,T2+1,T1)
    idx_all = (idx_stack.reshape(num_chunks, bc, T2 + 1, T1)
                        .transpose(0, 2, 3, 1)
                        .reshape(num_chunks, rows_z, 1)
                        .astype(jnp.int32))

    const = lambda shape: pl.BlockSpec(shape, lambda g: (0, 0))
    per_g = lambda shape: pl.BlockSpec((None,) + shape, lambda g: (g, 0, 0))

    out = pl.pallas_call(
        _make_kernel(bc),
        out_shape=jax.ShapeDtypeStruct((num_chunks, bc, 1), jnp.float32),
        grid=(num_chunks,),
        in_specs=[
            per_g((rows_h, 2 * E)),       # x_packed (bf16)
            const((2 * E, 8 * H)),        # w_in   (VMEM-resident across grid)
            const((1, 8 * H)),            # b_in
            const((2 * H, 8 * H)),        # w_rec
            const((2 * H, 2 * H)),        # w_us
            const((1, 2 * H)),            # b_us
            const((H, VSUM)),             # w_fg
            const((1, VSUM)),             # b_fg
            per_g((rows_z, H)),           # eps
            per_g((rows_z, 1)),           # target column indices
        ],
        out_specs=pl.BlockSpec((None, bc, 1), lambda g: (g, 0, 0)),
        compiler_params=pltpu.CompilerParams(
            dimension_semantics=("parallel",)),
    )(x_packed, w_in, b_in, w_rec, w_us, b_us, w_fg, b_fg, eps_all, idx_all)
    return out.reshape(bsz)


# --- pure-JAX reference (exact module math, same noise) -----------------------
def _sigmoid_ref(x):
    return 1.0 / (1.0 + jnp.exp(-x))


def _softmax_ref(x):
    m = jnp.max(x, axis=-1, keepdims=True)
    e = jnp.exp(x - m)
    return e / jnp.sum(e, axis=-1, keepdims=True)


def reference_forward_single(params, words_l1, words_l2, eps_f, eps_g):
    emb = params["emb_table"][words_l1].astype(jnp.float32)

    def run_dir(wih, whh, b, reverse):
        gx = emb @ wih.T + b
        order = list(range(T1))[::-1] if reverse else list(range(T1))
        h = jnp.zeros((H,), jnp.float32)
        c = jnp.zeros((H,), jnp.float32)
        hs = [None] * T1
        for t in order:
            gates = gx[t] + whh @ h
            i_g = _sigmoid_ref(gates[0:H])
            f_g = _sigmoid_ref(gates[H:2 * H])
            g_g = jnp.tanh(gates[2 * H:3 * H])
            o_g = _sigmoid_ref(gates[3 * H:4 * H])
            c = f_g * c + i_g * g_g
            h = o_g * jnp.tanh(c)
            hs[t] = h
        return jnp.stack(hs)

    hf = run_dir(params["wih_f"], params["whh_f"],
                 params["bih_f"] + params["bhh_f"], False)
    hb = run_dir(params["wih_b"], params["whh_b"],
                 params["bih_b"] + params["bhh_b"], True)
    h = jnp.concatenate([hf, hb], axis=1)
    u = h @ params["wU"].T + params["bU"]
    s = jax.nn.softplus(h @ params["wS"].T + params["bS"])
    kl = 0.5 * jnp.sum(s * s + u * u - 1.0 - jnp.log(s * s))
    z_f = u + s * eps_f
    p_f = _softmax_ref(z_f @ params["wf"].T + params["bf"])
    f_term = jnp.sum(p_f * jax.nn.one_hot(words_l1, V1, dtype=jnp.float32))
    z_g = jnp.tile(u, (T2, 1)) + jnp.tile(s, (T2, 1)) * eps_g
    p_g = _softmax_ref(z_g @ params["wg"].T + params["bg"])
    oh2 = jnp.repeat(jax.nn.one_hot(words_l2, V2, dtype=jnp.float32), T1, axis=0)
    g_term = jnp.sum(p_g * oh2) / T2
    return 2.0 * kl - f_term - g_term


if __name__ == "__main__":
    key = jax.random.PRNGKey(0)
    keys = jax.random.split(key, 21)

    def rn(k, shape, scale=0.1):
        return (scale * jax.random.normal(k, shape)).astype(jnp.float32)

    params = {
        "emb_table": rn(keys[0], (V1, E), 0.5),
        "wih_f": rn(keys[1], (4 * H, E)), "whh_f": rn(keys[2], (4 * H, H)),
        "bih_f": rn(keys[3], (4 * H,)),   "bhh_f": rn(keys[4], (4 * H,)),
        "wih_b": rn(keys[5], (4 * H, E)), "whh_b": rn(keys[6], (4 * H, H)),
        "bih_b": rn(keys[7], (4 * H,)),   "bhh_b": rn(keys[8], (4 * H,)),
        "wU": rn(keys[9], (H, 2 * H)),    "bU": rn(keys[10], (H,)),
        "wS": rn(keys[11], (H, 2 * H)),   "bS": rn(keys[12], (H,)),
        "wf": rn(keys[13], (V1, H)),      "bf": rn(keys[14], (V1,)),
        "wg": rn(keys[15], (V2, H)),      "bg": rn(keys[16], (V2,)),
    }
    words_l1 = jax.random.randint(keys[17], (BATCH, T1), 0, V1)
    words_l2 = jax.random.randint(keys[18], (BATCH, T2), 0, V2)
    eps_f = jax.random.normal(keys[19], (BATCH, T1, H), jnp.float32)
    eps_g = jax.random.normal(keys[20], (BATCH, T2 * T1, H), jnp.float32)

    out = aligned_embeddings_forward(params, words_l1, words_l2, eps_f, eps_g,
                                     num_chunks=NUM_CHUNKS)
    out = jax.block_until_ready(out)

    ref = jax.jit(jax.vmap(reference_forward_single,
                           in_axes=(None, 0, 0, 0, 0)))(
        params, words_l1, words_l2, eps_f, eps_g)
    ref = jax.block_until_ready(ref)

    assert bool(jnp.all(jnp.isfinite(out))), "kernel produced non-finite output"
    err = float(jnp.max(jnp.abs(out - ref) / (1.0 + jnp.abs(ref))))
    assert err <= 5e-2, f"kernel/reference mismatch: max scaled error {err}"
    print("KERNEL_OK")
</pallas_src>

<mosaic_0001>
module attributes {stable_mosaic.version = 11 : i64} {
  func.func @kernel(%arg0: i32, %arg1: memref<1x64x64xbf16, #tpu.memory_space<vmem>>, %arg2: memref<64x256xbf16, #tpu.memory_space<vmem>>, %arg3: memref<1x256xf32, #tpu.memory_space<vmem>>, %arg4: memref<64x256xbf16, #tpu.memory_space<vmem>>, %arg5: memref<64x64xbf16, #tpu.memory_space<vmem>>, %arg6: memref<1x64xf32, #tpu.memory_space<vmem>>, %arg7: memref<32x128xbf16, #tpu.memory_space<vmem>>, %arg8: memref<1x128xf32, #tpu.memory_space<vmem>>, %arg9: memref<1x448x32xf32, #tpu.memory_space<vmem>>, %arg10: memref<1x448x1xi32, #tpu.memory_space<vmem>>, %arg11: memref<1x8x1xf32, #tpu.memory_space<vmem>>) attributes {dimension_semantics = [#tpu.dimension_semantics<parallel>], iteration_bounds = array<i64: 2>, scalar_prefetch = 0 : i64, scratch_operands = 0 : i64, tpu.core_type = #tpu.core_type<tc>, window_params = [{transform_indices = @transform_0, window_bounds = array<i64: 1, 64, 64>}, {pipeline_mode = #tpu.pipeline_mode<synchronous>, transform_indices = @transform_1, window_bounds = array<i64: 64, 256>}, {pipeline_mode = #tpu.pipeline_mode<synchronous>, transform_indices = @transform_2, window_bounds = array<i64: 1, 256>}, {pipeline_mode = #tpu.pipeline_mode<synchronous>, transform_indices = @transform_3, window_bounds = array<i64: 64, 256>}, {pipeline_mode = #tpu.pipeline_mode<synchronous>, transform_indices = @transform_4, window_bounds = array<i64: 64, 64>}, {pipeline_mode = #tpu.pipeline_mode<synchronous>, transform_indices = @transform_5, window_bounds = array<i64: 1, 64>}, {pipeline_mode = #tpu.pipeline_mode<synchronous>, transform_indices = @transform_6, window_bounds = array<i64: 32, 128>}, {pipeline_mode = #tpu.pipeline_mode<synchronous>, transform_indices = @transform_7, window_bounds = array<i64: 1, 128>}, {transform_indices = @transform_8, window_bounds = array<i64: 1, 448, 32>}, {transform_indices = @transform_9, window_bounds = array<i64: 1, 448, 1>}, {transform_indices = @transform_10, window_bounds = array<i64: 1, 8, 1>}]} {
    %c0 = arith.constant 0 : index
    %c0_0 = arith.constant 0 : index
    %c0_1 = arith.constant 0 : index
    %0 = vector.load %arg1[%c0, %c0_0, %c0_1] : memref<1x64x64xbf16, #tpu.memory_space<vmem>>, vector<1x64x64xbf16>
    %1 = vector.shape_cast %0 : vector<1x64x64xbf16> to vector<64x64xbf16>
    %c0_2 = arith.constant 0 : index
    %c0_3 = arith.constant 0 : index
    %2 = vector.load %arg2[%c0_2, %c0_3] : memref<64x256xbf16, #tpu.memory_space<vmem>>, vector<64x256xbf16>
    %cst = arith.constant dense<0.000000e+00> : vector<64x256xf32>
    %3 = tpu.matmul %1, %2, %cst {dimension_numbers = #tpu.dot_dimension_numbers<[1], [0], [0], [1], [0, 0, 1, 1], [], []>} : vector<64x64xbf16>, vector<64x256xbf16>, vector<64x256xf32> -> vector<64x256xf32>
    %c0_4 = arith.constant 0 : index
    %c0_5 = arith.constant 0 : index
    %4 = vector.load %arg3[%c0_4, %c0_5] : memref<1x256xf32, #tpu.memory_space<vmem>>, vector<1x256xf32>
    %5 = vector.broadcast %4 : vector<1x256xf32> to vector<64x256xf32>
    %6 = arith.addf %3, %5 : vector<64x256xf32>
    %c0_6 = arith.constant 0 : index
    %c0_7 = arith.constant 0 : index
    %7 = vector.load %arg4[%c0_6, %c0_7] : memref<64x256xbf16, #tpu.memory_space<vmem>>, vector<64x256xbf16>
    %cst_8 = arith.constant 0.000000e+00 : f32
    %8 = vector.broadcast %cst_8 : f32 to vector<8x64xf32>
    %cst_9 = arith.constant 0.000000e+00 : f32
    %9 = vector.broadcast %cst_9 : f32 to vector<8x64xf32>
    %10 = vector.extract_strided_slice %6 {offsets = [0, 0], sizes = [8, 256], strides = [1, 1]} : vector<64x256xf32> to vector<8x256xf32>
    %11 = arith.truncf %8 : vector<8x64xf32> to vector<8x64xbf16>
    %cst_10 = arith.constant dense<0.000000e+00> : vector<8x256xf32>
    %12 = tpu.matmul %11, %7, %cst_10 {dimension_numbers = #tpu.dot_dimension_numbers<[1], [0], [0], [1], [0, 0, 1, 1], [], []>} : vector<8x64xbf16>, vector<64x256xbf16>, vector<8x256xf32> -> vector<8x256xf32>
    %13 = arith.addf %10, %12 : vector<8x256xf32>
    %cst_11 = arith.constant 0.000000e+00 : f32
    %14 = vector.broadcast %cst_11 : f32 to vector<8x256xf32>
    %15 = arith.subf %14, %13 : vector<8x256xf32>
    %16 = math.exp %15 : vector<8x256xf32>
    %cst_12 = arith.constant 1.000000e+00 : f32
    %17 = vector.broadcast %cst_12 : f32 to vector<8x256xf32>
    %18 = arith.addf %17, %16 : vector<8x256xf32>
    %cst_13 = arith.constant 1.000000e+00 : f32
    %19 = vector.broadcast %cst_13 : f32 to vector<8x256xf32>
    %20 = arith.divf %19, %18 : vector<8x256xf32>
    %21 = vector.extract_strided_slice %20 {offsets = [0, 0], sizes = [8, 64], strides = [1, 1]} : vector<8x256xf32> to vector<8x64xf32>
    %22 = vector.extract_strided_slice %20 {offsets = [0, 64], sizes = [8, 64], strides = [1, 1]} : vector<8x256xf32> to vector<8x64xf32>
    %23 = vector.extract_strided_slice %13 {offsets = [0, 128], sizes = [8, 64], strides = [1, 1]} : vector<8x256xf32> to vector<8x64xf32>
    %24 = math.tanh %23 : vector<8x64xf32>
    %25 = vector.extract_strided_slice %20 {offsets = [0, 192], sizes = [8, 64], strides = [1, 1]} : vector<8x256xf32> to vector<8x64xf32>
    %26 = arith.mulf %22, %9 : vector<8x64xf32>
    %27 = arith.mulf %21, %24 : vector<8x64xf32>
    %28 = arith.addf %26, %27 : vector<8x64xf32>
    %29 = math.tanh %28 : vector<8x64xf32>
    %30 = arith.mulf %25, %29 : vector<8x64xf32>
    %31 = vector.extract_strided_slice %6 {offsets = [8, 0], sizes = [8, 256], strides = [1, 1]} : vector<64x256xf32> to vector<8x256xf32>
    %32 = arith.truncf %30 : vector<8x64xf32> to vector<8x64xbf16>
    %cst_14 = arith.constant dense<0.000000e+00> : vector<8x256xf32>
    %33 = tpu.matmul %32, %7, %cst_14 {dimension_numbers = #tpu.dot_dimension_numbers<[1], [0], [0], [1], [0, 0, 1, 1], [], []>} : vector<8x64xbf16>, vector<64x256xbf16>, vector<8x256xf32> -> vector<8x256xf32>
    %34 = arith.addf %31, %33 : vector<8x256xf32>
    %cst_15 = arith.constant 0.000000e+00 : f32
    %35 = vector.broadcast %cst_15 : f32 to vector<8x256xf32>
    %36 = arith.subf %35, %34 : vector<8x256xf32>
    %37 = math.exp %36 : vector<8x256xf32>
    %cst_16 = arith.constant 1.000000e+00 : f32
    %38 = vector.broadcast %cst_16 : f32 to vector<8x256xf32>
    %39 = arith.addf %38, %37 : vector<8x256xf32>
    %cst_17 = arith.constant 1.000000e+00 : f32
    %40 = vector.broadcast %cst_17 : f32 to vector<8x256xf32>
    %41 = arith.divf %40, %39 : vector<8x256xf32>
    %42 = vector.extract_strided_slice %41 {offsets = [0, 0], sizes = [8, 64], strides = [1, 1]} : vector<8x256xf32> to vector<8x64xf32>
    %43 = vector.extract_strided_slice %41 {offsets = [0, 64], sizes = [8, 64], strides = [1, 1]} : vector<8x256xf32> to vector<8x64xf32>
    %44 = vector.extract_strided_slice %34 {offsets = [0, 128], sizes = [8, 64], strides = [1, 1]} : vector<8x256xf32> to vector<8x64xf32>
    %45 = math.tanh %44 : vector<8x64xf32>
    %46 = vector.extract_strided_slice %41 {offsets = [0, 192], sizes = [8, 64], strides = [1, 1]} : vector<8x256xf32> to vector<8x64xf32>
    %47 = arith.mulf %43, %28 : vector<8x64xf32>
    %48 = arith.mulf %42, %45 : vector<8x64xf32>
    %49 = arith.addf %47, %48 : vector<8x64xf32>
    %50 = math.tanh %49 : vector<8x64xf32>
    %51 = arith.mulf %46, %50 : vector<8x64xf32>
    %52 = vector.extract_strided_slice %6 {offsets = [16, 0], sizes = [8, 256], strides = [1, 1]} : vector<64x256xf32> to vector<8x256xf32>
    %53 = arith.truncf %51 : vector<8x64xf32> to vector<8x64xbf16>
    %cst_18 = arith.constant dense<0.000000e+00> : vector<8x256xf32>
    %54 = tpu.matmul %53, %7, %cst_18 {dimension_numbers = #tpu.dot_dimension_numbers<[1], [0], [0], [1], [0, 0, 1, 1], [], []>} : vector<8x64xbf16>, vector<64x256xbf16>, vector<8x256xf32> -> vector<8x256xf32>
    %55 = arith.addf %52, %54 : vector<8x256xf32>
    %cst_19 = arith.constant 0.000000e+00 : f32
    %56 = vector.broadcast %cst_19 : f32 to vector<8x256xf32>
    %57 = arith.subf %56, %55 : vector<8x256xf32>
    %58 = math.exp %57 : vector<8x256xf32>
    %cst_20 = arith.constant 1.000000e+00 : f32
    %59 = vector.broadcast %cst_20 : f32 to vector<8x256xf32>
    %60 = arith.addf %59, %58 : vector<8x256xf32>
    %cst_21 = arith.constant 1.000000e+00 : f32
    %61 = vector.broadcast %cst_21 : f32 to vector<8x256xf32>
    %62 = arith.divf %61, %60 : vector<8x256xf32>
    %63 = vector.extract_strided_slice %62 {offsets = [0, 0], sizes = [8, 64], strides = [1, 1]} : vector<8x256xf32> to vector<8x64xf32>
    %64 = vector.extract_strided_slice %62 {offsets = [0, 64], sizes = [8, 64], strides = [1, 1]} : vector<8x256xf32> to vector<8x64xf32>
    %65 = vector.extract_strided_slice %55 {offsets = [0, 128], sizes = [8, 64], strides = [1, 1]} : vector<8x256xf32> to vector<8x64xf32>
    %66 = math.tanh %65 : vector<8x64xf32>
    %67 = vector.extract_strided_slice %62 {offsets = [0, 192], sizes = [8, 64], strides = [1, 1]} : vector<8x256xf32> to vector<8x64xf32>
    %68 = arith.mulf %64, %49 : vector<8x64xf32>
    %69 = arith.mulf %63, %66 : vector<8x64xf32>
    %70 = arith.addf %68, %69 : vector<8x64xf32>
    %71 = math.tanh %70 : vector<8x64xf32>
    %72 = arith.mulf %67, %71 : vector<8x64xf32>
    %73 = vector.extract_strided_slice %6 {offsets = [24, 0], sizes = [8, 256], strides = [1, 1]} : vector<64x256xf32> to vector<8x256xf32>
    %74 = arith.truncf %72 : vector<8x64xf32> to vector<8x64xbf16>
    %cst_22 = arith.constant dense<0.000000e+00> : vector<8x256xf32>
    %75 = tpu.matmul %74, %7, %cst_22 {dimension_numbers = #tpu.dot_dimension_numbers<[1], [0], [0], [1], [0, 0, 1, 1], [], []>} : vector<8x64xbf16>, vector<64x256xbf16>, vector<8x256xf32> -> vector<8x256xf32>
    %76 = arith.addf %73, %75 : vector<8x256xf32>
    %cst_23 = arith.constant 0.000000e+00 : f32
    %77 = vector.broadcast %cst_23 : f32 to vector<8x256xf32>
    %78 = arith.subf %77, %76 : vector<8x256xf32>
    %79 = math.exp %78 : vector<8x256xf32>
    %cst_24 = arith.constant 1.000000e+00 : f32
    %80 = vector.broadcast %cst_24 : f32 to vector<8x256xf32>
    %81 = arith.addf %80, %79 : vector<8x256xf32>
    %cst_25 = arith.constant 1.000000e+00 : f32
    %82 = vector.broadcast %cst_25 : f32 to vector<8x256xf32>
    %83 = arith.divf %82, %81 : vector<8x256xf32>
    %84 = vector.extract_strided_slice %83 {offsets = [0, 0], sizes = [8, 64], strides = [1, 1]} : vector<8x256xf32> to vector<8x64xf32>
    %85 = vector.extract_strided_slice %83 {offsets = [0, 64], sizes = [8, 64], strides = [1, 1]} : vector<8x256xf32> to vector<8x64xf32>
    %86 = vector.extract_strided_slice %76 {offsets = [0, 128], sizes = [8, 64], strides = [1, 1]} : vector<8x256xf32> to vector<8x64xf32>
    %87 = math.tanh %86 : vector<8x64xf32>
    %88 = vector.extract_strided_slice %83 {offsets = [0, 192], sizes = [8, 64], strides = [1, 1]} : vector<8x256xf32> to vector<8x64xf32>
    %89 = arith.mulf %85, %70 : vector<8x64xf32>
    %90 = arith.mulf %84, %87 : vector<8x64xf32>
    %91 = arith.addf %89, %90 : vector<8x64xf32>
    %92 = math.tanh %91 : vector<8x64xf32>
    %93 = arith.mulf %88, %92 : vector<8x64xf32>
    %94 = vector.extract_strided_slice %6 {offsets = [32, 0], sizes = [8, 256], strides = [1, 1]} : vector<64x256xf32> to vector<8x256xf32>
    %95 = arith.truncf %93 : vector<8x64xf32> to vector<8x64xbf16>
    %cst_26 = arith.constant dense<0.000000e+00> : vector<8x256xf32>
    %96 = tpu.matmul %95, %7, %cst_26 {dimension_numbers = #tpu.dot_dimension_numbers<[1], [0], [0], [1], [0, 0, 1, 1], [], []>} : vector<8x64xbf16>, vector<64x256xbf16>, vector<8x256xf32> -> vector<8x256xf32>
    %97 = arith.addf %94, %96 : vector<8x256xf32>
    %cst_27 = arith.constant 0.000000e+00 : f32
    %98 = vector.broadcast %cst_27 : f32 to vector<8x256xf32>
    %99 = arith.subf %98, %97 : vector<8x256xf32>
    %100 = math.exp %99 : vector<8x256xf32>
    %cst_28 = arith.constant 1.000000e+00 : f32
    %101 = vector.broadcast %cst_28 : f32 to vector<8x256xf32>
    %102 = arith.addf %101, %100 : vector<8x256xf32>
    %cst_29 = arith.constant 1.000000e+00 : f32
    %103 = vector.broadcast %cst_29 : f32 to vector<8x256xf32>
    %104 = arith.divf %103, %102 : vector<8x256xf32>
    %105 = vector.extract_strided_slice %104 {offsets = [0, 0], sizes = [8, 64], strides = [1, 1]} : vector<8x256xf32> to vector<8x64xf32>
    %106 = vector.extract_strided_slice %104 {offsets = [0, 64], sizes = [8, 64], strides = [1, 1]} : vector<8x256xf32> to vector<8x64xf32>
    %107 = vector.extract_strided_slice %97 {offsets = [0, 128], sizes = [8, 64], strides = [1, 1]} : vector<8x256xf32> to vector<8x64xf32>
    %108 = math.tanh %107 : vector<8x64xf32>
    %109 = vector.extract_strided_slice %104 {offsets = [0, 192], sizes = [8, 64], strides = [1, 1]} : vector<8x256xf32> to vector<8x64xf32>
    %110 = arith.mulf %106, %91 : vector<8x64xf32>
    %111 = arith.mulf %105, %108 : vector<8x64xf32>
    %112 = arith.addf %110, %111 : vector<8x64xf32>
    %113 = math.tanh %112 : vector<8x64xf32>
    %114 = arith.mulf %109, %113 : vector<8x64xf32>
    %115 = vector.extract_strided_slice %6 {offsets = [40, 0], sizes = [8, 256], strides = [1, 1]} : vector<64x256xf32> to vector<8x256xf32>
    %116 = arith.truncf %114 : vector<8x64xf32> to vector<8x64xbf16>
    %cst_30 = arith.constant dense<0.000000e+00> : vector<8x256xf32>
    %117 = tpu.matmul %116, %7, %cst_30 {dimension_numbers = #tpu.dot_dimension_numbers<[1], [0], [0], [1], [0, 0, 1, 1], [], []>} : vector<8x64xbf16>, vector<64x256xbf16>, vector<8x256xf32> -> vector<8x256xf32>
    %118 = arith.addf %115, %117 : vector<8x256xf32>
    %cst_31 = arith.constant 0.000000e+00 : f32
    %119 = vector.broadcast %cst_31 : f32 to vector<8x256xf32>
    %120 = arith.subf %119, %118 : vector<8x256xf32>
    %121 = math.exp %120 : vector<8x256xf32>
    %cst_32 = arith.constant 1.000000e+00 : f32
    %122 = vector.broadcast %cst_32 : f32 to vector<8x256xf32>
    %123 = arith.addf %122, %121 : vector<8x256xf32>
    %cst_33 = arith.constant 1.000000e+00 : f32
    %124 = vector.broadcast %cst_33 : f32 to vector<8x256xf32>
    %125 = arith.divf %124, %123 : vector<8x256xf32>
    %126 = vector.extract_strided_slice %125 {offsets = [0, 0], sizes = [8, 64], strides = [1, 1]} : vector<8x256xf32> to vector<8x64xf32>
    %127 = vector.extract_strided_slice %125 {offsets = [0, 64], sizes = [8, 64], strides = [1, 1]} : vector<8x256xf32> to vector<8x64xf32>
    %128 = vector.extract_strided_slice %118 {offsets = [0, 128], sizes = [8, 64], strides = [1, 1]} : vector<8x256xf32> to vector<8x64xf32>
    %129 = math.tanh %128 : vector<8x64xf32>
    %130 = vector.extract_strided_slice %125 {offsets = [0, 192], sizes = [8, 64], strides = [1, 1]} : vector<8x256xf32> to vector<8x64xf32>
    %131 = arith.mulf %127, %112 : vector<8x64xf32>
    %132 = arith.mulf %126, %129 : vector<8x64xf32>
    %133 = arith.addf %131, %132 : vector<8x64xf32>
    %134 = math.tanh %133 : vector<8x64xf32>
    %135 = arith.mulf %130, %134 : vector<8x64xf32>
    %136 = vector.extract_strided_slice %6 {offsets = [48, 0], sizes = [8, 256], strides = [1, 1]} : vector<64x256xf32> to vector<8x256xf32>
    %137 = arith.truncf %135 : vector<8x64xf32> to vector<8x64xbf16>
    %cst_34 = arith.constant dense<0.000000e+00> : vector<8x256xf32>
    %138 = tpu.matmul %137, %7, %cst_34 {dimension_numbers = #tpu.dot_dimension_numbers<[1], [0], [0], [1], [0, 0, 1, 1], [], []>} : vector<8x64xbf16>, vector<64x256xbf16>, vector<8x256xf32> -> vector<8x256xf32>
    %139 = arith.addf %136, %138 : vector<8x256xf32>
    %cst_35 = arith.constant 0.000000e+00 : f32
    %140 = vector.broadcast %cst_35 : f32 to vector<8x256xf32>
    %141 = arith.subf %140, %139 : vector<8x256xf32>
    %142 = math.exp %141 : vector<8x256xf32>
    %cst_36 = arith.constant 1.000000e+00 : f32
    %143 = vector.broadcast %cst_36 : f32 to vector<8x256xf32>
    %144 = arith.addf %143, %142 : vector<8x256xf32>
    %cst_37 = arith.constant 1.000000e+00 : f32
    %145 = vector.broadcast %cst_37 : f32 to vector<8x256xf32>
    %146 = arith.divf %145, %144 : vector<8x256xf32>
    %147 = vector.extract_strided_slice %146 {offsets = [0, 0], sizes = [8, 64], strides = [1, 1]} : vector<8x256xf32> to vector<8x64xf32>
    %148 = vector.extract_strided_slice %146 {offsets = [0, 64], sizes = [8, 64], strides = [1, 1]} : vector<8x256xf32> to vector<8x64xf32>
    %149 = vector.extract_strided_slice %139 {offsets = [0, 128], sizes = [8, 64], strides = [1, 1]} : vector<8x256xf32> to vector<8x64xf32>
    %150 = math.tanh %149 : vector<8x64xf32>
    %151 = vector.extract_strided_slice %146 {offsets = [0, 192], sizes = [8, 64], strides = [1, 1]} : vector<8x256xf32> to vector<8x64xf32>
    %152 = arith.mulf %148, %133 : vector<8x64xf32>
    %153 = arith.mulf %147, %150 : vector<8x64xf32>
    %154 = arith.addf %152, %153 : vector<8x64xf32>
    %155 = math.tanh %154 : vector<8x64xf32>
    %156 = arith.mulf %151, %155 : vector<8x64xf32>
    %157 = vector.extract_strided_slice %6 {offsets = [56, 0], sizes = [8, 256], strides = [1, 1]} : vector<64x256xf32> to vector<8x256xf32>
    %158 = arith.truncf %156 : vector<8x64xf32> to vector<8x64xbf16>
    %cst_38 = arith.constant dense<0.000000e+00> : vector<8x256xf32>
    %159 = tpu.matmul %158, %7, %cst_38 {dimension_numbers = #tpu.dot_dimension_numbers<[1], [0], [0], [1], [0, 0, 1, 1], [], []>} : vector<8x64xbf16>, vector<64x256xbf16>, vector<8x256xf32> -> vector<8x256xf32>
    %160 = arith.addf %157, %159 : vector<8x256xf32>
    %cst_39 = arith.constant 0.000000e+00 : f32
    %161 = vector.broadcast %cst_39 : f32 to vector<8x256xf32>
    %162 = arith.subf %161, %160 : vector<8x256xf32>
    %163 = math.exp %162 : vector<8x256xf32>
    %cst_40 = arith.constant 1.000000e+00 : f32
    %164 = vector.broadcast %cst_40 : f32 to vector<8x256xf32>
    %165 = arith.addf %164, %163 : vector<8x256xf32>
    %cst_41 = arith.constant 1.000000e+00 : f32
    %166 = vector.broadcast %cst_41 : f32 to vector<8x256xf32>
    %167 = arith.divf %166, %165 : vector<8x256xf32>
    %168 = vector.extract_strided_slice %167 {offsets = [0, 0], sizes = [8, 64], strides = [1, 1]} : vector<8x256xf32> to vector<8x64xf32>
    %169 = vector.extract_strided_slice %167 {offsets = [0, 64], sizes = [8, 64], strides = [1, 1]} : vector<8x256xf32> to vector<8x64xf32>
    %170 = vector.extract_strided_slice %160 {offsets = [0, 128], sizes = [8, 64], strides = [1, 1]} : vector<8x256xf32> to vector<8x64xf32>
    %171 = math.tanh %170 : vector<8x64xf32>
    %172 = vector.extract_strided_slice %167 {offsets = [0, 192], sizes = [8, 64], strides = [1, 1]} : vector<8x256xf32> to vector<8x64xf32>
    %173 = arith.mulf %169, %154 : vector<8x64xf32>
    %174 = arith.mulf %168, %171 : vector<8x64xf32>
    %175 = arith.addf %173, %174 : vector<8x64xf32>
    %176 = math.tanh %175 : vector<8x64xf32>
    %177 = arith.mulf %172, %176 : vector<8x64xf32>
    %178 = vector.extract_strided_slice %30 {offsets = [0, 0], sizes = [8, 32], strides = [1, 1]} : vector<8x64xf32> to vector<8x32xf32>
    %179 = vector.extract_strided_slice %177 {offsets = [0, 32], sizes = [8, 32], strides = [1, 1]} : vector<8x64xf32> to vector<8x32xf32>
    %180 = tpu.concatenate %178, %179 in 1 : vector<8x32xf32>, vector<8x32xf32> -> vector<8x64xf32>
    %181 = vector.extract_strided_slice %51 {offsets = [0, 0], sizes = [8, 32], strides = [1, 1]} : vector<8x64xf32> to vector<8x32xf32>
    %182 = vector.extract_strided_slice %156 {offsets = [0, 32], sizes = [8, 32], strides = [1, 1]} : vector<8x64xf32> to vector<8x32xf32>
    %183 = tpu.concatenate %181, %182 in 1 : vector<8x32xf32>, vector<8x32xf32> -> vector<8x64xf32>
    %184 = vector.extract_strided_slice %72 {offsets = [0, 0], sizes = [8, 32], strides = [1, 1]} : vector<8x64xf32> to vector<8x32xf32>
    %185 = vector.extract_strided_slice %135 {offsets = [0, 32], sizes = [8, 32], strides = [1, 1]} : vector<8x64xf32> to vector<8x32xf32>
    %186 = tpu.concatenate %184, %185 in 1 : vector<8x32xf32>, vector<8x32xf32> -> vector<8x64xf32>
    %187 = vector.extract_strided_slice %93 {offsets = [0, 0], sizes = [8, 32], strides = [1, 1]} : vector<8x64xf32> to vector<8x32xf32>
    %188 = vector.extract_strided_slice %114 {offsets = [0, 32], sizes = [8, 32], strides = [1, 1]} : vector<8x64xf32> to vector<8x32xf32>
    %189 = tpu.concatenate %187, %188 in 1 : vector<8x32xf32>, vector<8x32xf32> -> vector<8x64xf32>
    %190 = vector.extract_strided_slice %114 {offsets = [0, 0], sizes = [8, 32], strides = [1, 1]} : vector<8x64xf32> to vector<8x32xf32>
    %191 = vector.extract_strided_slice %93 {offsets = [0, 32], sizes = [8, 32], strides = [1, 1]} : vector<8x64xf32> to vector<8x32xf32>
    %192 = tpu.concatenate %190, %191 in 1 : vector<8x32xf32>, vector<8x32xf32> -> vector<8x64xf32>
    %193 = vector.extract_strided_slice %135 {offsets = [0, 0], sizes = [8, 32], strides = [1, 1]} : vector<8x64xf32> to vector<8x32xf32>
    %194 = vector.extract_strided_slice %72 {offsets = [0, 32], sizes = [8, 32], strides = [1, 1]} : vector<8x64xf32> to vector<8x32xf32>
    %195 = tpu.concatenate %193, %194 in 1 : vector<8x32xf32>, vector<8x32xf32> -> vector<8x64xf32>
    %196 = vector.extract_strided_slice %156 {offsets = [0, 0], sizes = [8, 32], strides = [1, 1]} : vector<8x64xf32> to vector<8x32xf32>
    %197 = vector.extract_strided_slice %51 {offsets = [0, 32], sizes = [8, 32], strides = [1, 1]} : vector<8x64xf32> to vector<8x32xf32>
    %198 = tpu.concatenate %196, %197 in 1 : vector<8x32xf32>, vector<8x32xf32> -> vector<8x64xf32>
    %199 = vector.extract_strided_slice %177 {offsets = [0, 0], sizes = [8, 32], strides = [1, 1]} : vector<8x64xf32> to vector<8x32xf32>
    %200 = vector.extract_strided_slice %30 {offsets = [0, 32], sizes = [8, 32], strides = [1, 1]} : vector<8x64xf32> to vector<8x32xf32>
    %201 = tpu.concatenate %199, %200 in 1 : vector<8x32xf32>, vector<8x32xf32> -> vector<8x64xf32>
    %202 = tpu.concatenate %180, %183, %186, %189, %192, %195, %198, %201 in 0 : vector<8x64xf32>, vector<8x64xf32>, vector<8x64xf32>, vector<8x64xf32>, vector<8x64xf32>, vector<8x64xf32>, vector<8x64xf32>, vector<8x64xf32> -> vector<64x64xf32>
    %203 = arith.truncf %202 : vector<64x64xf32> to vector<64x64xbf16>
    %c0_42 = arith.constant 0 : index
    %c0_43 = arith.constant 0 : index
    %204 = vector.load %arg5[%c0_42, %c0_43] : memref<64x64xbf16, #tpu.memory_space<vmem>>, vector<64x64xbf16>
    %cst_44 = arith.constant dense<0.000000e+00> : vector<64x64xf32>
    %205 = tpu.matmul %203, %204, %cst_44 {dimension_numbers = #tpu.dot_dimension_numbers<[1], [0], [0], [1], [0, 0, 1, 1], [], []>} : vector<64x64xbf16>, vector<64x64xbf16>, vector<64x64xf32> -> vector<64x64xf32>
    %c0_45 = arith.constant 0 : index
    %c0_46 = arith.constant 0 : index
    %206 = vector.load %arg6[%c0_45, %c0_46] : memref<1x64xf32, #tpu.memory_space<vmem>>, vector<1x64xf32>
    %207 = vector.broadcast %206 : vector<1x64xf32> to vector<64x64xf32>
    %208 = arith.addf %205, %207 : vector<64x64xf32>
    %209 = vector.extract_strided_slice %208 {offsets = [0, 0], sizes = [64, 32], strides = [1, 1]} : vector<64x64xf32> to vector<64x32xf32>
    %210 = vector.extract_strided_slice %208 {offsets = [0, 32], sizes = [64, 32], strides = [1, 1]} : vector<64x64xf32> to vector<64x32xf32>
    %cst_47 = arith.constant 0.000000e+00 : f32
    %211 = vector.broadcast %cst_47 : f32 to vector<64x32xf32>
    %212 = arith.maximumf %210, %211 : vector<64x32xf32>
    %213 = math.absf %210 : vector<64x32xf32>
    %cst_48 = arith.constant 0.000000e+00 : f32
    %214 = vector.broadcast %cst_48 : f32 to vector<64x32xf32>
    %215 = arith.subf %214, %213 : vector<64x32xf32>
    %216 = math.exp %215 : vector<64x32xf32>
    %cst_49 = arith.constant 1.000000e+00 : f32
    %217 = vector.broadcast %cst_49 : f32 to vector<64x32xf32>
    %218 = arith.addf %217, %216 : vector<64x32xf32>
    %219 = math.log %218 : vector<64x32xf32>
    %220 = arith.addf %212, %219 : vector<64x32xf32>
    %221 = arith.mulf %220, %220 : vector<64x32xf32>
    %222 = arith.mulf %209, %209 : vector<64x32xf32>
    %223 = arith.addf %221, %222 : vector<64x32xf32>
    %cst_50 = arith.constant 1.000000e+00 : f32
    %224 = vector.broadcast %cst_50 : f32 to vector<64x32xf32>
    %225 = arith.subf %223, %224 : vector<64x32xf32>
    %226 = math.log %220 : vector<64x32xf32>
    %cst_51 = arith.constant 2.000000e+00 : f32
    %227 = vector.broadcast %cst_51 : f32 to vector<64x32xf32>
    %228 = arith.mulf %227, %226 : vector<64x32xf32>
    %229 = arith.subf %225, %228 : vector<64x32xf32>
    %cst_52 = arith.constant dense<0.000000e+00> : vector<64xf32>
    %230 = vector.multi_reduction <add>, %229, %cst_52 [1] : vector<64x32xf32> to vector<64xf32>
    %231 = vector.shape_cast %230 : vector<64xf32> to vector<64x1xf32>
    %232 = vector.extract_strided_slice %231 {offsets = [0, 0], sizes = [8, 1], strides = [1, 1]} : vector<64x1xf32> to vector<8x1xf32>
    %233 = vector.extract_strided_slice %231 {offsets = [8, 0], sizes = [8, 1], strides = [1, 1]} : vector<64x1xf32> to vector<8x1xf32>
    %234 = arith.addf %232, %233 : vector<8x1xf32>
    %235 = vector.extract_strided_slice %231 {offsets = [16, 0], sizes = [8, 1], strides = [1, 1]} : vector<64x1xf32> to vector<8x1xf32>
    %236 = arith.addf %234, %235 : vector<8x1xf32>
    %237 = vector.extract_strided_slice %231 {offsets = [24, 0], sizes = [8, 1], strides = [1, 1]} : vector<64x1xf32> to vector<8x1xf32>
    %238 = arith.addf %236, %237 : vector<8x1xf32>
    %239 = vector.extract_strided_slice %231 {offsets = [32, 0], sizes = [8, 1], strides = [1, 1]} : vector<64x1xf32> to vector<8x1xf32>
    %240 = arith.addf %238, %239 : vector<8x1xf32>
    %241 = vector.extract_strided_slice %231 {offsets = [40, 0], sizes = [8, 1], strides = [1, 1]} : vector<64x1xf32> to vector<8x1xf32>
    %242 = arith.addf %240, %241 : vector<8x1xf32>
    %243 = vector.extract_strided_slice %231 {offsets = [48, 0], sizes = [8, 1], strides = [1, 1]} : vector<64x1xf32> to vector<8x1xf32>
    %244 = arith.addf %242, %243 : vector<8x1xf32>
    %245 = vector.extract_strided_slice %231 {offsets = [56, 0], sizes = [8, 1], strides = [1, 1]} : vector<64x1xf32> to vector<8x1xf32>
    %246 = arith.addf %244, %245 : vector<8x1xf32>
    %cst_53 = arith.constant 5.000000e-01 : f32
    %247 = vector.broadcast %cst_53 : f32 to vector<8x1xf32>
    %248 = arith.mulf %247, %246 : vector<8x1xf32>
    %249 = tpu.concatenate %209, %209, %209, %209, %209, %209, %209 in 0 : vector<64x32xf32>, vector<64x32xf32>, vector<64x32xf32>, vector<64x32xf32>, vector<64x32xf32>, vector<64x32xf32>, vector<64x32xf32> -> vector<448x32xf32>
    %250 = tpu.concatenate %220, %220, %220, %220, %220, %220, %220 in 0 : vector<64x32xf32>, vector<64x32xf32>, vector<64x32xf32>, vector<64x32xf32>, vector<64x32xf32>, vector<64x32xf32>, vector<64x32xf32> -> vector<448x32xf32>
    %c0_54 = arith.constant 0 : index
    %c0_55 = arith.constant 0 : index
    %c0_56 = arith.constant 0 : index
    %251 = vector.load %arg9[%c0_54, %c0_55, %c0_56] : memref<1x448x32xf32, #tpu.memory_space<vmem>>, vector<1x448x32xf32>
    %252 = vector.shape_cast %251 : vector<1x448x32xf32> to vector<448x32xf32>
    %253 = arith.mulf %250, %252 : vector<448x32xf32>
    %254 = arith.addf %249, %253 : vector<448x32xf32>
    %255 = arith.truncf %254 : vector<448x32xf32> to vector<448x32xbf16>
    %c0_57 = arith.constant 0 : index
    %c0_58 = arith.constant 0 : index
    %256 = vector.load %arg7[%c0_57, %c0_58] : memref<32x128xbf16, #tpu.memory_space<vmem>>, vector<32x128xbf16>
    %cst_59 = arith.constant dense<0.000000e+00> : vector<448x128xf32>
    %257 = tpu.matmul %255, %256, %cst_59 {dimension_numbers = #tpu.dot_dimension_numbers<[1], [0], [0], [1], [0, 0, 1, 1], [], []>} : vector<448x32xbf16>, vector<32x128xbf16>, vector<448x128xf32> -> vector<448x128xf32>
    %c0_60 = arith.constant 0 : index
    %c0_61 = arith.constant 0 : index
    %258 = vector.load %arg8[%c0_60, %c0_61] : memref<1x128xf32, #tpu.memory_space<vmem>>, vector<1x128xf32>
    %259 = vector.broadcast %258 : vector<1x128xf32> to vector<448x128xf32>
    %260 = arith.addf %257, %259 : vector<448x128xf32>
    %261 = tpu.iota {dimensions = array<i32: 0>} : vector<448x128xi32>
    %262 = tpu.iota {dimensions = array<i32: 1>} : vector<448x128xi32>
    %c64_i32 = arith.constant 64 : i32
    %263 = vector.broadcast %c64_i32 : i32 to vector<448x128xi32>
    %264 = arith.cmpi slt, %261, %263 : vector<448x128xi32>
    %c64_i32_62 = arith.constant 64 : i32
    %265 = vector.broadcast %c64_i32_62 : i32 to vector<448x128xi32>
    %266 = arith.cmpi sge, %262, %265 : vector<448x128xi32>
    %267 = arith.xori %264, %266 : vector<448x128xi1>
    %cst_63 = arith.constant -1.000000e+30 : f32
    %268 = vector.broadcast %cst_63 : f32 to vector<448x128xf32>
    %269 = arith.select %267, %260, %268 : vector<448x128xi1>, vector<448x128xf32>
    %cst_64 = arith.constant dense<0xFF800000> : vector<448xf32>
    %270 = vector.multi_reduction <maximumf>, %269, %cst_64 [1] : vector<448x128xf32> to vector<448xf32>
    %271 = vector.shape_cast %270 : vector<448xf32> to vector<448x1xf32>
    %272 = vector.broadcast %271 : vector<448x1xf32> to vector<448x128xf32>
    %273 = arith.subf %269, %272 : vector<448x128xf32>
    %274 = math.exp %273 : vector<448x128xf32>
    %cst_65 = arith.constant dense<0.000000e+00> : vector<448xf32>
    %275 = vector.multi_reduction <add>, %274, %cst_65 [1] : vector<448x128xf32> to vector<448xf32>
    %276 = vector.shape_cast %275 : vector<448xf32> to vector<448x1xf32>
    %c0_66 = arith.constant 0 : index
    %c0_67 = arith.constant 0 : index
    %c0_68 = arith.constant 0 : index
    %277 = vector.load %arg10[%c0_66, %c0_67, %c0_68] : memref<1x448x1xi32, #tpu.memory_space<vmem>>, vector<1x448x1xi32>
    %278 = vector.shape_cast %277 : vector<1x448x1xi32> to vector<448x1xi32>
    %279 = vector.broadcast %278 : vector<448x1xi32> to vector<448x128xi32>
    %280 = arith.cmpi eq, %262, %279 : vector<448x128xi32>
    %cst_69 = arith.constant 0.000000e+00 : f32
    %281 = vector.broadcast %cst_69 : f32 to vector<448x128xf32>
    %282 = arith.select %280, %274, %281 : vector<448x128xi1>, vector<448x128xf32>
    %cst_70 = arith.constant dense<0.000000e+00> : vector<448xf32>
    %283 = vector.multi_reduction <add>, %282, %cst_70 [1] : vector<448x128xf32> to vector<448xf32>
    %284 = vector.shape_cast %283 : vector<448xf32> to vector<448x1xf32>
    %285 = tpu.reciprocal %276 {approx = true} : vector<448x1xf32> -> vector<448x1xf32>
    %286 = arith.mulf %284, %285 : vector<448x1xf32>
    %287 = vector.extract_strided_slice %286 {offsets = [0, 0], sizes = [64, 1], strides = [1, 1]} : vector<448x1xf32> to vector<64x1xf32>
    %288 = vector.extract_strided_slice %287 {offsets = [0, 0], sizes = [8, 1], strides = [1, 1]} : vector<64x1xf32> to vector<8x1xf32>
    %289 = vector.extract_strided_slice %287 {offsets = [8, 0], sizes = [8, 1], strides = [1, 1]} : vector<64x1xf32> to vector<8x1xf32>
    %290 = arith.addf %288, %289 : vector<8x1xf32>
    %291 = vector.extract_strided_slice %287 {offsets = [16, 0], sizes = [8, 1], strides = [1, 1]} : vector<64x1xf32> to vector<8x1xf32>
    %292 = arith.addf %290, %291 : vector<8x1xf32>
    %293 = vector.extract_strided_slice %287 {offsets = [24, 0], sizes = [8, 1], strides = [1, 1]} : vector<64x1xf32> to vector<8x1xf32>
    %294 = arith.addf %292, %293 : vector<8x1xf32>
    %295 = vector.extract_strided_slice %287 {offsets = [32, 0], sizes = [8, 1], strides = [1, 1]} : vector<64x1xf32> to vector<8x1xf32>
    %296 = arith.addf %294, %295 : vector<8x1xf32>
    %297 = vector.extract_strided_slice %287 {offsets = [40, 0], sizes = [8, 1], strides = [1, 1]} : vector<64x1xf32> to vector<8x1xf32>
    %298 = arith.addf %296, %297 : vector<8x1xf32>
    %299 = vector.extract_strided_slice %287 {offsets = [48, 0], sizes = [8, 1], strides = [1, 1]} : vector<64x1xf32> to vector<8x1xf32>
    %300 = arith.addf %298, %299 : vector<8x1xf32>
    %301 = vector.extract_strided_slice %287 {offsets = [56, 0], sizes = [8, 1], strides = [1, 1]} : vector<64x1xf32> to vector<8x1xf32>
    %302 = arith.addf %300, %301 : vector<8x1xf32>
    %303 = vector.extract_strided_slice %286 {offsets = [64, 0], sizes = [384, 1], strides = [1, 1]} : vector<448x1xf32> to vector<384x1xf32>
    %304 = vector.extract_strided_slice %303 {offsets = [0, 0], sizes = [64, 1], strides = [1, 1]} : vector<384x1xf32> to vector<64x1xf32>
    %305 = vector.extract_strided_slice %303 {offsets = [64, 0], sizes = [64, 1], strides = [1, 1]} : vector<384x1xf32> to vector<64x1xf32>
    %306 = arith.addf %304, %305 : vector<64x1xf32>
    %307 = vector.extract_strided_slice %303 {offsets = [128, 0], sizes = [64, 1], strides = [1, 1]} : vector<384x1xf32> to vector<64x1xf32>
    %308 = arith.addf %306, %307 : vector<64x1xf32>
    %309 = vector.extract_strided_slice %303 {offsets = [192, 0], sizes = [64, 1], strides = [1, 1]} : vector<384x1xf32> to vector<64x1xf32>
    %310 = arith.addf %308, %309 : vector<64x1xf32>
    %311 = vector.extract_strided_slice %303 {offsets = [256, 0], sizes = [64, 1], strides = [1, 1]} : vector<384x1xf32> to vector<64x1xf32>
    %312 = arith.addf %310, %311 : vector<64x1xf32>
    %313 = vector.extract_strided_slice %303 {offsets = [320, 0], sizes = [64, 1], strides = [1, 1]} : vector<384x1xf32> to vector<64x1xf32>
    %314 = arith.addf %312, %313 : vector<64x1xf32>
    %315 = vector.extract_strided_slice %314 {offsets = [0, 0], sizes = [8, 1], strides = [1, 1]} : vector<64x1xf32> to vector<8x1xf32>
    %316 = vector.extract_strided_slice %314 {offsets = [8, 0], sizes = [8, 1], strides = [1, 1]} : vector<64x1xf32> to vector<8x1xf32>
    %317 = arith.addf %315, %316 : vector<8x1xf32>
    %318 = vector.extract_strided_slice %314 {offsets = [16, 0], sizes = [8, 1], strides = [1, 1]} : vector<64x1xf32> to vector<8x1xf32>
    %319 = arith.addf %317, %318 : vector<8x1xf32>
    %320 = vector.extract_strided_slice %314 {offsets = [24, 0], sizes = [8, 1], strides = [1, 1]} : vector<64x1xf32> to vector<8x1xf32>
    %321 = arith.addf %319, %320 : vector<8x1xf32>
    %322 = vector.extract_strided_slice %314 {offsets = [32, 0], sizes = [8, 1], strides = [1, 1]} : vector<64x1xf32> to vector<8x1xf32>
    %323 = arith.addf %321, %322 : vector<8x1xf32>
    %324 = vector.extract_strided_slice %314 {offsets = [40, 0], sizes = [8, 1], strides = [1, 1]} : vector<64x1xf32> to vector<8x1xf32>
    %325 = arith.addf %323, %324 : vector<8x1xf32>
    %326 = vector.extract_strided_slice %314 {offsets = [48, 0], sizes = [8, 1], strides = [1, 1]} : vector<64x1xf32> to vector<8x1xf32>
    %327 = arith.addf %325, %326 : vector<8x1xf32>
    %328 = vector.extract_strided_slice %314 {offsets = [56, 0], sizes = [8, 1], strides = [1, 1]} : vector<64x1xf32> to vector<8x1xf32>
    %329 = arith.addf %327, %328 : vector<8x1xf32>
    %cst_71 = arith.constant 2.000000e+00 : f32
    %330 = vector.broadcast %cst_71 : f32 to vector<8x1xf32>
    %331 = arith.mulf %330, %248 : vector<8x1xf32>
    %332 = arith.subf %331, %302 : vector<8x1xf32>
    %cst_72 = arith.constant 0.166666672 : f32
    %333 = vector.broadcast %cst_72 : f32 to vector<8x1xf32>
    %334 = arith.mulf %329, %333 : vector<8x1xf32>
    %335 = arith.subf %332, %334 : vector<8x1xf32>
    %c0_73 = arith.constant 0 : index
    %c0_74 = arith.constant 0 : index
    %c0_75 = arith.constant 0 : index
    %336 = vector.load %arg11[%c0_73, %c0_74, %c0_75] : memref<1x8x1xf32, #tpu.memory_space<vmem>>, vector<1x8x1xf32>
    %337 = vector.shape_cast %336 : vector<1x8x1xf32> to vector<8x1xf32>
    %338 = vector.shape_cast %335 : vector<8x1xf32> to vector<1x8x1xf32>
    tpu.vector_store %arg11[%c0_73, %c0_74, %c0_75], %338 {strides = array<i32>} : memref<1x8x1xf32, #tpu.memory_space<vmem>>, vector<1x8x1xf32>,
    return
  }
  func.func @transform_0(%arg0: i32) -> (i32, i32, i32) {
    %c0_i32 = arith.constant 0 : i32
    %c0_i32_0 = arith.constant 0 : i32
    %c0_i32_1 = arith.constant 0 : i32
    return %arg0, %c0_i32, %c0_i32_0 : i32, i32, i32
  }
  func.func @transform_1(%arg0: i32) -> (i32, i32) {
    %c0_i32 = arith.constant 0 : i32
    %c0_i32_0 = arith.constant 0 : i32
    %c0_i32_1 = arith.constant 0 : i32
    return %c0_i32, %c0_i32_0 : i32, i32
  }
  func.func @transform_2(%arg0: i32) -> (i32, i32) {
    %c0_i32 = arith.constant 0 : i32
    %c0_i32_0 = arith.constant 0 : i32
    %c0_i32_1 = arith.constant 0 : i32
    return %c0_i32, %c0_i32_0 : i32, i32
  }
  func.func @transform_3(%arg0: i32) -> (i32, i32) {
    %c0_i32 = arith.constant 0 : i32
    %c0_i32_0 = arith.constant 0 : i32
    %c0_i32_1 = arith.constant 0 : i32
    return %c0_i32, %c0_i32_0 : i32, i32
  }
  func.func @transform_4(%arg0: i32) -> (i32, i32) {
    %c0_i32 = arith.constant 0 : i32
    %c0_i32_0 = arith.constant 0 : i32
    %c0_i32_1 = arith.constant 0 : i32
    return %c0_i32, %c0_i32_0 : i32, i32
  }
  func.func @transform_5(%arg0: i32) -> (i32, i32) {
    %c0_i32 = arith.constant 0 : i32
    %c0_i32_0 = arith.constant 0 : i32
    %c0_i32_1 = arith.constant 0 : i32
    return %c0_i32, %c0_i32_0 : i32, i32
  }
  func.func @transform_6(%arg0: i32) -> (i32, i32) {
    %c0_i32 = arith.constant 0 : i32
    %c0_i32_0 = arith.constant 0 : i32
    %c0_i32_1 = arith.constant 0 : i32
    return %c0_i32, %c0_i32_0 : i32, i32
  }
  func.func @transform_7(%arg0: i32) -> (i32, i32) {
    %c0_i32 = arith.constant 0 : i32
    %c0_i32_0 = arith.constant 0 : i32
    %c0_i32_1 = arith.constant 0 : i32
    return %c0_i32, %c0_i32_0 : i32, i32
  }
  func.func @transform_8(%arg0: i32) -> (i32, i32, i32) {
    %c0_i32 = arith.constant 0 : i32
    %c0_i32_0 = arith.constant 0 : i32
    %c0_i32_1 = arith.constant 0 : i32
    return %arg0, %c0_i32, %c0_i32_0 : i32, i32, i32
  }
  func.func @transform_9(%arg0: i32) -> (i32, i32, i32) {
    %c0_i32 = arith.constant 0 : i32
    %c0_i32_0 = arith.constant 0 : i32
    %c0_i32_1 = arith.constant 0 : i32
    return %arg0, %c0_i32, %c0_i32_0 : i32, i32, i32
  }
  func.func @transform_10(%arg0: i32) -> (i32, i32, i32) {
    %c0_i32 = arith.constant 0 : i32
    %c0_i32_0 = arith.constant 0 : i32
    %c0_i32_1 = arith.constant 0 : i32
    return %arg0, %c0_i32, %c0_i32_0 : i32, i32, i32
  }
}

</mosaic_0001>

<llo_original>
// kernel: aligned_embeddings_forward.1
$region0: #{aligned_embeddings_forward.1}
  #allocation0 [shape = 'u32[]', space=smem, size = 0x4, offset = 0x4, fixed_abs, tag = 'smem constant byte address 0x4 - core index']
  #allocation1 [shape = 'u32[72,128]{1,0:T(1,128)}', space=vmem, size = 0x9000, scoped, tag = 'internal scratch']
  %s0 = inlined_call_operand.vmem [shape: bf16[2,64,64], index: 0, kind: input, shape index: {}]
  %s1 = inlined_call_operand.vmem [shape: bf16[64,256], index: 1, kind: input, shape index: {}]
  %s2 = inlined_call_operand.vmem [shape: f32[1,256], index: 2, kind: input, shape index: {}]
  %s3 = inlined_call_operand.vmem [shape: bf16[64,256], index: 3, kind: input, shape index: {}]
  %s4 = inlined_call_operand.vmem [shape: bf16[64,64], index: 4, kind: input, shape index: {}]
  %s5 = inlined_call_operand.vmem [shape: f32[1,64], index: 5, kind: input, shape index: {}]
  %s6 = inlined_call_operand.vmem [shape: bf16[32,128], index: 6, kind: input, shape index: {}]
  %s7 = inlined_call_operand.vmem [shape: f32[1,128], index: 7, kind: input, shape index: {}]
  %s8 = inlined_call_operand.vmem [shape: f32[2,448,32], index: 8, kind: input, shape index: {}]
  %s9 = inlined_call_operand.vmem [shape: s32[2,448,1], index: 9, kind: input, shape index: {}]
  %s10 = inlined_call_operand.vmem [shape: f32[2,8,1], index: 10, kind: output, shape index: {}]
  %s11 = sld [smem:[#allocation0]]
  $region73: #{aligned_embeddings_forward.1} parent=0
    _
  %s13 = ssub.s32 1, %s11
  %s14 = scalar_select 0, %s13, %s11
  loop: start=0, step=1, limit=4
  $region2: #{aligned_embeddings_forward.1} parent=0 // loop_pre_header
    _
  $region3: #{aligned_embeddings_forward.1} parent=0 // loop_header
    %s16 = sphi 0, %s20
    %p17 = scmp.ge.s32.totalorder %s16, 4
    %s26 = sphi 0, %s28
    %s29 = sphi 0, %s26
    %s30 = sphi 0, %s29
    %s46 = sphi 0, %s30
    %s50 = sphi 0, %s50
    %s52 = sphi 0, %s50
    %s53 = sphi 0, %s52
    %s67 = sphi 0, %s53
    %s71 = sphi 0, %s71
    %s73 = sphi 0, %s71
    %s74 = sphi 0, %s73
    %s88 = sphi 0, %s74
    %s92 = sphi 0, %s92
    %s94 = sphi 0, %s92
    %s95 = sphi 0, %s94
    %s109 = sphi 0, %s95
    %s113 = sphi 0, %s113
    %s115 = sphi 0, %s113
    %s116 = sphi 0, %s115
    %s130 = sphi 0, %s116
    %s134 = sphi 0, %s134
    %s136 = sphi 0, %s134
    %s137 = sphi 0, %s136
    %s151 = sphi 0, %s137
    %s155 = sphi 0, %s155
    %s157 = sphi 0, %s155
    %s158 = sphi 0, %s157
    %s172 = sphi 0, %s158
    %s176 = sphi 0, %s176
    %s178 = sphi 0, %s176
    %s179 = sphi 0, %s178
    %s193 = sphi 0, %s179
    %s199 = sphi 0, %s201
    %s202 = sphi 0, %s199
    %s203 = sphi 0, %s202
    %s219 = sphi 0, %s203
    %s225 = sphi 0, %s227
    %s228 = sphi 0, %s225
    %s229 = sphi 0, %s228
    %s245 = sphi 0, %s229
    %s251 = sphi 0, %s253
    %s254 = sphi 0, %s251
    %s255 = sphi 0, %s254
    %s271 = sphi 0, %s255
  $region4: #{aligned_embeddings_forward.1} parent=0 // loop_header_branch
    %19 = sbr.rel (%p17) target = $region8
  $region5: #{aligned_embeddings_forward.1} parent=0 // loop_body
    %s21 = ssub.s32 %s16, 1
    %s22 = ssub.s32 %s16, 2
    %s23 = sadd.s32 %s16, 1
    %s24 = ssub.s32 %s16, %s23
    %p25 = scmp.eq.s32.totalorder %s24, 0
    %s27 = sadd.s32 %s26, 1
    %s28 = scalar_select %p25, %s26, %s27
    %p31 = pneg %p25
    %p32 = scmp.eq.s32.totalorder %s16, 1
    %p33 = por %p31, %p32
    %p34 = scmp.ne.s32.totalorder %s26, %s29
    %p35 = scmp.eq.s32.totalorder %s16, 0
    %p36 = por %p34, %p35
    %p37 = scmp.ne.s32.totalorder %s26, %s29
    %p38 = scmp.eq.s32.totalorder %s21, 1
    %p39 = por %p37, %p38
    %p40 = scmp.ne.s32.totalorder %s29, %s30
    %p41 = scmp.eq.s32.totalorder %s21, 0
    %p42 = por %p40, %p41
    %p43 = scmp.ne.s32.totalorder %s29, %s30
    %p44 = scmp.eq.s32.totalorder %s22, 1
    %p45 = por %p43, %p44
    %p47 = scmp.ne.s32.totalorder %s30, %s46
    %p48 = scmp.eq.s32.totalorder %s22, 0
    %p49 = por %p47, %p48
    %s51 = sadd.s32 %s50, 1
    %p54 = scmp.eq.s32.totalorder %s16, 1
    %p55 = scmp.ne.s32.totalorder %s50, %s52
    %p56 = scmp.eq.s32.totalorder %s16, 0
    %p57 = por %p55, %p56
    %p58 = scmp.ne.s32.totalorder %s50, %s52
    %p59 = scmp.eq.s32.totalorder %s21, 1
    %p60 = por %p58, %p59
    %p61 = scmp.ne.s32.totalorder %s52, %s53
    %p62 = scmp.eq.s32.totalorder %s21, 0
    %p63 = por %p61, %p62
    %p64 = scmp.ne.s32.totalorder %s52, %s53
    %p65 = scmp.eq.s32.totalorder %s22, 1
    %p66 = por %p64, %p65
    %p68 = scmp.ne.s32.totalorder %s53, %s67
    %p69 = scmp.eq.s32.totalorder %s22, 0
    %p70 = por %p68, %p69
    %s72 = sadd.s32 %s71, 1
    %p75 = scmp.eq.s32.totalorder %s16, 1
    %p76 = scmp.ne.s32.totalorder %s71, %s73
    %p77 = scmp.eq.s32.totalorder %s16, 0
    %p78 = por %p76, %p77
    %p79 = scmp.ne.s32.totalorder %s71, %s73
    %p80 = scmp.eq.s32.totalorder %s21, 1
    %p81 = por %p79, %p80
    %p82 = scmp.ne.s32.totalorder %s73, %s74
    %p83 = scmp.eq.s32.totalorder %s21, 0
    %p84 = por %p82, %p83
    %p85 = scmp.ne.s32.totalorder %s73, %s74
    %p86 = scmp.eq.s32.totalorder %s22, 1
    %p87 = por %p85, %p86
    %p89 = scmp.ne.s32.totalorder %s74, %s88
    %p90 = scmp.eq.s32.totalorder %s22, 0
    %p91 = por %p89, %p90
    %s93 = sadd.s32 %s92, 1
    %p96 = scmp.eq.s32.totalorder %s16, 1
    %p97 = scmp.ne.s32.totalorder %s92, %s94
    %p98 = scmp.eq.s32.totalorder %s16, 0
    %p99 = por %p97, %p98
    %p100 = scmp.ne.s32.totalorder %s92, %s94
    %p101 = scmp.eq.s32.totalorder %s21, 1
    %p102 = por %p100, %p101
    %p103 = scmp.ne.s32.totalorder %s94, %s95
    %p104 = scmp.eq.s32.totalorder %s21, 0
    %p105 = por %p103, %p104
    %p106 = scmp.ne.s32.totalorder %s94, %s95
    %p107 = scmp.eq.s32.totalorder %s22, 1
    %p108 = por %p106, %p107
    %p110 = scmp.ne.s32.totalorder %s95, %s109
    %p111 = scmp.eq.s32.totalorder %s22, 0
    %p112 = por %p110, %p111
    %s114 = sadd.s32 %s113, 1
    %p117 = scmp.eq.s32.totalorder %s16, 1
    %p118 = scmp.ne.s32.totalorder %s113, %s115
    %p119 = scmp.eq.s32.totalorder %s16, 0
    %p120 = por %p118, %p119
    %p121 = scmp.ne.s32.totalorder %s113, %s115
    %p122 = scmp.eq.s32.totalorder %s21, 1
    %p123 = por %p121, %p122
    %p124 = scmp.ne.s32.totalorder %s115, %s116
    %p125 = scmp.eq.s32.totalorder %s21, 0
    %p126 = por %p124, %p125
    %p127 = scmp.ne.s32.totalorder %s115, %s116
    %p128 = scmp.eq.s32.totalorder %s22, 1
    %p129 = por %p127, %p128
    %p131 = scmp.ne.s32.totalorder %s116, %s130
    %p132 = scmp.eq.s32.totalorder %s22, 0
    %p133 = por %p131, %p132
    %s135 = sadd.s32 %s134, 1
    %p138 = scmp.eq.s32.totalorder %s16, 1
    %p139 = scmp.ne.s32.totalorder %s134, %s136
    %p140 = scmp.eq.s32.totalorder %s16, 0
    %p141 = por %p139, %p140
    %p142 = scmp.ne.s32.totalorder %s134, %s136
    %p143 = scmp.eq.s32.totalorder %s21, 1
    %p144 = por %p142, %p143
    %p145 = scmp.ne.s32.totalorder %s136, %s137
    %p146 = scmp.eq.s32.totalorder %s21, 0
    %p147 = por %p145, %p146
    %p148 = scmp.ne.s32.totalorder %s136, %s137
    %p149 = scmp.eq.s32.totalorder %s22, 1
    %p150 = por %p148, %p149
    %p152 = scmp.ne.s32.totalorder %s137, %s151
    %p153 = scmp.eq.s32.totalorder %s22, 0
    %p154 = por %p152, %p153
    %s156 = sadd.s32 %s155, 1
    %p159 = scmp.eq.s32.totalorder %s16, 1
    %p160 = scmp.ne.s32.totalorder %s155, %s157
    %p161 = scmp.eq.s32.totalorder %s16, 0
    %p162 = por %p160, %p161
    %p163 = scmp.ne.s32.totalorder %s155, %s157
    %p164 = scmp.eq.s32.totalorder %s21, 1
    %p165 = por %p163, %p164
    %p166 = scmp.ne.s32.totalorder %s157, %s158
    %p167 = scmp.eq.s32.totalorder %s21, 0
    %p168 = por %p166, %p167
    %p169 = scmp.ne.s32.totalorder %s157, %s158
    %p170 = scmp.eq.s32.totalorder %s22, 1
    %p171 = por %p169, %p170
    %p173 = scmp.ne.s32.totalorder %s158, %s172
    %p174 = scmp.eq.s32.totalorder %s22, 0
    %p175 = por %p173, %p174
    %s177 = sadd.s32 %s176, 1
    %p180 = scmp.eq.s32.totalorder %s16, 1
    %p181 = scmp.ne.s32.totalorder %s176, %s178
    %p182 = scmp.eq.s32.totalorder %s16, 0
    %p183 = por %p181, %p182
    %p184 = scmp.ne.s32.totalorder %s176, %s178
    %p185 = scmp.eq.s32.totalorder %s21, 1
    %p186 = por %p184, %p185
    %p187 = scmp.ne.s32.totalorder %s178, %s179
    %p188 = scmp.eq.s32.totalorder %s21, 0
    %p189 = por %p187, %p188
    %p190 = scmp.ne.s32.totalorder %s178, %s179
    %p191 = scmp.eq.s32.totalorder %s22, 1
    %p192 = por %p190, %p191
    %p194 = scmp.ne.s32.totalorder %s179, %s193
    %p195 = scmp.eq.s32.totalorder %s22, 0
    %p196 = por %p194, %p195
    %s197 = ssub.s32 %s16, %s23
    %p198 = scmp.eq.s32.totalorder %s197, 0
    %s200 = sadd.s32 %s199, 1
    %s201 = scalar_select %p198, %s199, %s200
    %p204 = pneg %p198
    %p205 = scmp.eq.s32.totalorder %s16, 1
    %p206 = por %p204, %p205
    %p207 = scmp.ne.s32.totalorder %s199, %s202
    %p208 = scmp.eq.s32.totalorder %s16, 0
    %p209 = por %p207, %p208
    %p210 = scmp.ne.s32.totalorder %s199, %s202
    %p211 = scmp.eq.s32.totalorder %s21, 1
    %p212 = por %p210, %p211
    %p213 = scmp.ne.s32.totalorder %s202, %s203
    %p214 = scmp.eq.s32.totalorder %s21, 0
    %p215 = por %p213, %p214
    %p216 = scmp.ne.s32.totalorder %s202, %s203
    %p217 = scmp.eq.s32.totalorder %s22, 1
    %p218 = por %p216, %p217
    %p220 = scmp.ne.s32.totalorder %s203, %s219
    %p221 = scmp.eq.s32.totalorder %s22, 0
    %p222 = por %p220, %p221
    %s223 = ssub.s32 %s16, %s23
    %p224 = scmp.eq.s32.totalorder %s223, 0
    %s226 = sadd.s32 %s225, 1
    %s227 = scalar_select %p224, %s225, %s226
    %p230 = pneg %p224
    %p231 = scmp.eq.s32.totalorder %s16, 1
    %p232 = por %p230, %p231
    %p233 = scmp.ne.s32.totalorder %s225, %s228
    %p234 = scmp.eq.s32.totalorder %s16, 0
    %p235 = por %p233, %p234
    %p236 = scmp.ne.s32.totalorder %s225, %s228
    %p237 = scmp.eq.s32.totalorder %s21, 1
    %p238 = por %p236, %p237
    %p239 = scmp.ne.s32.totalorder %s228, %s229
    %p240 = scmp.eq.s32.totalorder %s21, 0
    %p241 = por %p239, %p240
    %p242 = scmp.ne.s32.totalorder %s228, %s229
    %p243 = scmp.eq.s32.totalorder %s22, 1
    %p244 = por %p242, %p243
    %p246 = scmp.ne.s32.totalorder %s229, %s245
    %p247 = scmp.eq.s32.totalorder %s22, 0
    %p248 = por %p246, %p247
    %s249 = ssub.s32 %s16, %s23
    %p250 = scmp.eq.s32.totalorder %s249, 0
    %s252 = sadd.s32 %s251, 1
    %s253 = scalar_select %p250, %s251, %s252
    %p256 = pneg %p250
    %p257 = scmp.eq.s32.totalorder %s16, 1
    %p258 = por %p256, %p257
    %p259 = scmp.ne.s32.totalorder %s251, %s254
    %p260 = scmp.eq.s32.totalorder %s16, 0
    %p261 = por %p259, %p260
    %p262 = scmp.ne.s32.totalorder %s251, %s254
    %p263 = scmp.eq.s32.totalorder %s21, 1
    %p264 = por %p262, %p263
    %p265 = scmp.ne.s32.totalorder %s254, %s255
    %p266 = scmp.eq.s32.totalorder %s21, 0
    %p267 = por %p265, %p266
    %p268 = scmp.ne.s32.totalorder %s254, %s255
    %p269 = scmp.eq.s32.totalorder %s22, 1
    %p270 = por %p268, %p269
    %p272 = scmp.ne.s32.totalorder %s255, %s271
    %p273 = scmp.eq.s32.totalorder %s22, 0
    %p274 = por %p272, %p273
    %p275 = scmp.le.s32.totalorder 1, %s16
    %p276 = scmp.lt.s32.totalorder %s16, 3
    %p277 = pnand %p275, %p276
    %p278 = pneg %p277
    // Predicated region
    $region9: #{aligned_embeddings_forward.1} parent=5 // pred_check
      _
    $region10: #{aligned_embeddings_forward.1} parent=5 // pred_check_branch
      %280 = sbr.rel (%p277) target = $region12
    $region11: #{aligned_embeddings_forward.1} parent=5 // pred_region
      %s281 = ssub.s32 %s16, 1
      // Predicated region
      $region13: #{aligned_embeddings_forward.1} parent=11 // pred_check
        %p282 = pneg %p63
      $region14: #{aligned_embeddings_forward.1} parent=11 // pred_check_branch
        %284 = sbr.rel (%p282) target = $region16
      $region15: #{aligned_embeddings_forward.1} parent=11 // pred_region
        _
      $region16: #{aligned_embeddings_forward.1} parent=11 // pred_fallthru
        _
      // Predicated region
      $region17: #{aligned_embeddings_forward.1} parent=11 // pred_check
        %p285 = pneg %p84
      $region18: #{aligned_embeddings_forward.1} parent=11 // pred_check_branch
        %287 = sbr.rel (%p285) target = $region20
      $region19: #{aligned_embeddings_forward.1} parent=11 // pred_region
        _
      $region20: #{aligned_embeddings_forward.1} parent=11 // pred_fallthru
        _
      // Predicated region
      $region21: #{aligned_embeddings_forward.1} parent=11 // pred_check
        %p288 = pneg %p105
      $region22: #{aligned_embeddings_forward.1} parent=11 // pred_check_branch
        %290 = sbr.rel (%p288) target = $region24
      $region23: #{aligned_embeddings_forward.1} parent=11 // pred_region
        _
      $region24: #{aligned_embeddings_forward.1} parent=11 // pred_fallthru
        _
      // Predicated region
      $region25: #{aligned_embeddings_forward.1} parent=11 // pred_check
        %p291 = pneg %p126
      $region26: #{aligned_embeddings_forward.1} parent=11 // pred_check_branch
        %293 = sbr.rel (%p291) target = $region28
      $region27: #{aligned_embeddings_forward.1} parent=11 // pred_region
        _
      $region28: #{aligned_embeddings_forward.1} parent=11 // pred_fallthru
        _
      // Predicated region
      $region29: #{aligned_embeddings_forward.1} parent=11 // pred_check
        %p294 = pneg %p147
      $region30: #{aligned_embeddings_forward.1} parent=11 // pred_check_branch
        %296 = sbr.rel (%p294) target = $region32
      $region31: #{aligned_embeddings_forward.1} parent=11 // pred_region
        _
      $region32: #{aligned_embeddings_forward.1} parent=11 // pred_fallthru
        _
      // Predicated region
      $region33: #{aligned_embeddings_forward.1} parent=11 // pred_check
        %p297 = pneg %p168
      $region34: #{aligned_embeddings_forward.1} parent=11 // pred_check_branch
        %299 = sbr.rel (%p297) target = $region36
      $region35: #{aligned_embeddings_forward.1} parent=11 // pred_region
        _
      $region36: #{aligned_embeddings_forward.1} parent=11 // pred_fallthru
        _
      // Predicated region
      $region37: #{aligned_embeddings_forward.1} parent=11 // pred_check
        %p300 = pneg %p189
      $region38: #{aligned_embeddings_forward.1} parent=11 // pred_check_branch
        %302 = sbr.rel (%p300) target = $region40
      $region39: #{aligned_embeddings_forward.1} parent=11 // pred_region
        _
      $region40: #{aligned_embeddings_forward.1} parent=11 // pred_fallthru
        _
    $region12: #{aligned_embeddings_forward.1} parent=5 // pred_fallthru
      _
    %p303 = scmp.lt.s32.totalorder %s16, 2
    // Predicated region
    $region41: #{aligned_embeddings_forward.1} parent=5 // pred_check
      %p304 = pneg %p303
    $region42: #{aligned_embeddings_forward.1} parent=5 // pred_check_branch
      %306 = sbr.rel (%p304) target = $region44
    $region43: #{aligned_embeddings_forward.1} parent=5 // pred_region
      // Predicated region
      $region45: #{aligned_embeddings_forward.1} parent=43 // pred_check
        %p307 = pneg %p36
      $region46: #{aligned_embeddings_forward.1} parent=43 // pred_check_branch
        %309 = sbr.rel (%p307) target = $region48
      $region47: #{aligned_embeddings_forward.1} parent=43 // pred_region
        %p310 = scmp.lt.s32.totalorder %s16, 1
        %s311 = scalar_select %p310, %s16, 1
        %s312 = smul.addr %s311, 8
        %s313 = smul.addr %s312, 4
        %s314 = scalar_lea.vmem %s0, %s313
      $region48: #{aligned_embeddings_forward.1} parent=43 // pred_fallthru
        _
      // Predicated region
      $region49: #{aligned_embeddings_forward.1} parent=43 // pred_check
        %p315 = pneg %p209
      $region50: #{aligned_embeddings_forward.1} parent=43 // pred_check_branch
        %317 = sbr.rel (%p315) target = $region52
      $region51: #{aligned_embeddings_forward.1} parent=43 // pred_region
        %p318 = scmp.lt.s32.totalorder %s16, 1
        %s319 = scalar_select %p318, %s16, 1
        %s320 = smul.addr %s319, 56
        %s321 = smul.addr %s320, 8
        %s322 = scalar_lea.vmem %s8, %s321
      $region52: #{aligned_embeddings_forward.1} parent=43 // pred_fallthru
        _
      // Predicated region
      $region53: #{aligned_embeddings_forward.1} parent=43 // pred_check
        %p323 = pneg %p235
      $region54: #{aligned_embeddings_forward.1} parent=43 // pred_check_branch
        %325 = sbr.rel (%p323) target = $region56
      $region55: #{aligned_embeddings_forward.1} parent=43 // pred_region
        %p326 = scmp.lt.s32.totalorder %s16, 1
        %s327 = scalar_select %p326, %s16, 1
        %s328 = smul.addr %s327, 56
        %s329 = smul.addr %s328, 8
        %s330 = scalar_lea.vmem %s9, %s329
      $region56: #{aligned_embeddings_forward.1} parent=43 // pred_fallthru
        _
    $region44: #{aligned_embeddings_forward.1} parent=5 // pred_fallthru
      _
    %p331 = scmp.le.s32.totalorder 1, %s16
    %p332 = scmp.lt.s32.totalorder %s16, 3
    %p333 = pnand %p331, %p332
    %p334 = pneg %p333
    // Predicated region
    $region57: #{aligned_embeddings_forward.1} parent=5 // pred_check
      _
    $region58: #{aligned_embeddings_forward.1} parent=5 // pred_check_branch
      %336 = sbr.rel (%p333) target = $region60
    $region59: #{aligned_embeddings_forward.1} parent=5 // pred_region
      %s337 = ssub.s32 %s16, 1
      %p338 = scmp.lt.s32.totalorder %s21, 1
      %s339 = scalar_select %p338, %s21, 1
      %s340 = smul.addr %s339, 8
      %s341 = smul.addr %s340, 4
      %s342 = scalar_lea.vmem %s0, %s341
      %p343 = pneg %p42
      %p344 = pneg %p39
      %p345 = pneg %p63
      %p346 = pneg %p60
      %p347 = pneg %p84
      %p348 = pneg %p81
      %p349 = pneg %p105
      %p350 = pneg %p102
      %p351 = pneg %p126
      %p352 = pneg %p123
      %p353 = pneg %p147
      %p354 = pneg %p144
      %p355 = pneg %p168
      %p356 = pneg %p165
      %p357 = pneg %p189
      %p358 = pneg %p186
      %p359 = scmp.lt.s32.totalorder %s21, 1
      %s360 = scalar_select %p359, %s21, 1
      %s361 = smul.addr %s360, 56
      %s362 = smul.addr %s361, 8
      %s363 = scalar_lea.vmem %s8, %s362
      %p364 = pneg %p215
      %p365 = pneg %p212
      %p366 = scmp.lt.s32.totalorder %s21, 1
      %s367 = scalar_select %p366, %s21, 1
      %s368 = smul.addr %s367, 56
      %s369 = smul.addr %s368, 8
      %s370 = scalar_lea.vmem %s9, %s369
      %p371 = pneg %p241
      %p372 = pneg %p238
      %p373 = pneg %p267
      %p374 = pneg %p264
      %p375 = scmp.lt.s32.totalorder %s21, 1
      %s376 = scalar_select %p375, %s21, 1
      %s377 = smul.addr %s376, 8
      %s378 = scalar_lea.vmem %s10, %s377
      %p379 = scmp.lt.s32.totalorder %s21, 1
      %s380 = scalar_select %p379, %s21, 1
      %s381 = smul.addr %s380, 8
      %s382 = smul.addr %s381, 4
      %s383 = scalar_lea.vmem %s0, %s382
      %p384 = scmp.lt.s32.totalorder %s21, 1
      %s385 = scalar_select %p384, %s21, 1
      %s386 = smul.addr %s385, 56
      %s387 = smul.addr %s386, 8
      %s388 = scalar_lea.vmem %s8, %s387
      %p389 = scmp.lt.s32.totalorder %s21, 1
      %s390 = scalar_select %p389, %s21, 1
      %s391 = smul.addr %s390, 56
      %s392 = smul.addr %s391, 8
      %s393 = scalar_lea.vmem %s9, %s392
      %p394 = scmp.lt.s32.totalorder %s21, 1
      %s395 = scalar_select %p394, %s21, 1
      %s396 = smul.addr %s395, 8
      %s397 = scalar_lea.vmem %s10, %s396
      %v399 = vld [vmem:[%s383] sm:$0xf]
      %v400 = vld [vmem:[%s383 + $0x4] sm:$0xf]
      %v401 = vld [vmem:[%s383 + $0x8] sm:$0xf]
      %v402 = vld [vmem:[%s383 + $0xc] sm:$0xf]
      %v403 = vld [vmem:[%s383 + $0x10] sm:$0xf]
      %v404 = vld [vmem:[%s383 + $0x14] sm:$0xf]
      %v405 = vld [vmem:[%s383 + $0x18] sm:$0xf]
      %v406 = vld [vmem:[%s383 + $0x1c] sm:$0xf]
      %v407 = vld [vmem:[%s1] sm:$0xff]
      %v408 = vld [vmem:[%s1 + $0x8] sm:$0xff]
      %v409 = vld [vmem:[%s1 + $0x10] sm:$0xff]
      %v410 = vld [vmem:[%s1 + $0x18] sm:$0xff]
      %v411 = vld [vmem:[%s1 + $0x20] sm:$0xff]
      %v412 = vld [vmem:[%s1 + $0x28] sm:$0xff]
      %v413 = vld [vmem:[%s1 + $0x30] sm:$0xff]
      %v414 = vld [vmem:[%s1 + $0x38] sm:$0xff]
      %v415 = vld [vmem:[%s2] sm:$0x3]
      %v417 = vperm.slane %v415, 0
      %v418 = vperm.slane %v415, 1
      %v429 = vunpack.c.l.b16 %v399
      %v430 = vunpack.c.l.b16 %v400
      %v431 = vunpack.c.l.b16 %v401
      %v432 = vunpack.c.l.b16 %v402
      %v433 = vunpack.c.l.b16 %v403
      %v434 = vunpack.c.l.b16 %v404
      %v435 = vunpack.c.l.b16 %v405
      %v436 = vunpack.c.l.b16 %v406
      %v437 = vpack.c.b16 %v430, %v429
      %v438 = vpack.c.b16 %v432, %v431
      %v439 = vpack.c.b16 %v434, %v433
      %v440 = vpack.c.b16 %v436, %v435
      %v449 = vunpack.c.l.b16 %v407
      %v450 = vunpack.c.h.b16 %v407
      %v451 = vunpack.c.l.b16 %v408
      %v452 = vunpack.c.h.b16 %v408
      %v453 = vunpack.c.l.b16 %v409
      %v454 = vunpack.c.h.b16 %v409
      %v455 = vunpack.c.l.b16 %v410
      %v456 = vunpack.c.h.b16 %v410
      %v457 = vunpack.c.l.b16 %v411
      %v458 = vunpack.c.h.b16 %v411
      %v459 = vunpack.c.l.b16 %v412
      %v460 = vunpack.c.h.b16 %v412
      %v461 = vunpack.c.l.b16 %v413
      %v462 = vunpack.c.h.b16 %v413
      %v463 = vunpack.c.l.b16 %v414
      %v464 = vunpack.c.h.b16 %v414
      %v465 = vpack.c.b16 %v451, %v449
      %v466 = vpack.c.b16 %v452, %v450
      %v467 = vpack.c.b16 %v455, %v453
      %v468 = vpack.c.b16 %v456, %v454
      %v469 = vpack.c.b16 %v459, %v457
      %v470 = vpack.c.b16 %v460, %v458
      %v471 = vpack.c.b16 %v463, %v461
      %v472 = vpack.c.b16 %v464, %v462
      %vm481 = vcmask 523264
      %v483 = vsel %vm481, %v437, 0
      %v486 = vsel %vm481, %v438, 0
      %v489 = vsel %vm481, %v439, 0
      %v492 = vsel %vm481, %v440, 0
      %494 = vmatpush.bf16.msra.mxu0 0
      %495 = vmatpush.bf16.msra.mxu0 0
      %496 = vmatpush.bf16.msra.mxu0 0
      %497 = vmatpush.bf16.msra.mxu0 0
      %498 = vmatpush.bf16.msra.mxu0 %v471
      %499 = vmatpush.bf16.msra.mxu0 %v469
      %500 = vmatpush.bf16.msra.mxu0 %v467
      %501 = vmatpush.bf16.msra.mxu0 %v465
      %502 = vmatmul.bf16.gmra.mxu0 %v483
      %v503 = vpop.f32.mrf.mxu0
      %v504 = vadd.f32 %v417, %v503
      %v505 = vpop.f32.mrf.mxu0
      %v506 = vadd.f32 %v417, %v505
      %507 = vmatmul.bf16.gmra.mxu0 %v486
      %v508 = vpop.f32.mrf.mxu0
      %v509 = vadd.f32 %v417, %v508
      %v510 = vpop.f32.mrf.mxu0
      %v511 = vadd.f32 %v417, %v510
      %512 = vmatmul.bf16.gmra.mxu0 %v489
      %v513 = vpop.f32.mrf.mxu0
      %v514 = vadd.f32 %v417, %v513
      %v515 = vpop.f32.mrf.mxu0
      %v516 = vadd.f32 %v417, %v515
      %517 = vmatmul.bf16.gmra.mxu0 %v492
      %v518 = vpop.f32.mrf.mxu0
      %v519 = vadd.f32 %v417, %v518
      %v520 = vpop.f32.mrf.mxu0
      %v521 = vadd.f32 %v417, %v520
      %522 = vdwg.mxu0
      %523 = vmatpush.bf16.msra.mxu0 0
      %524 = vmatpush.bf16.msra.mxu0 0
      %525 = vmatpush.bf16.msra.mxu0 0
      %526 = vmatpush.bf16.msra.mxu0 0
      %527 = vmatpush.bf16.msra.mxu0 %v472
      %528 = vmatpush.bf16.msra.mxu0 %v470
      %529 = vmatpush.bf16.msra.mxu0 %v468
      %530 = vmatpush.bf16.msra.mxu0 %v466
      %531 = vmatmul.bf16.gmra.mxu0 %v483
      %v532 = vpop.f32.mrf.mxu0
      %v533 = vadd.f32 %v418, %v532
      %v534 = vpop.f32.mrf.mxu0
      %v535 = vadd.f32 %v418, %v534
      %536 = vmatmul.bf16.gmra.mxu0 %v486
      %v537 = vpop.f32.mrf.mxu0
      %v538 = vadd.f32 %v418, %v537
      %v539 = vpop.f32.mrf.mxu0
      %v540 = vadd.f32 %v418, %v539
      %541 = vmatmul.bf16.gmra.mxu0 %v489
      %v542 = vpop.f32.mrf.mxu0
      %v543 = vadd.f32 %v418, %v542
      %v544 = vpop.f32.mrf.mxu0
      %v545 = vadd.f32 %v418, %v544
      %546 = vmatmul.bf16.gmra.mxu0 %v492
      %v547 = vpop.f32.mrf.mxu0
      %v548 = vadd.f32 %v418, %v547
      %v549 = vpop.f32.mrf.mxu0
      %v550 = vadd.f32 %v418, %v549
      %551 = vdwg.mxu0
      %v552 = vld [vmem:[%s3] sm:$0xff]
      %v553 = vld [vmem:[%s3 + $0x8] sm:$0xff]
      %v554 = vld [vmem:[%s3 + $0x10] sm:$0xff]
      %v555 = vld [vmem:[%s3 + $0x18] sm:$0xff]
      %v556 = vld [vmem:[%s3 + $0x20] sm:$0xff]
      %v557 = vld [vmem:[%s3 + $0x28] sm:$0xff]
      %v558 = vld [vmem:[%s3 + $0x30] sm:$0xff]
      %v559 = vld [vmem:[%s3 + $0x38] sm:$0xff]
      %v568 = vunpack.c.l.b16 %v552
      %v569 = vunpack.c.h.b16 %v552
      %v570 = vunpack.c.l.b16 %v553
      %v571 = vunpack.c.h.b16 %v553
      %v572 = vunpack.c.l.b16 %v554
      %v573 = vunpack.c.h.b16 %v554
      %v574 = vunpack.c.l.b16 %v555
      %v575 = vunpack.c.h.b16 %v555
      %v576 = vunpack.c.l.b16 %v556
      %v577 = vunpack.c.h.b16 %v556
      %v578 = vunpack.c.l.b16 %v557
      %v579 = vunpack.c.h.b16 %v557
      %v580 = vunpack.c.l.b16 %v558
      %v581 = vunpack.c.h.b16 %v558
      %v582 = vunpack.c.l.b16 %v559
      %v583 = vunpack.c.h.b16 %v559
      %v584 = vpack.c.b16 %v570, %v568
      %v585 = vpack.c.b16 %v571, %v569
      %v586 = vpack.c.b16 %v574, %v572
      %v587 = vpack.c.b16 %v575, %v573
      %v588 = vpack.c.b16 %v578, %v576
      %v589 = vpack.c.b16 %v579, %v577
      %v590 = vpack.c.b16 %v582, %v580
      %v591 = vpack.c.b16 %v583, %v581
      %v601 = vsel %vm481, 0, 0
      %603 = vmatpush.bf16.msra.mxu0 0
      %604 = vmatpush.bf16.msra.mxu0 0
      %605 = vmatpush.bf16.msra.mxu0 0
      %606 = vmatpush.bf16.msra.mxu0 0
      %607 = vmatpush.bf16.msra.mxu0 %v590
      %608 = vmatpush.bf16.msra.mxu0 %v588
      %609 = vmatpush.bf16.msra.mxu0 %v586
      %610 = vmatpush.bf16.msra.mxu0 %v584
      %611 = vmatmul.bf16.gmra.mxu0 %v601
      %v612 = vpop.f32.mrf.mxu0
      %v613 = vadd.f32 0.0, %v612
      %v614 = vpop.f32.mrf.mxu0
      %615 = vdwg.mxu0
      %616 = vmatpush.bf16.msra.mxu0 0
      %617 = vmatpush.bf16.msra.mxu0 0
      %618 = vmatpush.bf16.msra.mxu0 0
      %619 = vmatpush.bf16.msra.mxu0 0
      %620 = vmatpush.bf16.msra.mxu0 %v591
      %621 = vmatpush.bf16.msra.mxu0 %v589
      %622 = vmatpush.bf16.msra.mxu0 %v587
      %623 = vmatpush.bf16.msra.mxu0 %v585
      %624 = vmatmul.bf16.gmra.mxu0 %v601
      %v625 = vpop.f32.mrf.mxu0
      %v626 = vadd.f32 0.0, %v625
      %v627 = vpop.f32.mrf.mxu0
      %628 = vdwg.mxu0
      %v629 = vadd.f32 %v504, %v613
      %v630 = vadd.f32 %v533, %v626
      %v631 = vsub.f32 0.0, %v629
      %v632 = vsub.f32 0.0, %v630
      %v633 = vmul.f32 %v631, 1.442695
      %v634 = vpow.pop %v633
      %v635 = vmul.f32 %v632, 1.442695
      %v636 = vpow.pop %v635
      %v637 = vadd.f32 %v634, 1.0
      %v638 = vadd.f32 %v636, 1.0
      %v639 = vrcp.pop %v637
      %v640 = vmul.f32 %v637, %v639
      %v641 = vsub.f32 1.0, %v640
      %v642 = vmul.f32 %v639, %v641
      %v643 = vadd.f32 %v639, %v642
      %vm644 = vweird.f32 %v637
      %vm645 = vweird.f32 %v639
      %vm646 = vmor %vm644, %vm645
      %v647 = vsel %vm646, %v639, %v643
      %v648 = vand.u32 2147483647, %v637
      %vm649 = vcmp.eq.f32.partialorder %v648, 8.507059e+37
      %v650 = vand.u32 %v637, 2147483648
      %v651 = vor.u32 1.1754944e-38, %v650
      %v652 = vsel %vm649, %v651, %v647
      %v653 = vmul.f32 1.0, %v652
      %v654 = vrcp.pop %v638
      %v655 = vmul.f32 %v638, %v654
      %v656 = vsub.f32 1.0, %v655
      %v657 = vmul.f32 %v654, %v656
      %v658 = vadd.f32 %v654, %v657
      %vm659 = vweird.f32 %v638
      %vm660 = vweird.f32 %v654
      %vm661 = vmor %vm659, %vm660
      %v662 = vsel %vm661, %v654, %v658
      %v663 = vand.u32 2147483647, %v638
      %vm664 = vcmp.eq.f32.partialorder %v663, 8.507059e+37
      %v665 = vand.u32 %v638, 2147483648
      %v666 = vor.u32 1.1754944e-38, %v665
      %v667 = vsel %vm664, %v666, %v662
      %v668 = vmul.f32 1.0, %v667
      %v669 = vtanh.pop %v630
      %v670 = vmul.f32 %v653, 0.0
      %v671 = vmul.f32 %v653, %v669
      %673 = vrot.lane.b32.xlu0 %v671, 64
      %v674 = vpop.permute.xlu0 %673
      %v676 = vadd.f32 %v670, %v674
      %v677 = vtanh.pop %v676
      %v678 = vmul.f32 %v668, %v677
      %v679 = vpack.c.bf16 %v678, %v678
      %681 = vrot.lane.b32.xlu0 %v679, 64
      %v682 = vpop.permute.xlu0 %681
      %v684 = vsel %vm481, %v682, 0
      %686 = vmatpush.bf16.msra.mxu0 0
      %687 = vmatpush.bf16.msra.mxu0 0
      %688 = vmatpush.bf16.msra.mxu0 0
      %689 = vmatpush.bf16.msra.mxu0 0
      %690 = vmatpush.bf16.msra.mxu0 %v590
      %691 = vmatpush.bf16.msra.mxu0 %v588
      %692 = vmatpush.bf16.msra.mxu0 %v586
      %693 = vmatpush.bf16.msra.mxu0 %v584
      %694 = vmatmul.bf16.gmra.mxu0 %v684
      %v695 = vpop.f32.mrf.mxu0
      %v696 = vadd.f32 0.0, %v695
      %v697 = vpop.f32.mrf.mxu0
      %698 = vdwg.mxu0
      %699 = vmatpush.bf16.msra.mxu0 0
      %700 = vmatpush.bf16.msra.mxu0 0
      %701 = vmatpush.bf16.msra.mxu0 0
      %702 = vmatpush.bf16.msra.mxu0 0
      %703 = vmatpush.bf16.msra.mxu0 %v591
      %704 = vmatpush.bf16.msra.mxu0 %v589
      %705 = vmatpush.bf16.msra.mxu0 %v587
      %706 = vmatpush.bf16.msra.mxu0 %v585
      %707 = vmatmul.bf16.gmra.mxu0 %v684
      %v708 = vpop.f32.mrf.mxu0
      %v709 = vadd.f32 0.0, %v708
      %v710 = vpop.f32.mrf.mxu0
      %711 = vdwg.mxu0
      %v712 = vadd.f32 %v506, %v696
      %v713 = vadd.f32 %v535, %v709
      %v714 = vsub.f32 0.0, %v712
      %v715 = vsub.f32 0.0, %v713
      %v716 = vmul.f32 %v714, 1.442695
      %v717 = vpow.pop %v716
      %v718 = vmul.f32 %v715, 1.442695
      %v719 = vpow.pop %v718
      %v720 = vadd.f32 %v717, 1.0
      %v721 = vadd.f32 %v719, 1.0
      %v722 = vrcp.pop %v720
      %v723 = vmul.f32 %v720, %v722
      %v724 = vsub.f32 1.0, %v723
      %v725 = vmul.f32 %v722, %v724
      %v726 = vadd.f32 %v722, %v725
      %vm727 = vweird.f32 %v720
      %vm728 = vweird.f32 %v722
      %vm729 = vmor %vm727, %vm728
      %v730 = vsel %vm729, %v722, %v726
      %v731 = vand.u32 2147483647, %v720
      %vm732 = vcmp.eq.f32.partialorder %v731, 8.507059e+37
      %v733 = vand.u32 %v720, 2147483648
      %v734 = vor.u32 1.1754944e-38, %v733
      %v735 = vsel %vm732, %v734, %v730
      %v736 = vmul.f32 1.0, %v735
      %v737 = vrcp.pop %v721
      %v738 = vmul.f32 %v721, %v737
      %v739 = vsub.f32 1.0, %v738
      %v740 = vmul.f32 %v737, %v739
      %v741 = vadd.f32 %v737, %v740
      %vm742 = vweird.f32 %v721
      %vm743 = vweird.f32 %v737
      %vm744 = vmor %vm742, %vm743
      %v745 = vsel %vm744, %v737, %v741
      %v746 = vand.u32 2147483647, %v721
      %vm747 = vcmp.eq.f32.partialorder %v746, 8.507059e+37
      %v748 = vand.u32 %v721, 2147483648
      %v749 = vor.u32 1.1754944e-38, %v748
      %v750 = vsel %vm747, %v749, %v745
      %v751 = vmul.f32 1.0, %v750
      %v752 = vtanh.pop %v713
      %v753 = vmul.f32 %v736, %v676
      %v754 = vmul.f32 %v736, %v752
      %756 = vrot.lane.b32.xlu0 %v754, 64
      %v757 = vpop.permute.xlu0 %756
      %v759 = vadd.f32 %v753, %v757
      %v760 = vtanh.pop %v759
      %v761 = vmul.f32 %v751, %v760
      %v762 = vpack.c.bf16 %v761, %v761
      %764 = vrot.lane.b32.xlu0 %v762, 64
      %v765 = vpop.permute.xlu0 %764
      %v767 = vsel %vm481, %v765, 0
      %769 = vmatpush.bf16.msra.mxu0 0
      %770 = vmatpush.bf16.msra.mxu0 0
      %771 = vmatpush.bf16.msra.mxu0 0
      %772 = vmatpush.bf16.msra.mxu0 0
      %773 = vmatpush.bf16.msra.mxu0 %v590
      %774 = vmatpush.bf16.msra.mxu0 %v588
      %775 = vmatpush.bf16.msra.mxu0 %v586
      %776 = vmatpush.bf16.msra.mxu0 %v584
      %777 = vmatmul.bf16.gmra.mxu0 %v767
      %v778 = vpop.f32.mrf.mxu0
      %v779 = vadd.f32 0.0, %v778
      %v780 = vpop.f32.mrf.mxu0
      %781 = vdwg.mxu0
      %782 = vmatpush.bf16.msra.mxu0 0
      %783 = vmatpush.bf16.msra.mxu0 0
      %784 = vmatpush.bf16.msra.mxu0 0
      %785 = vmatpush.bf16.msra.mxu0 0
      %786 = vmatpush.bf16.msra.mxu0 %v591
      %787 = vmatpush.bf16.msra.mxu0 %v589
      %788 = vmatpush.bf16.msra.mxu0 %v587
      %789 = vmatpush.bf16.msra.mxu0 %v585
      %790 = vmatmul.bf16.gmra.mxu0 %v767
      %v791 = vpop.f32.mrf.mxu0
      %v792 = vadd.f32 0.0, %v791
      %v793 = vpop.f32.mrf.mxu0
      %794 = vdwg.mxu0
      %v795 = vadd.f32 %v509, %v779
      %v796 = vadd.f32 %v538, %v792
      %v797 = vsub.f32 0.0, %v795
      %v798 = vsub.f32 0.0, %v796
      %v799 = vmul.f32 %v797, 1.442695
      %v800 = vpow.pop %v799
      %v801 = vmul.f32 %v798, 1.442695
      %v802 = vpow.pop %v801
      %v803 = vadd.f32 %v800, 1.0
      %v804 = vadd.f32 %v802, 1.0
      %v805 = vrcp.pop %v803
      %v806 = vmul.f32 %v803, %v805
      %v807 = vsub.f32 1.0, %v806
      %v808 = vmul.f32 %v805, %v807
      %v809 = vadd.f32 %v805, %v808
      %vm810 = vweird.f32 %v803
      %vm811 = vweird.f32 %v805
      %vm812 = vmor %vm810, %vm811
      %v813 = vsel %vm812, %v805, %v809
      %v814 = vand.u32 2147483647, %v803
      %vm815 = vcmp.eq.f32.partialorder %v814, 8.507059e+37
      %v816 = vand.u32 %v803, 2147483648
      %v817 = vor.u32 1.1754944e-38, %v816
      %v818 = vsel %vm815, %v817, %v813
      %v819 = vmul.f32 1.0, %v818
      %v820 = vrcp.pop %v804
      %v821 = vmul.f32 %v804, %v820
      %v822 = vsub.f32 1.0, %v821
      %v823 = vmul.f32 %v820, %v822
      %v824 = vadd.f32 %v820, %v823
      %vm825 = vweird.f32 %v804
      %vm826 = vweird.f32 %v820
      %vm827 = vmor %vm825, %vm826
      %v828 = vsel %vm827, %v820, %v824
      %v829 = vand.u32 2147483647, %v804
      %vm830 = vcmp.eq.f32.partialorder %v829, 8.507059e+37
      %v831 = vand.u32 %v804, 2147483648
      %v832 = vor.u32 1.1754944e-38, %v831
      %v833 = vsel %vm830, %v832, %v828
      %v834 = vmul.f32 1.0, %v833
      %v835 = vtanh.pop %v796
      %v836 = vmul.f32 %v819, %v759
      %v837 = vmul.f32 %v819, %v835
      %839 = vrot.lane.b32.xlu0 %v837, 64
      %v840 = vpop.permute.xlu0 %839
      %v842 = vadd.f32 %v836, %v840
      %v843 = vtanh.pop %v842
      %v844 = vmul.f32 %v834, %v843
      %v845 = vpack.c.bf16 %v844, %v844
      %847 = vrot.lane.b32.xlu0 %v845, 64
      %v848 = vpop.permute.xlu0 %847
      %v850 = vsel %vm481, %v848, 0
      %852 = vmatpush.bf16.msra.mxu0 0
      %853 = vmatpush.bf16.msra.mxu0 0
      %854 = vmatpush.bf16.msra.mxu0 0
      %855 = vmatpush.bf16.msra.mxu0 0
      %856 = vmatpush.bf16.msra.mxu0 %v590
      %857 = vmatpush.bf16.msra.mxu0 %v588
      %858 = vmatpush.bf16.msra.mxu0 %v586
      %859 = vmatpush.bf16.msra.mxu0 %v584
      %860 = vmatmul.bf16.gmra.mxu0 %v850
      %v861 = vpop.f32.mrf.mxu0
      %v862 = vadd.f32 0.0, %v861
      %v863 = vpop.f32.mrf.mxu0
      %864 = vdwg.mxu0
      %865 = vmatpush.bf16.msra.mxu0 0
      %866 = vmatpush.bf16.msra.mxu0 0
      %867 = vmatpush.bf16.msra.mxu0 0
      %868 = vmatpush.bf16.msra.mxu0 0
      %869 = vmatpush.bf16.msra.mxu0 %v591
      %870 = vmatpush.bf16.msra.mxu0 %v589
      %871 = vmatpush.bf16.msra.mxu0 %v587
      %872 = vmatpush.bf16.msra.mxu0 %v585
      %873 = vmatmul.bf16.gmra.mxu0 %v850
      %v874 = vpop.f32.mrf.mxu0
      %v875 = vadd.f32 0.0, %v874
      %v876 = vpop.f32.mrf.mxu0
      %877 = vdwg.mxu0
      %v878 = vadd.f32 %v511, %v862
      %v879 = vadd.f32 %v540, %v875
      %v880 = vsub.f32 0.0, %v878
      %v881 = vsub.f32 0.0, %v879
      %v882 = vmul.f32 %v880, 1.442695
      %v883 = vpow.pop %v882
      %v884 = vmul.f32 %v881, 1.442695
      %v885 = vpow.pop %v884
      %v886 = vadd.f32 %v883, 1.0
      %v887 = vadd.f32 %v885, 1.0
      %v888 = vrcp.pop %v886
      %v889 = vmul.f32 %v886, %v888
      %v890 = vsub.f32 1.0, %v889
      %v891 = vmul.f32 %v888, %v890
      %v892 = vadd.f32 %v888, %v891
      %vm893 = vweird.f32 %v886
      %vm894 = vweird.f32 %v888
      %vm895 = vmor %vm893, %vm894
      %v896 = vsel %vm895, %v888, %v892
      %v897 = vand.u32 2147483647, %v886
      %vm898 = vcmp.eq.f32.partialorder %v897, 8.507059e+37
      %v899 = vand.u32 %v886, 2147483648
      %v900 = vor.u32 1.1754944e-38, %v899
      %v901 = vsel %vm898, %v900, %v896
      %v902 = vmul.f32 1.0, %v901
      %v903 = vrcp.pop %v887
      %v904 = vmul.f32 %v887, %v903
      %v905 = vsub.f32 1.0, %v904
      %v906 = vmul.f32 %v903, %v905
      %v907 = vadd.f32 %v903, %v906
      %vm908 = vweird.f32 %v887
      %vm909 = vweird.f32 %v903
      %vm910 = vmor %vm908, %vm909
      %v911 = vsel %vm910, %v903, %v907
      %v912 = vand.u32 2147483647, %v887
      %vm913 = vcmp.eq.f32.partialorder %v912, 8.507059e+37
      %v914 = vand.u32 %v887, 2147483648
      %v915 = vor.u32 1.1754944e-38, %v914
      %v916 = vsel %vm913, %v915, %v911
      %v917 = vmul.f32 1.0, %v916
      %v918 = vtanh.pop %v879
      %v919 = vmul.f32 %v902, %v842
      %v920 = vmul.f32 %v902, %v918
      %922 = vrot.lane.b32.xlu0 %v920, 64
      %v923 = vpop.permute.xlu0 %922
      %v925 = vadd.f32 %v919, %v923
      %v926 = vtanh.pop %v925
      %v927 = vmul.f32 %v917, %v926
      %v928 = vpack.c.bf16 %v927, %v927
      %930 = vrot.lane.b32.xlu0 %v928, 64
      %v931 = vpop.permute.xlu0 %930
      %v933 = vsel %vm481, %v931, 0
      %935 = vmatpush.bf16.msra.mxu0 0
      %936 = vmatpush.bf16.msra.mxu0 0
      %937 = vmatpush.bf16.msra.mxu0 0
      %938 = vmatpush.bf16.msra.mxu0 0
      %939 = vmatpush.bf16.msra.mxu0 %v590
      %940 = vmatpush.bf16.msra.mxu0 %v588
      %941 = vmatpush.bf16.msra.mxu0 %v586
      %942 = vmatpush.bf16.msra.mxu0 %v584
      %943 = vmatmul.bf16.gmra.mxu0 %v933
      %v944 = vpop.f32.mrf.mxu0
      %v945 = vadd.f32 0.0, %v944
      %v946 = vpop.f32.mrf.mxu0
      %947 = vdwg.mxu0
      %948 = vmatpush.bf16.msra.mxu0 0
      %949 = vmatpush.bf16.msra.mxu0 0
      %950 = vmatpush.bf16.msra.mxu0 0
      %951 = vmatpush.bf16.msra.mxu0 0
      %952 = vmatpush.bf16.msra.mxu0 %v591
      %953 = vmatpush.bf16.msra.mxu0 %v589
      %954 = vmatpush.bf16.msra.mxu0 %v587
      %955 = vmatpush.bf16.msra.mxu0 %v585
      %956 = vmatmul.bf16.gmra.mxu0 %v933
      %v957 = vpop.f32.mrf.mxu0
      %v958 = vadd.f32 0.0, %v957
      %v959 = vpop.f32.mrf.mxu0
      %960 = vdwg.mxu0
      %v961 = vadd.f32 %v514, %v945
      %v962 = vadd.f32 %v543, %v958
      %v963 = vsub.f32 0.0, %v961
      %v964 = vsub.f32 0.0, %v962
      %v965 = vmul.f32 %v963, 1.442695
      %v966 = vpow.pop %v965
      %v967 = vmul.f32 %v964, 1.442695
      %v968 = vpow.pop %v967
      %v969 = vadd.f32 %v966, 1.0
      %v970 = vadd.f32 %v968, 1.0
      %v971 = vrcp.pop %v969
      %v972 = vmul.f32 %v969, %v971
      %v973 = vsub.f32 1.0, %v972
      %v974 = vmul.f32 %v971, %v973
      %v975 = vadd.f32 %v971, %v974
      %vm976 = vweird.f32 %v969
      %vm977 = vweird.f32 %v971
      %vm978 = vmor %vm976, %vm977
      %v979 = vsel %vm978, %v971, %v975
      %v980 = vand.u32 2147483647, %v969
      %vm981 = vcmp.eq.f32.partialorder %v980, 8.507059e+37
      %v982 = vand.u32 %v969, 2147483648
      %v983 = vor.u32 1.1754944e-38, %v982
      %v984 = vsel %vm981, %v983, %v979
      %v985 = vmul.f32 1.0, %v984
      %v986 = vrcp.pop %v970
      %v987 = vmul.f32 %v970, %v986
      %v988 = vsub.f32 1.0, %v987
      %v989 = vmul.f32 %v986, %v988
      %v990 = vadd.f32 %v986, %v989
      %vm991 = vweird.f32 %v970
      %vm992 = vweird.f32 %v986
      %vm993 = vmor %vm991, %vm992
      %v994 = vsel %vm993, %v986, %v990
      %v995 = vand.u32 2147483647, %v970
      %vm996 = vcmp.eq.f32.partialorder %v995, 8.507059e+37
      %v997 = vand.u32 %v970, 2147483648
      %v998 = vor.u32 1.1754944e-38, %v997
      %v999 = vsel %vm996, %v998, %v994
      %v1000 = vmul.f32 1.0, %v999
      %v1001 = vtanh.pop %v962
      %v1002 = vmul.f32 %v985, %v925
      %v1003 = vmul.f32 %v985, %v1001
      %1005 = vrot.lane.b32.xlu0 %v1003, 64
      %v1006 = vpop.permute.xlu0 %1005
      %v1008 = vadd.f32 %v1002, %v1006
      %v1009 = vtanh.pop %v1008
      %v1010 = vmul.f32 %v1000, %v1009
      %v1011 = vpack.c.bf16 %v1010, %v1010
      %1013 = vrot.lane.b32.xlu0 %v1011, 64
      %v1014 = vpop.permute.xlu0 %1013
      %v1016 = vsel %vm481, %v1014, 0
      %1018 = vmatpush.bf16.msra.mxu0 0
      %1019 = vmatpush.bf16.msra.mxu0 0
      %1020 = vmatpush.bf16.msra.mxu0 0
      %1021 = vmatpush.bf16.msra.mxu0 0
      %1022 = vmatpush.bf16.msra.mxu0 %v590
      %1023 = vmatpush.bf16.msra.mxu0 %v588
      %1024 = vmatpush.bf16.msra.mxu0 %v586
      %1025 = vmatpush.bf16.msra.mxu0 %v584
      %1026 = vmatmul.bf16.gmra.mxu0 %v1016
      %v1027 = vpop.f32.mrf.mxu0
      %v1028 = vadd.f32 0.0, %v1027
      %v1029 = vpop.f32.mrf.mxu0
      %1030 = vdwg.mxu0
      %1031 = vmatpush.bf16.msra.mxu0 0
      %1032 = vmatpush.bf16.msra.mxu0 0
      %1033 = vmatpush.bf16.msra.mxu0 0
      %1034 = vmatpush.bf16.msra.mxu0 0
      %1035 = vmatpush.bf16.msra.mxu0 %v591
      %1036 = vmatpush.bf16.msra.mxu0 %v589
      %1037 = vmatpush.bf16.msra.mxu0 %v587
      %1038 = vmatpush.bf16.msra.mxu0 %v585
      %1039 = vmatmul.bf16.gmra.mxu0 %v1016
      %v1040 = vpop.f32.mrf.mxu0
      %v1041 = vadd.f32 0.0, %v1040
      %v1042 = vpop.f32.mrf.mxu0
      %1043 = vdwg.mxu0
      %v1044 = vadd.f32 %v516, %v1028
      %v1045 = vadd.f32 %v545, %v1041
      %v1046 = vsub.f32 0.0, %v1044
      %v1047 = vsub.f32 0.0, %v1045
      %v1048 = vmul.f32 %v1046, 1.442695
      %v1049 = vpow.pop %v1048
      %v1050 = vmul.f32 %v1047, 1.442695
      %v1051 = vpow.pop %v1050
      %v1052 = vadd.f32 %v1049, 1.0
      %v1053 = vadd.f32 %v1051, 1.0
      %v1054 = vrcp.pop %v1052
      %v1055 = vmul.f32 %v1052, %v1054
      %v1056 = vsub.f32 1.0, %v1055
      %v1057 = vmul.f32 %v1054, %v1056
      %v1058 = vadd.f32 %v1054, %v1057
      %vm1059 = vweird.f32 %v1052
      %vm1060 = vweird.f32 %v1054
      %vm1061 = vmor %vm1059, %vm1060
      %v1062 = vsel %vm1061, %v1054, %v1058
      %v1063 = vand.u32 2147483647, %v1052
      %vm1064 = vcmp.eq.f32.partialorder %v1063, 8.507059e+37
      %v1065 = vand.u32 %v1052, 2147483648
      %v1066 = vor.u32 1.1754944e-38, %v1065
      %v1067 = vsel %vm1064, %v1066, %v1062
      %v1068 = vmul.f32 1.0, %v1067
      %v1069 = vrcp.pop %v1053
      %v1070 = vmul.f32 %v1053, %v1069
      %v1071 = vsub.f32 1.0, %v1070
      %v1072 = vmul.f32 %v1069, %v1071
      %v1073 = vadd.f32 %v1069, %v1072
      %vm1074 = vweird.f32 %v1053
      %vm1075 = vweird.f32 %v1069
      %vm1076 = vmor %vm1074, %vm1075
      %v1077 = vsel %vm1076, %v1069, %v1073
      %v1078 = vand.u32 2147483647, %v1053
      %vm1079 = vcmp.eq.f32.partialorder %v1078, 8.507059e+37
      %v1080 = vand.u32 %v1053, 2147483648
      %v1081 = vor.u32 1.1754944e-38, %v1080
      %v1082 = vsel %vm1079, %v1081, %v1077
      %v1083 = vmul.f32 1.0, %v1082
      %v1084 = vtanh.pop %v1045
      %v1085 = vmul.f32 %v1068, %v1008
      %v1086 = vmul.f32 %v1068, %v1084
      %1088 = vrot.lane.b32.xlu0 %v1086, 64
      %v1089 = vpop.permute.xlu0 %1088
      %v1091 = vadd.f32 %v1085, %v1089
      %v1092 = vtanh.pop %v1091
      %v1093 = vmul.f32 %v1083, %v1092
      %v1094 = vpack.c.bf16 %v1093, %v1093
      %1096 = vrot.lane.b32.xlu0 %v1094, 64
      %v1097 = vpop.permute.xlu0 %1096
      %v1099 = vsel %vm481, %v1097, 0
      %1101 = vmatpush.bf16.msra.mxu0 0
      %1102 = vmatpush.bf16.msra.mxu0 0
      %1103 = vmatpush.bf16.msra.mxu0 0
      %1104 = vmatpush.bf16.msra.mxu0 0
      %1105 = vmatpush.bf16.msra.mxu0 %v590
      %1106 = vmatpush.bf16.msra.mxu0 %v588
      %1107 = vmatpush.bf16.msra.mxu0 %v586
      %1108 = vmatpush.bf16.msra.mxu0 %v584
      %1109 = vmatmul.bf16.gmra.mxu0 %v1099
      %v1110 = vpop.f32.mrf.mxu0
      %v1111 = vadd.f32 0.0, %v1110
      %v1112 = vpop.f32.mrf.mxu0
      %1113 = vdwg.mxu0
      %1114 = vmatpush.bf16.msra.mxu0 0
      %1115 = vmatpush.bf16.msra.mxu0 0
      %1116 = vmatpush.bf16.msra.mxu0 0
      %1117 = vmatpush.bf16.msra.mxu0 0
      %1118 = vmatpush.bf16.msra.mxu0 %v591
      %1119 = vmatpush.bf16.msra.mxu0 %v589
      %1120 = vmatpush.bf16.msra.mxu0 %v587
      %1121 = vmatpush.bf16.msra.mxu0 %v585
      %1122 = vmatmul.bf16.gmra.mxu0 %v1099
      %v1123 = vpop.f32.mrf.mxu0
      %v1124 = vadd.f32 0.0, %v1123
      %v1125 = vpop.f32.mrf.mxu0
      %1126 = vdwg.mxu0
      %v1127 = vadd.f32 %v519, %v1111
      %v1128 = vadd.f32 %v548, %v1124
      %v1129 = vsub.f32 0.0, %v1127
      %v1130 = vsub.f32 0.0, %v1128
      %v1131 = vmul.f32 %v1129, 1.442695
      %v1132 = vpow.pop %v1131
      %v1133 = vmul.f32 %v1130, 1.442695
      %v1134 = vpow.pop %v1133
      %v1135 = vadd.f32 %v1132, 1.0
      %v1136 = vadd.f32 %v1134, 1.0
      %v1137 = vrcp.pop %v1135
      %v1138 = vmul.f32 %v1135, %v1137
      %v1139 = vsub.f32 1.0, %v1138
      %v1140 = vmul.f32 %v1137, %v1139
      %v1141 = vadd.f32 %v1137, %v1140
      %vm1142 = vweird.f32 %v1135
      %vm1143 = vweird.f32 %v1137
      %vm1144 = vmor %vm1142, %vm1143
      %v1145 = vsel %vm1144, %v1137, %v1141
      %v1146 = vand.u32 2147483647, %v1135
      %vm1147 = vcmp.eq.f32.partialorder %v1146, 8.507059e+37
      %v1148 = vand.u32 %v1135, 2147483648
      %v1149 = vor.u32 1.1754944e-38, %v1148
      %v1150 = vsel %vm1147, %v1149, %v1145
      %v1151 = vmul.f32 1.0, %v1150
      %v1152 = vrcp.pop %v1136
      %v1153 = vmul.f32 %v1136, %v1152
      %v1154 = vsub.f32 1.0, %v1153
      %v1155 = vmul.f32 %v1152, %v1154
      %v1156 = vadd.f32 %v1152, %v1155
      %vm1157 = vweird.f32 %v1136
      %vm1158 = vweird.f32 %v1152
      %vm1159 = vmor %vm1157, %vm1158
      %v1160 = vsel %vm1159, %v1152, %v1156
      %v1161 = vand.u32 2147483647, %v1136
      %vm1162 = vcmp.eq.f32.partialorder %v1161, 8.507059e+37
      %v1163 = vand.u32 %v1136, 2147483648
      %v1164 = vor.u32 1.1754944e-38, %v1163
      %v1165 = vsel %vm1162, %v1164, %v1160
      %v1166 = vmul.f32 1.0, %v1165
      %v1167 = vtanh.pop %v1128
      %v1168 = vmul.f32 %v1151, %v1091
      %v1169 = vmul.f32 %v1151, %v1167
      %1171 = vrot.lane.b32.xlu0 %v1169, 64
      %v1172 = vpop.permute.xlu0 %1171
      %v1174 = vadd.f32 %v1168, %v1172
      %v1175 = vtanh.pop %v1174
      %v1176 = vmul.f32 %v1166, %v1175
      %v1177 = vpack.c.bf16 %v1176, %v1176
      %1179 = vrot.lane.b32.xlu0 %v1177, 64
      %v1180 = vpop.permute.xlu0 %1179
      %v1182 = vsel %vm481, %v1180, 0
      %1184 = vmatpush.bf16.msra.mxu0 0
      %1185 = vmatpush.bf16.msra.mxu0 0
      %1186 = vmatpush.bf16.msra.mxu0 0
      %1187 = vmatpush.bf16.msra.mxu0 0
      %1188 = vmatpush.bf16.msra.mxu0 %v590
      %1189 = vmatpush.bf16.msra.mxu0 %v588
      %1190 = vmatpush.bf16.msra.mxu0 %v586
      %1191 = vmatpush.bf16.msra.mxu0 %v584
      %1192 = vmatmul.bf16.gmra.mxu0 %v1182
      %v1193 = vpop.f32.mrf.mxu0
      %v1194 = vadd.f32 0.0, %v1193
      %v1195 = vpop.f32.mrf.mxu0
      %1196 = vdwg.mxu0
      %1197 = vmatpush.bf16.msra.mxu0 0
      %1198 = vmatpush.bf16.msra.mxu0 0
      %1199 = vmatpush.bf16.msra.mxu0 0
      %1200 = vmatpush.bf16.msra.mxu0 0
      %1201 = vmatpush.bf16.msra.mxu0 %v591
      %1202 = vmatpush.bf16.msra.mxu0 %v589
      %1203 = vmatpush.bf16.msra.mxu0 %v587
      %1204 = vmatpush.bf16.msra.mxu0 %v585
      %1205 = vmatmul.bf16.gmra.mxu0 %v1182
      %v1206 = vpop.f32.mrf.mxu0
      %v1207 = vadd.f32 0.0, %v1206
      %v1208 = vpop.f32.mrf.mxu0
      %1209 = vdwg.mxu0
      %v1210 = vadd.f32 %v521, %v1194
      %v1211 = vadd.f32 %v550, %v1207
      %v1212 = vsub.f32 0.0, %v1210
      %v1213 = vsub.f32 0.0, %v1211
      %v1214 = vmul.f32 %v1212, 1.442695
      %v1215 = vpow.pop %v1214
      %v1216 = vmul.f32 %v1213, 1.442695
      %v1217 = vpow.pop %v1216
      %v1218 = vadd.f32 %v1215, 1.0
      %v1219 = vadd.f32 %v1217, 1.0
      %v1220 = vrcp.pop %v1218
      %v1221 = vmul.f32 %v1218, %v1220
      %v1222 = vsub.f32 1.0, %v1221
      %v1223 = vmul.f32 %v1220, %v1222
      %v1224 = vadd.f32 %v1220, %v1223
      %vm1225 = vweird.f32 %v1218
      %vm1226 = vweird.f32 %v1220
      %vm1227 = vmor %vm1225, %vm1226
      %v1228 = vsel %vm1227, %v1220, %v1224
      %v1229 = vand.u32 2147483647, %v1218
      %vm1230 = vcmp.eq.f32.partialorder %v1229, 8.507059e+37
      %v1231 = vand.u32 %v1218, 2147483648
      %v1232 = vor.u32 1.1754944e-38, %v1231
      %v1233 = vsel %vm1230, %v1232, %v1228
      %v1234 = vmul.f32 1.0, %v1233
      %v1235 = vrcp.pop %v1219
      %v1236 = vmul.f32 %v1219, %v1235
      %v1237 = vsub.f32 1.0, %v1236
      %v1238 = vmul.f32 %v1235, %v1237
      %v1239 = vadd.f32 %v1235, %v1238
      %vm1240 = vweird.f32 %v1219
      %vm1241 = vweird.f32 %v1235
      %vm1242 = vmor %vm1240, %vm1241
      %v1243 = vsel %vm1242, %v1235, %v1239
      %v1244 = vand.u32 2147483647, %v1219
      %vm1245 = vcmp.eq.f32.partialorder %v1244, 8.507059e+37
      %v1246 = vand.u32 %v1219, 2147483648
      %v1247 = vor.u32 1.1754944e-38, %v1246
      %v1248 = vsel %vm1245, %v1247, %v1243
      %v1249 = vmul.f32 1.0, %v1248
      %v1250 = vtanh.pop %v1211
      %v1251 = vmul.f32 %v1234, %v1174
      %v1252 = vmul.f32 %v1234, %v1250
      %1254 = vrot.lane.b32.xlu0 %v1252, 64
      %v1255 = vpop.permute.xlu0 %1254
      %v1257 = vadd.f32 %v1251, %v1255
      %v1258 = vtanh.pop %v1257
      %v1259 = vmul.f32 %v1249, %v1258
      %1261 = vrot.lane.b32.xlu0 %v678, 64
      %v1262 = vpop.permute.xlu0 %1261
      %1265 = vrot.lane.b32.xlu0 %v1259, 64
      %v1266 = vpop.permute.xlu0 %1265
      %vm1268 = vcmask 261120
      %v1269 = vsel %vm1268, %v1262, %v1266
      %1271 = vrot.lane.b32.xlu0 %v761, 64
      %v1272 = vpop.permute.xlu0 %1271
      %1275 = vrot.lane.b32.xlu0 %v1176, 64
      %v1276 = vpop.permute.xlu0 %1275
      %v1278 = vsel %vm1268, %v1272, %v1276
      %1280 = vrot.lane.b32.xlu0 %v844, 64
      %v1281 = vpop.permute.xlu0 %1280
      %1284 = vrot.lane.b32.xlu0 %v1093, 64
      %v1285 = vpop.permute.xlu0 %1284
      %v1287 = vsel %vm1268, %v1281, %v1285
      %1289 = vrot.lane.b32.xlu0 %v927, 64
      %v1290 = vpop.permute.xlu0 %1289
      %1293 = vrot.lane.b32.xlu0 %v1010, 64
      %v1294 = vpop.permute.xlu0 %1293
      %v1296 = vsel %vm1268, %v1290, %v1294
      %v1297 = vsel %vm1268, %v1294, %v1290
      %v1298 = vsel %vm1268, %v1285, %v1281
      %v1299 = vsel %vm1268, %v1276, %v1272
      %v1300 = vsel %vm1268, %v1266, %v1262
      %v1301 = vpack.c.bf16 %v1278, %v1269
      %v1302 = vpack.c.bf16 %v1296, %v1287
      %v1303 = vpack.c.bf16 %v1298, %v1297
      %v1304 = vpack.c.bf16 %v1300, %v1299
      %v1305 = vld [vmem:[%s4] sm:$0xf]
      %v1306 = vld [vmem:[%s4 + $0x4] sm:$0xf]
      %v1307 = vld [vmem:[%s4 + $0x8] sm:$0xf]
      %v1308 = vld [vmem:[%s4 + $0xc] sm:$0xf]
      %v1309 = vld [vmem:[%s4 + $0x10] sm:$0xf]
      %v1310 = vld [vmem:[%s4 + $0x14] sm:$0xf]
      %v1311 = vld [vmem:[%s4 + $0x18] sm:$0xf]
      %v1312 = vld [vmem:[%s4 + $0x1c] sm:$0xf]
      %v1313 = vld [vmem:[%s5] sm:$0x1]
      %v1315 = vperm.slane %v1313, 0
      %v1325 = vunpack.c.l.b16 %v1305
      %v1326 = vunpack.c.l.b16 %v1306
      %v1327 = vunpack.c.l.b16 %v1307
      %v1328 = vunpack.c.l.b16 %v1308
      %v1329 = vunpack.c.l.b16 %v1309
      %v1330 = vunpack.c.l.b16 %v1310
      %v1331 = vunpack.c.l.b16 %v1311
      %v1332 = vunpack.c.l.b16 %v1312
      %v1333 = vpack.c.b16 %v1326, %v1325
      %v1334 = vpack.c.b16 %v1328, %v1327
      %v1335 = vpack.c.b16 %v1330, %v1329
      %v1336 = vpack.c.b16 %v1332, %v1331
      %v1342 = vsel %vm481, %v1301, 0
      %v1345 = vsel %vm481, %v1302, 0
      %v1348 = vsel %vm481, %v1303, 0
      %v1351 = vsel %vm481, %v1304, 0
      %1353 = vmatpush.bf16.msra.mxu0 0
      %1354 = vmatpush.bf16.msra.mxu0 0
      %1355 = vmatpush.bf16.msra.mxu0 0
      %1356 = vmatpush.bf16.msra.mxu0 0
      %1357 = vmatpush.bf16.msra.mxu0 %v1336
      %1358 = vmatpush.bf16.msra.mxu0 %v1335
      %1359 = vmatpush.bf16.msra.mxu0 %v1334
      %1360 = vmatpush.bf16.msra.mxu0 %v1333
      %1361 = vmatmul.bf16.gmra.mxu0 %v1342
      %v1362 = vpop.f32.mrf.mxu0
      %v1363 = vadd.f32 %v1315, %v1362
      %v1364 = vpop.f32.mrf.mxu0
      %v1365 = vadd.f32 %v1315, %v1364
      %1366 = vmatmul.bf16.gmra.mxu0 %v1345
      %v1367 = vpop.f32.mrf.mxu0
      %v1368 = vadd.f32 %v1315, %v1367
      %v1369 = vpop.f32.mrf.mxu0
      %v1370 = vadd.f32 %v1315, %v1369
      %1371 = vmatmul.bf16.gmra.mxu0 %v1348
      %v1372 = vpop.f32.mrf.mxu0
      %v1373 = vadd.f32 %v1315, %v1372
      %v1374 = vpop.f32.mrf.mxu0
      %v1375 = vadd.f32 %v1315, %v1374
      %1376 = vmatmul.bf16.gmra.mxu0 %v1351
      %v1377 = vpop.f32.mrf.mxu0
      %v1378 = vadd.f32 %v1315, %v1377
      %v1379 = vpop.f32.mrf.mxu0
      %v1380 = vadd.f32 %v1315, %v1379
      %1381 = vdwg.mxu0
      %v1382 = vmax.f32 %v1363, 0.0
      %v1383 = vmax.f32 %v1365, 0.0
      %v1384 = vmax.f32 %v1368, 0.0
      %v1385 = vmax.f32 %v1370, 0.0
      %v1386 = vmax.f32 %v1373, 0.0
      %v1387 = vmax.f32 %v1375, 0.0
      %v1388 = vmax.f32 %v1378, 0.0
      %v1389 = vmax.f32 %v1380, 0.0
      %v1390 = vand.u32 2147483647, %v1363
      %v1391 = vand.u32 2147483647, %v1365
      %v1392 = vand.u32 2147483647, %v1368
      %v1393 = vand.u32 2147483647, %v1370
      %v1394 = vand.u32 2147483647, %v1373
      %v1395 = vand.u32 2147483647, %v1375
      %v1396 = vand.u32 2147483647, %v1378
      %v1397 = vand.u32 2147483647, %v1380
      %v1398 = vsub.f32 0.0, %v1390
      %v1399 = vsub.f32 0.0, %v1391
      %v1400 = vsub.f32 0.0, %v1392
      %v1401 = vsub.f32 0.0, %v1393
      %v1402 = vsub.f32 0.0, %v1394
      %v1403 = vsub.f32 0.0, %v1395
      %v1404 = vsub.f32 0.0, %v1396
      %v1405 = vsub.f32 0.0, %v1397
      %v1406 = vmul.f32 %v1398, 1.442695
      %v1407 = vpow.pop %v1406
      %v1408 = vmul.f32 %v1399, 1.442695
      %v1409 = vpow.pop %v1408
      %v1410 = vmul.f32 %v1400, 1.442695
      %v1411 = vpow.pop %v1410
      %v1412 = vmul.f32 %v1401, 1.442695
      %v1413 = vpow.pop %v1412
      %v1414 = vmul.f32 %v1402, 1.442695
      %v1415 = vpow.pop %v1414
      %v1416 = vmul.f32 %v1403, 1.442695
      %v1417 = vpow.pop %v1416
      %v1418 = vmul.f32 %v1404, 1.442695
      %v1419 = vpow.pop %v1418
      %v1420 = vmul.f32 %v1405, 1.442695
      %v1421 = vpow.pop %v1420
      %v1422 = vadd.f32 %v1407, 1.0
      %v1423 = vadd.f32 %v1409, 1.0
      %v1424 = vadd.f32 %v1411, 1.0
      %v1425 = vadd.f32 %v1413, 1.0
      %v1426 = vadd.f32 %v1415, 1.0
      %v1427 = vadd.f32 %v1417, 1.0
      %v1428 = vadd.f32 %v1419, 1.0
      %v1429 = vadd.f32 %v1421, 1.0
      %v1430 = vlog2.pop %v1422
      %v1431 = vmul.f32 %v1430, 0.6931472
      %v1432 = vlog2.pop %v1423
      %v1433 = vmul.f32 %v1432, 0.6931472
      %v1434 = vlog2.pop %v1424
      %v1435 = vmul.f32 %v1434, 0.6931472
      %v1436 = vlog2.pop %v1425
      %v1437 = vmul.f32 %v1436, 0.6931472
      %v1438 = vlog2.pop %v1426
      %v1439 = vmul.f32 %v1438, 0.6931472
      %v1440 = vlog2.pop %v1427
      %v1441 = vmul.f32 %v1440, 0.6931472
      %v1442 = vlog2.pop %v1428
      %v1443 = vmul.f32 %v1442, 0.6931472
      %v1444 = vlog2.pop %v1429
      %v1445 = vmul.f32 %v1444, 0.6931472
      %v1446 = vadd.f32 %v1382, %v1431
      %v1447 = vadd.f32 %v1383, %v1433
      %v1448 = vadd.f32 %v1384, %v1435
      %v1449 = vadd.f32 %v1385, %v1437
      %v1450 = vadd.f32 %v1386, %v1439
      %v1451 = vadd.f32 %v1387, %v1441
      %v1452 = vadd.f32 %v1388, %v1443
      %v1453 = vadd.f32 %v1389, %v1445
      %v1454 = vmul.f32 %v1446, %v1446
      %v1455 = vmul.f32 %v1447, %v1447
      %v1456 = vmul.f32 %v1448, %v1448
      %v1457 = vmul.f32 %v1449, %v1449
      %v1458 = vmul.f32 %v1450, %v1450
      %v1459 = vmul.f32 %v1451, %v1451
      %v1460 = vmul.f32 %v1452, %v1452
      %v1461 = vmul.f32 %v1453, %v1453
      %v1462 = vmul.f32 %v1363, %v1363
      %v1463 = vmul.f32 %v1365, %v1365
      %v1464 = vmul.f32 %v1368, %v1368
      %v1465 = vmul.f32 %v1370, %v1370
      %v1466 = vmul.f32 %v1373, %v1373
      %v1467 = vmul.f32 %v1375, %v1375
      %v1468 = vmul.f32 %v1378, %v1378
      %v1469 = vmul.f32 %v1380, %v1380
      %1478 = vrot.lane.b32.xlu0 %v1462, 32
      %v1479 = vpop.permute.xlu0 %1478
      %1480 = vrot.lane.b32.xlu0 %v1463, 32
      %v1481 = vpop.permute.xlu0 %1480
      %1482 = vrot.lane.b32.xlu0 %v1464, 32
      %v1483 = vpop.permute.xlu0 %1482
      %1484 = vrot.lane.b32.xlu0 %v1465, 32
      %v1485 = vpop.permute.xlu0 %1484
      %1486 = vrot.lane.b32.xlu0 %v1466, 32
      %v1487 = vpop.permute.xlu0 %1486
      %1488 = vrot.lane.b32.xlu0 %v1467, 32
      %v1489 = vpop.permute.xlu0 %1488
      %1490 = vrot.lane.b32.xlu0 %v1468, 32
      %v1491 = vpop.permute.xlu0 %1490
      %1492 = vrot.lane.b32.xlu0 %v1469, 32
      %v1493 = vpop.permute.xlu0 %1492
      %v1502 = vadd.f32 %v1454, %v1479
      %v1503 = vadd.f32 %v1455, %v1481
      %v1504 = vadd.f32 %v1456, %v1483
      %v1505 = vadd.f32 %v1457, %v1485
      %v1506 = vadd.f32 %v1458, %v1487
      %v1507 = vadd.f32 %v1459, %v1489
      %v1508 = vadd.f32 %v1460, %v1491
      %v1509 = vadd.f32 %v1461, %v1493
      %v1510 = vsub.f32 %v1502, 1.0
      %v1511 = vsub.f32 %v1503, 1.0
      %v1512 = vsub.f32 %v1504, 1.0
      %v1513 = vsub.f32 %v1505, 1.0
      %v1514 = vsub.f32 %v1506, 1.0
      %v1515 = vsub.f32 %v1507, 1.0
      %v1516 = vsub.f32 %v1508, 1.0
      %v1517 = vsub.f32 %v1509, 1.0
      %v1518 = vlog2.pop %v1446
      %v1519 = vmul.f32 %v1518, 0.6931472
      %v1520 = vlog2.pop %v1447
      %v1521 = vmul.f32 %v1520, 0.6931472
      %v1522 = vlog2.pop %v1448
      %v1523 = vmul.f32 %v1522, 0.6931472
      %v1524 = vlog2.pop %v1449
      %v1525 = vmul.f32 %v1524, 0.6931472
      %v1526 = vlog2.pop %v1450
      %v1527 = vmul.f32 %v1526, 0.6931472
      %v1528 = vlog2.pop %v1451
      %v1529 = vmul.f32 %v1528, 0.6931472
      %v1530 = vlog2.pop %v1452
      %v1531 = vmul.f32 %v1530, 0.6931472
      %v1532 = vlog2.pop %v1453
      %v1533 = vmul.f32 %v1532, 0.6931472
      %v1534 = vmul.f32 %v1519, 2.0
      %v1535 = vmul.f32 %v1521, 2.0
      %v1536 = vmul.f32 %v1523, 2.0
      %v1537 = vmul.f32 %v1525, 2.0
      %v1538 = vmul.f32 %v1527, 2.0
      %v1539 = vmul.f32 %v1529, 2.0
      %v1540 = vmul.f32 %v1531, 2.0
      %v1541 = vmul.f32 %v1533, 2.0
      %v1542 = vsub.f32 %v1510, %v1534
      %v1543 = vsub.f32 %v1511, %v1535
      %v1544 = vsub.f32 %v1512, %v1536
      %v1545 = vsub.f32 %v1513, %v1537
      %v1546 = vsub.f32 %v1514, %v1538
      %v1547 = vsub.f32 %v1515, %v1539
      %v1548 = vsub.f32 %v1516, %v1540
      %v1549 = vsub.f32 %v1517, %v1541
      %1558 = vrot.lane.b32.xlu0 %v1542, 96
      %v1559 = vpop.permute.xlu0 %1558
      %1560 = vrot.lane.b32.xlu0 %v1543, 96
      %v1561 = vpop.permute.xlu0 %1560
      %1562 = vrot.lane.b32.xlu0 %v1544, 96
      %v1563 = vpop.permute.xlu0 %1562
      %1564 = vrot.lane.b32.xlu0 %v1545, 96
      %v1565 = vpop.permute.xlu0 %1564
      %1566 = vrot.lane.b32.xlu0 %v1546, 96
      %v1567 = vpop.permute.xlu0 %1566
      %1568 = vrot.lane.b32.xlu0 %v1547, 96
      %v1569 = vpop.permute.xlu0 %1568
      %1570 = vrot.lane.b32.xlu0 %v1548, 96
      %v1571 = vpop.permute.xlu0 %1570
      %1572 = vrot.lane.b32.xlu0 %v1549, 96
      %v1573 = vpop.permute.xlu0 %1572
      %v1582 = vsel %vm1268, %v1559, 0.0
      %1583 = vadd.xlane.f32.xlu0 %v1582
      %v1584 = vpop.xlane.xlu0 %1583
      %v1585 = vsel %vm1268, %v1561, 0.0
      %1586 = vadd.xlane.f32.xlu0 %v1585
      %v1587 = vpop.xlane.xlu0 %1586
      %v1588 = vsel %vm1268, %v1563, 0.0
      %1589 = vadd.xlane.f32.xlu0 %v1588
      %v1590 = vpop.xlane.xlu0 %1589
      %v1591 = vsel %vm1268, %v1565, 0.0
      %1592 = vadd.xlane.f32.xlu0 %v1591
      %v1593 = vpop.xlane.xlu0 %1592
      %v1594 = vsel %vm1268, %v1567, 0.0
      %1595 = vadd.xlane.f32.xlu0 %v1594
      %v1596 = vpop.xlane.xlu0 %1595
      %v1597 = vsel %vm1268, %v1569, 0.0
      %1598 = vadd.xlane.f32.xlu0 %v1597
      %v1599 = vpop.xlane.xlu0 %1598
      %v1600 = vsel %vm1268, %v1571, 0.0
      %1601 = vadd.xlane.f32.xlu0 %v1600
      %v1602 = vpop.xlane.xlu0 %1601
      %v1603 = vsel %vm1268, %v1573, 0.0
      %1604 = vadd.xlane.f32.xlu0 %v1603
      %v1605 = vpop.xlane.xlu0 %1604
      %v1606 = vadd.f32 %v1584, %v1587
      %v1607 = vadd.f32 %v1606, %v1590
      %v1608 = vadd.f32 %v1607, %v1593
      %v1609 = vadd.f32 %v1608, %v1596
      %v1610 = vadd.f32 %v1609, %v1599
      %v1611 = vadd.f32 %v1610, %v1602
      %v1612 = vadd.f32 %v1611, %v1605
      %v1613 = vmul.f32 %v1612, 0.5
      %v1614 = vld [vmem:[%s388] sm:$0xff]
      %v1615 = vld [vmem:[%s388 + $0x8] sm:$0xff]
      %v1616 = vld [vmem:[%s388 + $0x10] sm:$0xff]
      %v1617 = vld [vmem:[%s388 + $0x18] sm:$0xff]
      %v1618 = vld [vmem:[%s388 + $0x20] sm:$0xff]
      %v1619 = vld [vmem:[%s388 + $0x28] sm:$0xff]
      %v1620 = vld [vmem:[%s388 + $0x30] sm:$0xff]
      %v1621 = vld [vmem:[%s388 + $0x38] sm:$0xff]
      %v1622 = vld [vmem:[%s388 + $0x40] sm:$0xff]
      %v1623 = vld [vmem:[%s388 + $0x48] sm:$0xff]
      %v1624 = vld [vmem:[%s388 + $0x50] sm:$0xff]
      %v1625 = vld [vmem:[%s388 + $0x58] sm:$0xff]
      %v1626 = vld [vmem:[%s388 + $0x60] sm:$0xff]
      %v1627 = vld [vmem:[%s388 + $0x68] sm:$0xff]
      %v1628 = vld [vmem:[%s388 + $0x70] sm:$0xff]
      %v1629 = vld [vmem:[%s388 + $0x78] sm:$0xff]
      %v1630 = vld [vmem:[%s388 + $0x80] sm:$0xff]
      %v1631 = vld [vmem:[%s388 + $0x88] sm:$0xff]
      %v1632 = vld [vmem:[%s388 + $0x90] sm:$0xff]
      %v1633 = vld [vmem:[%s388 + $0x98] sm:$0xff]
      %v1634 = vld [vmem:[%s388 + $0xa0] sm:$0xff]
      %v1635 = vld [vmem:[%s388 + $0xa8] sm:$0xff]
      %v1636 = vld [vmem:[%s388 + $0xb0] sm:$0xff]
      %v1637 = vld [vmem:[%s388 + $0xb8] sm:$0xff]
      %v1638 = vld [vmem:[%s388 + $0xc0] sm:$0xff]
      %v1639 = vld [vmem:[%s388 + $0xc8] sm:$0xff]
      %v1640 = vld [vmem:[%s388 + $0xd0] sm:$0xff]
      %v1641 = vld [vmem:[%s388 + $0xd8] sm:$0xff]
      %v1642 = vld [vmem:[%s388 + $0xe0] sm:$0xff]
      %v1643 = vld [vmem:[%s388 + $0xe8] sm:$0xff]
      %v1644 = vld [vmem:[%s388 + $0xf0] sm:$0xff]
      %v1645 = vld [vmem:[%s388 + $0xf8] sm:$0xff]
      %v1646 = vld [vmem:[%s388 + $0x100] sm:$0xff]
      %v1647 = vld [vmem:[%s388 + $0x108] sm:$0xff]
      %v1648 = vld [vmem:[%s388 + $0x110] sm:$0xff]
      %v1649 = vld [vmem:[%s388 + $0x118] sm:$0xff]
      %v1650 = vld [vmem:[%s388 + $0x120] sm:$0xff]
      %v1651 = vld [vmem:[%s388 + $0x128] sm:$0xff]
      %v1652 = vld [vmem:[%s388 + $0x130] sm:$0xff]
      %v1653 = vld [vmem:[%s388 + $0x138] sm:$0xff]
      %v1654 = vld [vmem:[%s388 + $0x140] sm:$0xff]
      %v1655 = vld [vmem:[%s388 + $0x148] sm:$0xff]
      %v1656 = vld [vmem:[%s388 + $0x150] sm:$0xff]
      %v1657 = vld [vmem:[%s388 + $0x158] sm:$0xff]
      %v1658 = vld [vmem:[%s388 + $0x160] sm:$0xff]
      %v1659 = vld [vmem:[%s388 + $0x168] sm:$0xff]
      %v1660 = vld [vmem:[%s388 + $0x170] sm:$0xff]
      %v1661 = vld [vmem:[%s388 + $0x178] sm:$0xff]
      %v1662 = vld [vmem:[%s388 + $0x180] sm:$0xff]
      %v1663 = vld [vmem:[%s388 + $0x188] sm:$0xff]
      %v1664 = vld [vmem:[%s388 + $0x190] sm:$0xff]
      %v1665 = vld [vmem:[%s388 + $0x198] sm:$0xff]
      %v1666 = vld [vmem:[%s388 + $0x1a0] sm:$0xff]
      %v1667 = vld [vmem:[%s388 + $0x1a8] sm:$0xff]
      %v1668 = vld [vmem:[%s388 + $0x1b0] sm:$0xff]
      %v1669 = vld [vmem:[%s388 + $0x1b8] sm:$0xff]
      %1726 = vrot.lane.b32.xlu0 %v1614, 32
      %v1727 = vpop.permute.xlu0 %1726
      %1728 = vrot.lane.b32.xlu0 %v1615, 32
      %v1729 = vpop.permute.xlu0 %1728
      %1730 = vrot.lane.b32.xlu0 %v1616, 32
      %v1731 = vpop.permute.xlu0 %1730
      %1732 = vrot.lane.b32.xlu0 %v1617, 32
      %v1733 = vpop.permute.xlu0 %1732
      %1734 = vrot.lane.b32.xlu0 %v1618, 32
      %v1735 = vpop.permute.xlu0 %1734
      %1736 = vrot.lane.b32.xlu0 %v1619, 32
      %v1737 = vpop.permute.xlu0 %1736
      %1738 = vrot.lane.b32.xlu0 %v1620, 32
      %v1739 = vpop.permute.xlu0 %1738
      %1740 = vrot.lane.b32.xlu0 %v1621, 32
      %v1741 = vpop.permute.xlu0 %1740
      %1742 = vrot.lane.b32.xlu0 %v1622, 32
      %v1743 = vpop.permute.xlu0 %1742
      %1744 = vrot.lane.b32.xlu0 %v1623, 32
      %v1745 = vpop.permute.xlu0 %1744
      %1746 = vrot.lane.b32.xlu0 %v1624, 32
      %v1747 = vpop.permute.xlu0 %1746
      %1748 = vrot.lane.b32.xlu0 %v1625, 32
      %v1749 = vpop.permute.xlu0 %1748
      %1750 = vrot.lane.b32.xlu0 %v1626, 32
      %v1751 = vpop.permute.xlu0 %1750
      %1752 = vrot.lane.b32.xlu0 %v1627, 32
      %v1753 = vpop.permute.xlu0 %1752
      %1754 = vrot.lane.b32.xlu0 %v1628, 32
      %v1755 = vpop.permute.xlu0 %1754
      %1756 = vrot.lane.b32.xlu0 %v1629, 32
      %v1757 = vpop.permute.xlu0 %1756
      %1758 = vrot.lane.b32.xlu0 %v1630, 32
      %v1759 = vpop.permute.xlu0 %1758
      %1760 = vrot.lane.b32.xlu0 %v1631, 32
      %v1761 = vpop.permute.xlu0 %1760
      %1762 = vrot.lane.b32.xlu0 %v1632, 32
      %v1763 = vpop.permute.xlu0 %1762
      %1764 = vrot.lane.b32.xlu0 %v1633, 32
      %v1765 = vpop.permute.xlu0 %1764
      %1766 = vrot.lane.b32.xlu0 %v1634, 32
      %v1767 = vpop.permute.xlu0 %1766
      %1768 = vrot.lane.b32.xlu0 %v1635, 32
      %v1769 = vpop.permute.xlu0 %1768
      %1770 = vrot.lane.b32.xlu0 %v1636, 32
      %v1771 = vpop.permute.xlu0 %1770
      %1772 = vrot.lane.b32.xlu0 %v1637, 32
      %v1773 = vpop.permute.xlu0 %1772
      %1774 = vrot.lane.b32.xlu0 %v1638, 32
      %v1775 = vpop.permute.xlu0 %1774
      %1776 = vrot.lane.b32.xlu0 %v1639, 32
      %v1777 = vpop.permute.xlu0 %1776
      %1778 = vrot.lane.b32.xlu0 %v1640, 32
      %v1779 = vpop.permute.xlu0 %1778
      %1780 = vrot.lane.b32.xlu0 %v1641, 32
      %v1781 = vpop.permute.xlu0 %1780
      %1782 = vrot.lane.b32.xlu0 %v1642, 32
      %v1783 = vpop.permute.xlu0 %1782
      %1784 = vrot.lane.b32.xlu0 %v1643, 32
      %v1785 = vpop.permute.xlu0 %1784
      %1786 = vrot.lane.b32.xlu0 %v1644, 32
      %v1787 = vpop.permute.xlu0 %1786
      %1788 = vrot.lane.b32.xlu0 %v1645, 32
      %v1789 = vpop.permute.xlu0 %1788
      %1790 = vrot.lane.b32.xlu0 %v1646, 32
      %v1791 = vpop.permute.xlu0 %1790
      %1792 = vrot.lane.b32.xlu0 %v1647, 32
      %v1793 = vpop.permute.xlu0 %1792
      %1794 = vrot.lane.b32.xlu0 %v1648, 32
      %v1795 = vpop.permute.xlu0 %1794
      %1796 = vrot.lane.b32.xlu0 %v1649, 32
      %v1797 = vpop.permute.xlu0 %1796
      %1798 = vrot.lane.b32.xlu0 %v1650, 32
      %v1799 = vpop.permute.xlu0 %1798
      %1800 = vrot.lane.b32.xlu0 %v1651, 32
      %v1801 = vpop.permute.xlu0 %1800
      %1802 = vrot.lane.b32.xlu0 %v1652, 32
      %v1803 = vpop.permute.xlu0 %1802
      %1804 = vrot.lane.b32.xlu0 %v1653, 32
      %v1805 = vpop.permute.xlu0 %1804
      %1806 = vrot.lane.b32.xlu0 %v1654, 32
      %v1807 = vpop.permute.xlu0 %1806
      %1808 = vrot.lane.b32.xlu0 %v1655, 32
      %v1809 = vpop.permute.xlu0 %1808
      %1810 = vrot.lane.b32.xlu0 %v1656, 32
      %v1811 = vpop.permute.xlu0 %1810
      %1812 = vrot.lane.b32.xlu0 %v1657, 32
      %v1813 = vpop.permute.xlu0 %1812
      %1814 = vrot.lane.b32.xlu0 %v1658, 32
      %v1815 = vpop.permute.xlu0 %1814
      %1816 = vrot.lane.b32.xlu0 %v1659, 32
      %v1817 = vpop.permute.xlu0 %1816
      %1818 = vrot.lane.b32.xlu0 %v1660, 32
      %v1819 = vpop.permute.xlu0 %1818
      %1820 = vrot.lane.b32.xlu0 %v1661, 32
      %v1821 = vpop.permute.xlu0 %1820
      %1822 = vrot.lane.b32.xlu0 %v1662, 32
      %v1823 = vpop.permute.xlu0 %1822
      %1824 = vrot.lane.b32.xlu0 %v1663, 32
      %v1825 = vpop.permute.xlu0 %1824
      %1826 = vrot.lane.b32.xlu0 %v1664, 32
      %v1827 = vpop.permute.xlu0 %1826
      %1828 = vrot.lane.b32.xlu0 %v1665, 32
      %v1829 = vpop.permute.xlu0 %1828
      %1830 = vrot.lane.b32.xlu0 %v1666, 32
      %v1831 = vpop.permute.xlu0 %1830
      %1832 = vrot.lane.b32.xlu0 %v1667, 32
      %v1833 = vpop.permute.xlu0 %1832
      %1834 = vrot.lane.b32.xlu0 %v1668, 32
      %v1835 = vpop.permute.xlu0 %1834
      %1836 = vrot.lane.b32.xlu0 %v1669, 32
      %v1837 = vpop.permute.xlu0 %1836
      %v1894 = vmul.f32 %v1446, %v1727
      %v1895 = vmul.f32 %v1447, %v1729
      %v1896 = vmul.f32 %v1448, %v1731
      %v1897 = vmul.f32 %v1449, %v1733
      %v1898 = vmul.f32 %v1450, %v1735
      %v1899 = vmul.f32 %v1451, %v1737
      %v1900 = vmul.f32 %v1452, %v1739
      %v1901 = vmul.f32 %v1453, %v1741
      %v1902 = vmul.f32 %v1446, %v1743
      %v1903 = vmul.f32 %v1447, %v1745
      %v1904 = vmul.f32 %v1448, %v1747
      %v1905 = vmul.f32 %v1449, %v1749
      %v1906 = vmul.f32 %v1450, %v1751
      %v1907 = vmul.f32 %v1451, %v1753
      %v1908 = vmul.f32 %v1452, %v1755
      %v1909 = vmul.f32 %v1453, %v1757
      %v1910 = vmul.f32 %v1446, %v1759
      %v1911 = vmul.f32 %v1447, %v1761
      %v1912 = vmul.f32 %v1448, %v1763
      %v1913 = vmul.f32 %v1449, %v1765
      %v1914 = vmul.f32 %v1450, %v1767
      %v1915 = vmul.f32 %v1451, %v1769
      %v1916 = vmul.f32 %v1452, %v1771
      %v1917 = vmul.f32 %v1453, %v1773
      %v1918 = vmul.f32 %v1446, %v1775
      %v1919 = vmul.f32 %v1447, %v1777
      %v1920 = vmul.f32 %v1448, %v1779
      %v1921 = vmul.f32 %v1449, %v1781
      %v1922 = vmul.f32 %v1450, %v1783
      %v1923 = vmul.f32 %v1451, %v1785
      %v1924 = vmul.f32 %v1452, %v1787
      %v1925 = vmul.f32 %v1453, %v1789
      %v1926 = vmul.f32 %v1446, %v1791
      %v1927 = vmul.f32 %v1447, %v1793
      %v1928 = vmul.f32 %v1448, %v1795
      %v1929 = vmul.f32 %v1449, %v1797
      %v1930 = vmul.f32 %v1450, %v1799
      %v1931 = vmul.f32 %v1451, %v1801
      %v1932 = vmul.f32 %v1452, %v1803
      %v1933 = vmul.f32 %v1453, %v1805
      %v1934 = vmul.f32 %v1446, %v1807
      %v1935 = vmul.f32 %v1447, %v1809
      %v1936 = vmul.f32 %v1448, %v1811
      %v1937 = vmul.f32 %v1449, %v1813
      %v1938 = vmul.f32 %v1450, %v1815
      %v1939 = vmul.f32 %v1451, %v1817
      %v1940 = vmul.f32 %v1452, %v1819
      %v1941 = vmul.f32 %v1453, %v1821
      %v1942 = vmul.f32 %v1446, %v1823
      %v1943 = vmul.f32 %v1447, %v1825
      %v1944 = vmul.f32 %v1448, %v1827
      %v1945 = vmul.f32 %v1449, %v1829
      %v1946 = vmul.f32 %v1450, %v1831
      %v1947 = vmul.f32 %v1451, %v1833
      %v1948 = vmul.f32 %v1452, %v1835
      %v1949 = vmul.f32 %v1453, %v1837
      %2006 = vrot.lane.b32.xlu0 %v1894, 96
      %v2007 = vpop.permute.xlu0 %2006
      %2008 = vrot.lane.b32.xlu0 %v1895, 96
      %v2009 = vpop.permute.xlu0 %2008
      %2010 = vrot.lane.b32.xlu0 %v1896, 96
      %v2011 = vpop.permute.xlu0 %2010
      %2012 = vrot.lane.b32.xlu0 %v1897, 96
      %v2013 = vpop.permute.xlu0 %2012
      %2014 = vrot.lane.b32.xlu0 %v1898, 96
      %v2015 = vpop.permute.xlu0 %2014
      %2016 = vrot.lane.b32.xlu0 %v1899, 96
      %v2017 = vpop.permute.xlu0 %2016
      %2018 = vrot.lane.b32.xlu0 %v1900, 96
      %v2019 = vpop.permute.xlu0 %2018
      %2020 = vrot.lane.b32.xlu0 %v1901, 96
      %v2021 = vpop.permute.xlu0 %2020
      %2022 = vrot.lane.b32.xlu0 %v1902, 96
      %v2023 = vpop.permute.xlu0 %2022
      %2024 = vrot.lane.b32.xlu0 %v1903, 96
      %v2025 = vpop.permute.xlu0 %2024
      %2026 = vrot.lane.b32.xlu0 %v1904, 96
      %v2027 = vpop.permute.xlu0 %2026
      %2028 = vrot.lane.b32.xlu0 %v1905, 96
      %v2029 = vpop.permute.xlu0 %2028
      %2030 = vrot.lane.b32.xlu0 %v1906, 96
      %v2031 = vpop.permute.xlu0 %2030
      %2032 = vrot.lane.b32.xlu0 %v1907, 96
      %v2033 = vpop.permute.xlu0 %2032
      %2034 = vrot.lane.b32.xlu0 %v1908, 96
      %v2035 = vpop.permute.xlu0 %2034
      %2036 = vrot.lane.b32.xlu0 %v1909, 96
      %v2037 = vpop.permute.xlu0 %2036
      %2038 = vrot.lane.b32.xlu0 %v1910, 96
      %v2039 = vpop.permute.xlu0 %2038
      %2040 = vrot.lane.b32.xlu0 %v1911, 96
      %v2041 = vpop.permute.xlu0 %2040
      %2042 = vrot.lane.b32.xlu0 %v1912, 96
      %v2043 = vpop.permute.xlu0 %2042
      %2044 = vrot.lane.b32.xlu0 %v1913, 96
      %v2045 = vpop.permute.xlu0 %2044
      %2046 = vrot.lane.b32.xlu0 %v1914, 96
      %v2047 = vpop.permute.xlu0 %2046
      %2048 = vrot.lane.b32.xlu0 %v1915, 96
      %v2049 = vpop.permute.xlu0 %2048
      %2050 = vrot.lane.b32.xlu0 %v1916, 96
      %v2051 = vpop.permute.xlu0 %2050
      %2052 = vrot.lane.b32.xlu0 %v1917, 96
      %v2053 = vpop.permute.xlu0 %2052
      %2054 = vrot.lane.b32.xlu0 %v1918, 96
      %v2055 = vpop.permute.xlu0 %2054
      %2056 = vrot.lane.b32.xlu0 %v1919, 96
      %v2057 = vpop.permute.xlu0 %2056
      %2058 = vrot.lane.b32.xlu0 %v1920, 96
      %v2059 = vpop.permute.xlu0 %2058
      %2060 = vrot.lane.b32.xlu0 %v1921, 96
      %v2061 = vpop.permute.xlu0 %2060
      %2062 = vrot.lane.b32.xlu0 %v1922, 96
      %v2063 = vpop.permute.xlu0 %2062
      %2064 = vrot.lane.b32.xlu0 %v1923, 96
      %v2065 = vpop.permute.xlu0 %2064
      %2066 = vrot.lane.b32.xlu0 %v1924, 96
      %v2067 = vpop.permute.xlu0 %2066
      %2068 = vrot.lane.b32.xlu0 %v1925, 96
      %v2069 = vpop.permute.xlu0 %2068
      %2070 = vrot.lane.b32.xlu0 %v1926, 96
      %v2071 = vpop.permute.xlu0 %2070
      %2072 = vrot.lane.b32.xlu0 %v1927, 96
      %v2073 = vpop.permute.xlu0 %2072
      %2074 = vrot.lane.b32.xlu0 %v1928, 96
      %v2075 = vpop.permute.xlu0 %2074
      %2076 = vrot.lane.b32.xlu0 %v1929, 96
      %v2077 = vpop.permute.xlu0 %2076
      %2078 = vrot.lane.b32.xlu0 %v1930, 96
      %v2079 = vpop.permute.xlu0 %2078
      %2080 = vrot.lane.b32.xlu0 %v1931, 96
      %v2081 = vpop.permute.xlu0 %2080
      %2082 = vrot.lane.b32.xlu0 %v1932, 96
      %v2083 = vpop.permute.xlu0 %2082
      %2084 = vrot.lane.b32.xlu0 %v1933, 96
      %v2085 = vpop.permute.xlu0 %2084
      %2086 = vrot.lane.b32.xlu0 %v1934, 96
      %v2087 = vpop.permute.xlu0 %2086
      %2088 = vrot.lane.b32.xlu0 %v1935, 96
      %v2089 = vpop.permute.xlu0 %2088
      %2090 = vrot.lane.b32.xlu0 %v1936, 96
      %v2091 = vpop.permute.xlu0 %2090
      %2092 = vrot.lane.b32.xlu0 %v1937, 96
      %v2093 = vpop.permute.xlu0 %2092
      %2094 = vrot.lane.b32.xlu0 %v1938, 96
      %v2095 = vpop.permute.xlu0 %2094
      %2096 = vrot.lane.b32.xlu0 %v1939, 96
      %v2097 = vpop.permute.xlu0 %2096
      %2098 = vrot.lane.b32.xlu0 %v1940, 96
      %v2099 = vpop.permute.xlu0 %2098
      %2100 = vrot.lane.b32.xlu0 %v1941, 96
      %v2101 = vpop.permute.xlu0 %2100
      %2102 = vrot.lane.b32.xlu0 %v1942, 96
      %v2103 = vpop.permute.xlu0 %2102
      %2104 = vrot.lane.b32.xlu0 %v1943, 96
      %v2105 = vpop.permute.xlu0 %2104
      %2106 = vrot.lane.b32.xlu0 %v1944, 96
      %v2107 = vpop.permute.xlu0 %2106
      %2108 = vrot.lane.b32.xlu0 %v1945, 96
      %v2109 = vpop.permute.xlu0 %2108
      %2110 = vrot.lane.b32.xlu0 %v1946, 96
      %v2111 = vpop.permute.xlu0 %2110
      %2112 = vrot.lane.b32.xlu0 %v1947, 96
      %v2113 = vpop.permute.xlu0 %2112
      %2114 = vrot.lane.b32.xlu0 %v1948, 96
      %v2115 = vpop.permute.xlu0 %2114
      %2116 = vrot.lane.b32.xlu0 %v1949, 96
      %v2117 = vpop.permute.xlu0 %2116
      %v2174 = vadd.f32 %v1363, %v2007
      %v2175 = vadd.f32 %v1365, %v2009
      %v2176 = vadd.f32 %v1368, %v2011
      %v2177 = vadd.f32 %v1370, %v2013
      %v2178 = vadd.f32 %v1373, %v2015
      %v2179 = vadd.f32 %v1375, %v2017
      %v2180 = vadd.f32 %v1378, %v2019
      %v2181 = vadd.f32 %v1380, %v2021
      %v2182 = vadd.f32 %v1363, %v2023
      %v2183 = vadd.f32 %v1365, %v2025
      %v2184 = vadd.f32 %v1368, %v2027
      %v2185 = vadd.f32 %v1370, %v2029
      %v2186 = vadd.f32 %v1373, %v2031
      %v2187 = vadd.f32 %v1375, %v2033
      %v2188 = vadd.f32 %v1378, %v2035
      %v2189 = vadd.f32 %v1380, %v2037
      %v2190 = vadd.f32 %v1363, %v2039
      %v2191 = vadd.f32 %v1365, %v2041
      %v2192 = vadd.f32 %v1368, %v2043
      %v2193 = vadd.f32 %v1370, %v2045
      %v2194 = vadd.f32 %v1373, %v2047
      %v2195 = vadd.f32 %v1375, %v2049
      %v2196 = vadd.f32 %v1378, %v2051
      %v2197 = vadd.f32 %v1380, %v2053
      %v2198 = vadd.f32 %v1363, %v2055
      %v2199 = vadd.f32 %v1365, %v2057
      %v2200 = vadd.f32 %v1368, %v2059
      %v2201 = vadd.f32 %v1370, %v2061
      %v2202 = vadd.f32 %v1373, %v2063
      %v2203 = vadd.f32 %v1375, %v2065
      %v2204 = vadd.f32 %v1378, %v2067
      %v2205 = vadd.f32 %v1380, %v2069
      %v2206 = vadd.f32 %v1363, %v2071
      %v2207 = vadd.f32 %v1365, %v2073
      %v2208 = vadd.f32 %v1368, %v2075
      %v2209 = vadd.f32 %v1370, %v2077
      %v2210 = vadd.f32 %v1373, %v2079
      %v2211 = vadd.f32 %v1375, %v2081
      %v2212 = vadd.f32 %v1378, %v2083
      %v2213 = vadd.f32 %v1380, %v2085
      %v2214 = vadd.f32 %v1363, %v2087
      %v2215 = vadd.f32 %v1365, %v2089
      %v2216 = vadd.f32 %v1368, %v2091
      %v2217 = vadd.f32 %v1370, %v2093
      %v2218 = vadd.f32 %v1373, %v2095
      %v2219 = vadd.f32 %v1375, %v2097
      %v2220 = vadd.f32 %v1378, %v2099
      %v2221 = vadd.f32 %v1380, %v2101
      %v2222 = vadd.f32 %v1363, %v2103
      %v2223 = vadd.f32 %v1365, %v2105
      %v2224 = vadd.f32 %v1368, %v2107
      %v2225 = vadd.f32 %v1370, %v2109
      %v2226 = vadd.f32 %v1373, %v2111
      %v2227 = vadd.f32 %v1375, %v2113
      %v2228 = vadd.f32 %v1378, %v2115
      %v2229 = vadd.f32 %v1380, %v2117
      %v2230 = vpack.c.bf16 %v2175, %v2174
      %v2231 = vpack.c.bf16 %v2177, %v2176
      %v2232 = vpack.c.bf16 %v2179, %v2178
      %v2233 = vpack.c.bf16 %v2181, %v2180
      %v2234 = vpack.c.bf16 %v2183, %v2182
      %v2235 = vpack.c.bf16 %v2185, %v2184
      %v2236 = vpack.c.bf16 %v2187, %v2186
      %v2237 = vpack.c.bf16 %v2189, %v2188
      %v2238 = vpack.c.bf16 %v2191, %v2190
      %v2239 = vpack.c.bf16 %v2193, %v2192
      %v2240 = vpack.c.bf16 %v2195, %v2194
      %v2241 = vpack.c.bf16 %v2197, %v2196
      %v2242 = vpack.c.bf16 %v2199, %v2198
      %v2243 = vpack.c.bf16 %v2201, %v2200
      %v2244 = vpack.c.bf16 %v2203, %v2202
      %v2245 = vpack.c.bf16 %v2205, %v2204
      %v2246 = vpack.c.bf16 %v2207, %v2206
      %v2247 = vpack.c.bf16 %v2209, %v2208
      %v2248 = vpack.c.bf16 %v2211, %v2210
      %v2249 = vpack.c.bf16 %v2213, %v2212
      %v2250 = vpack.c.bf16 %v2215, %v2214
      %v2251 = vpack.c.bf16 %v2217, %v2216
      %v2252 = vpack.c.bf16 %v2219, %v2218
      %v2253 = vpack.c.bf16 %v2221, %v2220
      %v2254 = vpack.c.bf16 %v2223, %v2222
      %v2255 = vpack.c.bf16 %v2225, %v2224
      %v2256 = vpack.c.bf16 %v2227, %v2226
      %v2257 = vpack.c.bf16 %v2229, %v2228
      %v2258 = vld [vmem:[%s6] sm:$0xf]
      %v2259 = vld [vmem:[%s6 + $0x4] sm:$0xf]
      %v2260 = vld [vmem:[%s6 + $0x8] sm:$0xf]
      %v2261 = vld [vmem:[%s6 + $0xc] sm:$0xf]
      %v2262 = vld [vmem:[%s7] sm:$0x1]
      %v2264 = vperm.slane %v2262, 0
      %v2270 = vunpack.c.l.b16 %v2258
      %v2271 = vunpack.c.l.b16 %v2259
      %v2272 = vunpack.c.l.b16 %v2260
      %v2273 = vunpack.c.l.b16 %v2261
      %v2274 = vpack.c.b16 %v2271, %v2270
      %v2275 = vpack.c.b16 %v2273, %v2272
      %v2279 = vsel %vm1268, %v2230, 0
      %v2282 = vsel %vm1268, %v2231, 0
      %v2285 = vsel %vm1268, %v2232, 0
      %v2288 = vsel %vm1268, %v2233, 0
      %v2291 = vsel %vm1268, %v2234, 0
      %v2294 = vsel %vm1268, %v2235, 0
      %v2297 = vsel %vm1268, %v2236, 0
      %v2300 = vsel %vm1268, %v2237, 0
      %v2303 = vsel %vm1268, %v2238, 0
      %v2306 = vsel %vm1268, %v2239, 0
      %v2309 = vsel %vm1268, %v2240, 0
      %v2312 = vsel %vm1268, %v2241, 0
      %v2315 = vsel %vm1268, %v2242, 0
      %v2318 = vsel %vm1268, %v2243, 0
      %v2321 = vsel %vm1268, %v2244, 0
      %v2324 = vsel %vm1268, %v2245, 0
      %v2327 = vsel %vm1268, %v2246, 0
      %v2330 = vsel %vm1268, %v2247, 0
      %v2333 = vsel %vm1268, %v2248, 0
      %v2336 = vsel %vm1268, %v2249, 0
      %v2339 = vsel %vm1268, %v2250, 0
      %v2342 = vsel %vm1268, %v2251, 0
      %v2345 = vsel %vm1268, %v2252, 0
      %v2348 = vsel %vm1268, %v2253, 0
      %v2351 = vsel %vm1268, %v2254, 0
      %v2354 = vsel %vm1268, %v2255, 0
      %v2357 = vsel %vm1268, %v2256, 0
      %v2360 = vsel %vm1268, %v2257, 0
      %2362 = vmatpush.bf16.msra.mxu0 0
      %2363 = vmatpush.bf16.msra.mxu0 0
      %2364 = vmatpush.bf16.msra.mxu0 0
      %2365 = vmatpush.bf16.msra.mxu0 0
      %2366 = vmatpush.bf16.msra.mxu0 0
      %2367 = vmatpush.bf16.msra.mxu0 0
      %2368 = vmatpush.bf16.msra.mxu0 %v2275
      %2369 = vmatpush.bf16.msra.mxu0 %v2274
      %2370 = vmatmul.bf16.gmra.mxu0 %v2279
      %v2371 = vpop.f32.mrf.mxu0
      %v2372 = vadd.f32 %v2264, %v2371
      %v2373 = vpop.f32.mrf.mxu0
      %v2374 = vadd.f32 %v2264, %v2373
      %2375 = vmatmul.bf16.gmra.mxu0 %v2282
      %v2376 = vpop.f32.mrf.mxu0
      %v2377 = vadd.f32 %v2264, %v2376
      %v2378 = vpop.f32.mrf.mxu0
      %v2379 = vadd.f32 %v2264, %v2378
      %2380 = vmatmul.bf16.gmra.mxu0 %v2285
      %v2381 = vpop.f32.mrf.mxu0
      %v2382 = vadd.f32 %v2264, %v2381
      %v2383 = vpop.f32.mrf.mxu0
      %v2384 = vadd.f32 %v2264, %v2383
      %2385 = vmatmul.bf16.gmra.mxu0 %v2288
      %v2386 = vpop.f32.mrf.mxu0
      %v2387 = vadd.f32 %v2264, %v2386
      %v2388 = vpop.f32.mrf.mxu0
      %v2389 = vadd.f32 %v2264, %v2388
      %2390 = vmatmul.bf16.gmra.mxu0 %v2291
      %v2391 = vpop.f32.mrf.mxu0
      %v2392 = vadd.f32 %v2264, %v2391
      %v2393 = vpop.f32.mrf.mxu0
      %v2394 = vadd.f32 %v2264, %v2393
      %2395 = vmatmul.bf16.gmra.mxu0 %v2294
      %v2396 = vpop.f32.mrf.mxu0
      %v2397 = vadd.f32 %v2264, %v2396
      %v2398 = vpop.f32.mrf.mxu0
      %v2399 = vadd.f32 %v2264, %v2398
      %2400 = vmatmul.bf16.gmra.mxu0 %v2297
      %v2401 = vpop.f32.mrf.mxu0
      %v2402 = vadd.f32 %v2264, %v2401
      %v2403 = vpop.f32.mrf.mxu0
      %v2404 = vadd.f32 %v2264, %v2403
      %2405 = vmatmul.bf16.gmra.mxu0 %v2300
      %v2406 = vpop.f32.mrf.mxu0
      %v2407 = vadd.f32 %v2264, %v2406
      %v2408 = vpop.f32.mrf.mxu0
      %v2409 = vadd.f32 %v2264, %v2408
      %2410 = vmatmul.bf16.gmra.mxu0 %v2303
      %v2411 = vpop.f32.mrf.mxu0
      %v2412 = vadd.f32 %v2264, %v2411
      %v2413 = vpop.f32.mrf.mxu0
      %v2414 = vadd.f32 %v2264, %v2413
      %2415 = vmatmul.bf16.gmra.mxu0 %v2306
      %v2416 = vpop.f32.mrf.mxu0
      %v2417 = vadd.f32 %v2264, %v2416
      %v2418 = vpop.f32.mrf.mxu0
      %v2419 = vadd.f32 %v2264, %v2418
      %2420 = vmatmul.bf16.gmra.mxu0 %v2309
      %v2421 = vpop.f32.mrf.mxu0
      %v2422 = vadd.f32 %v2264, %v2421
      %v2423 = vpop.f32.mrf.mxu0
      %v2424 = vadd.f32 %v2264, %v2423
      %2425 = vmatmul.bf16.gmra.mxu0 %v2312
      %v2426 = vpop.f32.mrf.mxu0
      %v2427 = vadd.f32 %v2264, %v2426
      %v2428 = vpop.f32.mrf.mxu0
      %v2429 = vadd.f32 %v2264, %v2428
      %2430 = vmatmul.bf16.gmra.mxu0 %v2315
      %v2431 = vpop.f32.mrf.mxu0
      %v2432 = vadd.f32 %v2264, %v2431
      %v2433 = vpop.f32.mrf.mxu0
      %v2434 = vadd.f32 %v2264, %v2433
      %2435 = vmatmul.bf16.gmra.mxu0 %v2318
      %v2436 = vpop.f32.mrf.mxu0
      %v2437 = vadd.f32 %v2264, %v2436
      %v2438 = vpop.f32.mrf.mxu0
      %v2439 = vadd.f32 %v2264, %v2438
      %2440 = vmatmul.bf16.gmra.mxu0 %v2321
      %v2441 = vpop.f32.mrf.mxu0
      %v2442 = vadd.f32 %v2264, %v2441
      %v2443 = vpop.f32.mrf.mxu0
      %v2444 = vadd.f32 %v2264, %v2443
      %2445 = vmatmul.bf16.gmra.mxu0 %v2324
      %v2446 = vpop.f32.mrf.mxu0
      %v2447 = vadd.f32 %v2264, %v2446
      %v2448 = vpop.f32.mrf.mxu0
      %v2449 = vadd.f32 %v2264, %v2448
      %2450 = vmatmul.bf16.gmra.mxu0 %v2327
      %v2451 = vpop.f32.mrf.mxu0
      %v2452 = vadd.f32 %v2264, %v2451
      %v2453 = vpop.f32.mrf.mxu0
      %v2454 = vadd.f32 %v2264, %v2453
      %2455 = vmatmul.bf16.gmra.mxu0 %v2330
      %v2456 = vpop.f32.mrf.mxu0
      %v2457 = vadd.f32 %v2264, %v2456
      %v2458 = vpop.f32.mrf.mxu0
      %v2459 = vadd.f32 %v2264, %v2458
      %2460 = vmatmul.bf16.gmra.mxu0 %v2333
      %v2461 = vpop.f32.mrf.mxu0
      %v2462 = vadd.f32 %v2264, %v2461
      %v2463 = vpop.f32.mrf.mxu0
      %v2464 = vadd.f32 %v2264, %v2463
      %2465 = vmatmul.bf16.gmra.mxu0 %v2336
      %v2466 = vpop.f32.mrf.mxu0
      %v2467 = vadd.f32 %v2264, %v2466
      %v2468 = vpop.f32.mrf.mxu0
      %v2469 = vadd.f32 %v2264, %v2468
      %2470 = vmatmul.bf16.gmra.mxu0 %v2339
      %v2471 = vpop.f32.mrf.mxu0
      %v2472 = vadd.f32 %v2264, %v2471
      %v2473 = vpop.f32.mrf.mxu0
      %v2474 = vadd.f32 %v2264, %v2473
      %2475 = vmatmul.bf16.gmra.mxu0 %v2342
      %v2476 = vpop.f32.mrf.mxu0
      %v2477 = vadd.f32 %v2264, %v2476
      %v2478 = vpop.f32.mrf.mxu0
      %v2479 = vadd.f32 %v2264, %v2478
      %2480 = vmatmul.bf16.gmra.mxu0 %v2345
      %v2481 = vpop.f32.mrf.mxu0
      %v2482 = vadd.f32 %v2264, %v2481
      %v2483 = vpop.f32.mrf.mxu0
      %v2484 = vadd.f32 %v2264, %v2483
      %2485 = vmatmul.bf16.gmra.mxu0 %v2348
      %v2486 = vpop.f32.mrf.mxu0
      %v2487 = vadd.f32 %v2264, %v2486
      %v2488 = vpop.f32.mrf.mxu0
      %v2489 = vadd.f32 %v2264, %v2488
      %2490 = vmatmul.bf16.gmra.mxu0 %v2351
      %v2491 = vpop.f32.mrf.mxu0
      %v2492 = vadd.f32 %v2264, %v2491
      %v2493 = vpop.f32.mrf.mxu0
      %v2494 = vadd.f32 %v2264, %v2493
      %2495 = vmatmul.bf16.gmra.mxu0 %v2354
      %v2496 = vpop.f32.mrf.mxu0
      %v2497 = vadd.f32 %v2264, %v2496
      %v2498 = vpop.f32.mrf.mxu0
      %v2499 = vadd.f32 %v2264, %v2498
      %2500 = vmatmul.bf16.gmra.mxu0 %v2357
      %v2501 = vpop.f32.mrf.mxu0
      %v2502 = vadd.f32 %v2264, %v2501
      %v2503 = vpop.f32.mrf.mxu0
      %v2504 = vadd.f32 %v2264, %v2503
      %2505 = vmatmul.bf16.gmra.mxu0 %v2360
      %v2506 = vpop.f32.mrf.mxu0
      %v2507 = vadd.f32 %v2264, %v2506
      %v2508 = vpop.f32.mrf.mxu0
      %v2509 = vadd.f32 %v2264, %v2508
      %2510 = vdwg.mxu0
      %v2511 = vlaneseq
      %v2512 = vshrl.u32 %v2511, 7
      %v2513 = vadd.s32 %v2512, 8
      %v2514 = vadd.s32 %v2512, 16
      %v2515 = vadd.s32 %v2512, 24
      %v2516 = vadd.s32 %v2512, 32
      %v2517 = vadd.s32 %v2512, 40
      %v2518 = vadd.s32 %v2512, 48
      %v2519 = vadd.s32 %v2512, 56
      %v2520 = vadd.s32 %v2512, 64
      %v2521 = vadd.s32 %v2512, 72
      %v2522 = vadd.s32 %v2512, 80
      %v2523 = vadd.s32 %v2512, 88
      %v2524 = vadd.s32 %v2512, 96
      %v2525 = vadd.s32 %v2512, 104
      %v2526 = vadd.s32 %v2512, 112
      %v2527 = vadd.s32 %v2512, 120
      %v2528 = vadd.s32 %v2512, 128
      %v2529 = vadd.s32 %v2512, 136
      %v2530 = vadd.s32 %v2512, 144
      %v2531 = vadd.s32 %v2512, 152
      %v2532 = vadd.s32 %v2512, 160
      %v2533 = vadd.s32 %v2512, 168
      %v2534 = vadd.s32 %v2512, 176
      %v2535 = vadd.s32 %v2512, 184
      %v2536 = vadd.s32 %v2512, 192
      %v2537 = vadd.s32 %v2512, 200
      %v2538 = vadd.s32 %v2512, 208
      %v2539 = vadd.s32 %v2512, 216
      %v2540 = vadd.s32 %v2512, 224
      %v2541 = vadd.s32 %v2512, 232
      %v2542 = vadd.s32 %v2512, 240
      %v2543 = vadd.s32 %v2512, 248
      %v2544 = vadd.s32 %v2512, 256
      %v2545 = vadd.s32 %v2512, 264
      %v2546 = vadd.s32 %v2512, 272
      %v2547 = vadd.s32 %v2512, 280
      %v2548 = vadd.s32 %v2512, 288
      %v2549 = vadd.s32 %v2512, 296
      %v2550 = vadd.s32 %v2512, 304
      %v2551 = vadd.s32 %v2512, 312
      %v2552 = vadd.s32 %v2512, 320
      %v2553 = vadd.s32 %v2512, 328
      %v2554 = vadd.s32 %v2512, 336
      %v2555 = vadd.s32 %v2512, 344
      %v2556 = vadd.s32 %v2512, 352
      %v2557 = vadd.s32 %v2512, 360
      %v2558 = vadd.s32 %v2512, 368
      %v2559 = vadd.s32 %v2512, 376
      %v2560 = vadd.s32 %v2512, 384
      %v2561 = vadd.s32 %v2512, 392
      %v2562 = vadd.s32 %v2512, 400
      %v2563 = vadd.s32 %v2512, 408
      %v2564 = vadd.s32 %v2512, 416
      %v2565 = vadd.s32 %v2512, 424
      %v2566 = vadd.s32 %v2512, 432
      %v2567 = vadd.s32 %v2512, 440
      %v2568 = vlaneseq
      %v2569 = vand.u32 %v2568, 127
      %vm2570 = vcmp.lt.s32.totalorder %v2512, 64
      %vm2571 = vcmp.lt.s32.totalorder %v2513, 64
      %vm2572 = vcmp.lt.s32.totalorder %v2514, 64
      %vm2573 = vcmp.lt.s32.totalorder %v2515, 64
      %vm2574 = vcmp.lt.s32.totalorder %v2516, 64
      %vm2575 = vcmp.lt.s32.totalorder %v2517, 64
      %vm2576 = vcmp.lt.s32.totalorder %v2518, 64
      %vm2577 = vcmp.lt.s32.totalorder %v2519, 64
      %vm2578 = vcmp.lt.s32.totalorder %v2520, 64
      %vm2579 = vcmp.lt.s32.totalorder %v2521, 64
      %vm2580 = vcmp.lt.s32.totalorder %v2522, 64
      %vm2581 = vcmp.lt.s32.totalorder %v2523, 64
      %vm2582 = vcmp.lt.s32.totalorder %v2524, 64
      %vm2583 = vcmp.lt.s32.totalorder %v2525, 64
      %vm2584 = vcmp.lt.s32.totalorder %v2526, 64
      %vm2585 = vcmp.lt.s32.totalorder %v2527, 64
      %vm2586 = vcmp.lt.s32.totalorder %v2528, 64
      %vm2587 = vcmp.lt.s32.totalorder %v2529, 64
      %vm2588 = vcmp.lt.s32.totalorder %v2530, 64
      %vm2589 = vcmp.lt.s32.totalorder %v2531, 64
      %vm2590 = vcmp.lt.s32.totalorder %v2532, 64
      %vm2591 = vcmp.lt.s32.totalorder %v2533, 64
      %vm2592 = vcmp.lt.s32.totalorder %v2534, 64
      %vm2593 = vcmp.lt.s32.totalorder %v2535, 64
      %vm2594 = vcmp.lt.s32.totalorder %v2536, 64
      %vm2595 = vcmp.lt.s32.totalorder %v2537, 64
      %vm2596 = vcmp.lt.s32.totalorder %v2538, 64
      %vm2597 = vcmp.lt.s32.totalorder %v2539, 64
      %vm2598 = vcmp.lt.s32.totalorder %v2540, 64
      %vm2599 = vcmp.lt.s32.totalorder %v2541, 64
      %vm2600 = vcmp.lt.s32.totalorder %v2542, 64
      %vm2601 = vcmp.lt.s32.totalorder %v2543, 64
      %vm2602 = vcmp.lt.s32.totalorder %v2544, 64
      %vm2603 = vcmp.lt.s32.totalorder %v2545, 64
      %vm2604 = vcmp.lt.s32.totalorder %v2546, 64
      %vm2605 = vcmp.lt.s32.totalorder %v2547, 64
      %vm2606 = vcmp.lt.s32.totalorder %v2548, 64
      %vm2607 = vcmp.lt.s32.totalorder %v2549, 64
      %vm2608 = vcmp.lt.s32.totalorder %v2550, 64
      %vm2609 = vcmp.lt.s32.totalorder %v2551, 64
      %vm2610 = vcmp.lt.s32.totalorder %v2552, 64
      %vm2611 = vcmp.lt.s32.totalorder %v2553, 64
      %vm2612 = vcmp.lt.s32.totalorder %v2554, 64
      %vm2613 = vcmp.lt.s32.totalorder %v2555, 64
      %vm2614 = vcmp.lt.s32.totalorder %v2556, 64
      %vm2615 = vcmp.lt.s32.totalorder %v2557, 64
      %vm2616 = vcmp.lt.s32.totalorder %v2558, 64
      %vm2617 = vcmp.lt.s32.totalorder %v2559, 64
      %vm2618 = vcmp.lt.s32.totalorder %v2560, 64
      %vm2619 = vcmp.lt.s32.totalorder %v2561, 64
      %vm2620 = vcmp.lt.s32.totalorder %v2562, 64
      %vm2621 = vcmp.lt.s32.totalorder %v2563, 64
      %vm2622 = vcmp.lt.s32.totalorder %v2564, 64
      %vm2623 = vcmp.lt.s32.totalorder %v2565, 64
      %vm2624 = vcmp.lt.s32.totalorder %v2566, 64
      %vm2625 = vcmp.lt.s32.totalorder %v2567, 64
      %vm2626 = vcmp.ge.s32.totalorder %v2569, 64
      %vm2627 = vmxor %vm2570, %vm2626
      %vm2628 = vmxor %vm2571, %vm2626
      %vm2629 = vmxor %vm2572, %vm2626
      %vm2630 = vmxor %vm2573, %vm2626
      %vm2631 = vmxor %vm2574, %vm2626
      %vm2632 = vmxor %vm2575, %vm2626
      %vm2633 = vmxor %vm2576, %vm2626
      %vm2634 = vmxor %vm2577, %vm2626
      %vm2635 = vmxor %vm2578, %vm2626
      %vm2636 = vmxor %vm2579, %vm2626
      %vm2637 = vmxor %vm2580, %vm2626
      %vm2638 = vmxor %vm2581, %vm2626
      %vm2639 = vmxor %vm2582, %vm2626
      %vm2640 = vmxor %vm2583, %vm2626
      %vm2641 = vmxor %vm2584, %vm2626
      %vm2642 = vmxor %vm2585, %vm2626
      %vm2643 = vmxor %vm2586, %vm2626
      %vm2644 = vmxor %vm2587, %vm2626
      %vm2645 = vmxor %vm2588, %vm2626
      %vm2646 = vmxor %vm2589, %vm2626
      %vm2647 = vmxor %vm2590, %vm2626
      %vm2648 = vmxor %vm2591, %vm2626
      %vm2649 = vmxor %vm2592, %vm2626
      %vm2650 = vmxor %vm2593, %vm2626
      %vm2651 = vmxor %vm2594, %vm2626
      %vm2652 = vmxor %vm2595, %vm2626
      %vm2653 = vmxor %vm2596, %vm2626
      %vm2654 = vmxor %vm2597, %vm2626
      %vm2655 = vmxor %vm2598, %vm2626
      %vm2656 = vmxor %vm2599, %vm2626
      %vm2657 = vmxor %vm2600, %vm2626
      %vm2658 = vmxor %vm2601, %vm2626
      %vm2659 = vmxor %vm2602, %vm2626
      %vm2660 = vmxor %vm2603, %vm2626
      %vm2661 = vmxor %vm2604, %vm2626
      %vm2662 = vmxor %vm2605, %vm2626
      %vm2663 = vmxor %vm2606, %vm2626
      %vm2664 = vmxor %vm2607, %vm2626
      %vm2665 = vmxor %vm2608, %vm2626
      %vm2666 = vmxor %vm2609, %vm2626
      %vm2667 = vmxor %vm2610, %vm2626
      %vm2668 = vmxor %vm2611, %vm2626
      %vm2669 = vmxor %vm2612, %vm2626
      %vm2670 = vmxor %vm2613, %vm2626
      %vm2671 = vmxor %vm2614, %vm2626
      %vm2672 = vmxor %vm2615, %vm2626
      %vm2673 = vmxor %vm2616, %vm2626
      %vm2674 = vmxor %vm2617, %vm2626
      %vm2675 = vmxor %vm2618, %vm2626
      %vm2676 = vmxor %vm2619, %vm2626
      %vm2677 = vmxor %vm2620, %vm2626
      %vm2678 = vmxor %vm2621, %vm2626
      %vm2679 = vmxor %vm2622, %vm2626
      %vm2680 = vmxor %vm2623, %vm2626
      %vm2681 = vmxor %vm2624, %vm2626
      %vm2682 = vmxor %vm2625, %vm2626
      %v2683 = vsel %vm2627, %v2372, -1e+30
      %v2684 = vsel %vm2628, %v2374, -1e+30
      %v2685 = vsel %vm2629, %v2377, -1e+30
      %v2686 = vsel %vm2630, %v2379, -1e+30
      %v2687 = vsel %vm2631, %v2382, -1e+30
      %v2688 = vsel %vm2632, %v2384, -1e+30
      %v2689 = vsel %vm2633, %v2387, -1e+30
      %v2690 = vsel %vm2634, %v2389, -1e+30
      %v2691 = vsel %vm2635, %v2392, -1e+30
      %v2692 = vsel %vm2636, %v2394, -1e+30
      %v2693 = vsel %vm2637, %v2397, -1e+30
      %v2694 = vsel %vm2638, %v2399, -1e+30
      %v2695 = vsel %vm2639, %v2402, -1e+30
      %v2696 = vsel %vm2640, %v2404, -1e+30
      %v2697 = vsel %vm2641, %v2407, -1e+30
      %v2698 = vsel %vm2642, %v2409, -1e+30
      %v2699 = vsel %vm2643, %v2412, -1e+30
      %v2700 = vsel %vm2644, %v2414, -1e+30
      %v2701 = vsel %vm2645, %v2417, -1e+30
      %v2702 = vsel %vm2646, %v2419, -1e+30
      %v2703 = vsel %vm2647, %v2422, -1e+30
      %v2704 = vsel %vm2648, %v2424, -1e+30
      %v2705 = vsel %vm2649, %v2427, -1e+30
      %v2706 = vsel %vm2650, %v2429, -1e+30
      %v2707 = vsel %vm2651, %v2432, -1e+30
      %v2708 = vsel %vm2652, %v2434, -1e+30
      %v2709 = vsel %vm2653, %v2437, -1e+30
      %v2710 = vsel %vm2654, %v2439, -1e+30
      %v2711 = vsel %vm2655, %v2442, -1e+30
      %v2712 = vsel %vm2656, %v2444, -1e+30
      %v2713 = vsel %vm2657, %v2447, -1e+30
      %v2714 = vsel %vm2658, %v2449, -1e+30
      %v2715 = vsel %vm2659, %v2452, -1e+30
      %v2716 = vsel %vm2660, %v2454, -1e+30
      %v2717 = vsel %vm2661, %v2457, -1e+30
      %v2718 = vsel %vm2662, %v2459, -1e+30
      %v2719 = vsel %vm2663, %v2462, -1e+30
      %v2720 = vsel %vm2664, %v2464, -1e+30
      %v2721 = vsel %vm2665, %v2467, -1e+30
      %v2722 = vsel %vm2666, %v2469, -1e+30
      %v2723 = vsel %vm2667, %v2472, -1e+30
      %v2724 = vsel %vm2668, %v2474, -1e+30
      %v2725 = vsel %vm2669, %v2477, -1e+30
      %v2726 = vsel %vm2670, %v2479, -1e+30
      %v2727 = vsel %vm2671, %v2482, -1e+30
      %v2728 = vsel %vm2672, %v2484, -1e+30
      %v2729 = vsel %vm2673, %v2487, -1e+30
      %v2730 = vsel %vm2674, %v2489, -1e+30
      %v2731 = vsel %vm2675, %v2492, -1e+30
      %v2732 = vsel %vm2676, %v2494, -1e+30
      %v2733 = vsel %vm2677, %v2497, -1e+30
      %v2734 = vsel %vm2678, %v2499, -1e+30
      %v2735 = vsel %vm2679, %v2502, -1e+30
      %v2736 = vsel %vm2680, %v2504, -1e+30
      %v2737 = vsel %vm2681, %v2507, -1e+30
      %v2738 = vsel %vm2682, %v2509, -1e+30
      %2739 = vmax.xlane.f32.xlu0 %v2683
      %v2740 = vpop.xlane.xlu0 %2739
      %2741 = vmax.xlane.f32.xlu0 %v2684
      %v2742 = vpop.xlane.xlu0 %2741
      %2743 = vmax.xlane.f32.xlu0 %v2685
      %v2744 = vpop.xlane.xlu0 %2743
      %2745 = vmax.xlane.f32.xlu0 %v2686
      %v2746 = vpop.xlane.xlu0 %2745
      %2747 = vmax.xlane.f32.xlu0 %v2687
      %v2748 = vpop.xlane.xlu0 %2747
      %2749 = vmax.xlane.f32.xlu0 %v2688
      %v2750 = vpop.xlane.xlu0 %2749
      %2751 = vmax.xlane.f32.xlu0 %v2689
      %v2752 = vpop.xlane.xlu0 %2751
      %2753 = vmax.xlane.f32.xlu0 %v2690
      %v2754 = vpop.xlane.xlu0 %2753
      %2755 = vmax.xlane.f32.xlu0 %v2691
      %v2756 = vpop.xlane.xlu0 %2755
      %2757 = vmax.xlane.f32.xlu0 %v2692
      %v2758 = vpop.xlane.xlu0 %2757
      %2759 = vmax.xlane.f32.xlu0 %v2693
      %v2760 = vpop.xlane.xlu0 %2759
      %2761 = vmax.xlane.f32.xlu0 %v2694
      %v2762 = vpop.xlane.xlu0 %2761
      %2763 = vmax.xlane.f32.xlu0 %v2695
      %v2764 = vpop.xlane.xlu0 %2763
      %2765 = vmax.xlane.f32.xlu0 %v2696
      %v2766 = vpop.xlane.xlu0 %2765
      %2767 = vmax.xlane.f32.xlu0 %v2697
      %v2768 = vpop.xlane.xlu0 %2767
      %2769 = vmax.xlane.f32.xlu0 %v2698
      %v2770 = vpop.xlane.xlu0 %2769
      %2771 = vmax.xlane.f32.xlu0 %v2699
      %v2772 = vpop.xlane.xlu0 %2771
      %2773 = vmax.xlane.f32.xlu0 %v2700
      %v2774 = vpop.xlane.xlu0 %2773
      %2775 = vmax.xlane.f32.xlu0 %v2701
      %v2776 = vpop.xlane.xlu0 %2775
      %2777 = vmax.xlane.f32.xlu0 %v2702
      %v2778 = vpop.xlane.xlu0 %2777
      %2779 = vmax.xlane.f32.xlu0 %v2703
      %v2780 = vpop.xlane.xlu0 %2779
      %2781 = vmax.xlane.f32.xlu0 %v2704
      %v2782 = vpop.xlane.xlu0 %2781
      %2783 = vmax.xlane.f32.xlu0 %v2705
      %v2784 = vpop.xlane.xlu0 %2783
      %2785 = vmax.xlane.f32.xlu0 %v2706
      %v2786 = vpop.xlane.xlu0 %2785
      %2787 = vmax.xlane.f32.xlu0 %v2707
      %v2788 = vpop.xlane.xlu0 %2787
      %2789 = vmax.xlane.f32.xlu0 %v2708
      %v2790 = vpop.xlane.xlu0 %2789
      %2791 = vmax.xlane.f32.xlu0 %v2709
      %v2792 = vpop.xlane.xlu0 %2791
      %2793 = vmax.xlane.f32.xlu0 %v2710
      %v2794 = vpop.xlane.xlu0 %2793
      %2795 = vmax.xlane.f32.xlu0 %v2711
      %v2796 = vpop.xlane.xlu0 %2795
      %2797 = vmax.xlane.f32.xlu0 %v2712
      %v2798 = vpop.xlane.xlu0 %2797
      %2799 = vmax.xlane.f32.xlu0 %v2713
      %v2800 = vpop.xlane.xlu0 %2799
      %2801 = vmax.xlane.f32.xlu0 %v2714
      %v2802 = vpop.xlane.xlu0 %2801
      %2803 = vmax.xlane.f32.xlu0 %v2715
      %v2804 = vpop.xlane.xlu0 %2803
      %2805 = vmax.xlane.f32.xlu0 %v2716
      %v2806 = vpop.xlane.xlu0 %2805
      %2807 = vmax.xlane.f32.xlu0 %v2717
      %v2808 = vpop.xlane.xlu0 %2807
      %2809 = vmax.xlane.f32.xlu0 %v2718
      %v2810 = vpop.xlane.xlu0 %2809
      %2811 = vmax.xlane.f32.xlu0 %v2719
      %v2812 = vpop.xlane.xlu0 %2811
      %2813 = vmax.xlane.f32.xlu0 %v2720
      %v2814 = vpop.xlane.xlu0 %2813
      %2815 = vmax.xlane.f32.xlu0 %v2721
      %v2816 = vpop.xlane.xlu0 %2815
      %2817 = vmax.xlane.f32.xlu0 %v2722
      %v2818 = vpop.xlane.xlu0 %2817
      %2819 = vmax.xlane.f32.xlu0 %v2723
      %v2820 = vpop.xlane.xlu0 %2819
      %2821 = vmax.xlane.f32.xlu0 %v2724
      %v2822 = vpop.xlane.xlu0 %2821
      %2823 = vmax.xlane.f32.xlu0 %v2725
      %v2824 = vpop.xlane.xlu0 %2823
      %2825 = vmax.xlane.f32.xlu0 %v2726
      %v2826 = vpop.xlane.xlu0 %2825
      %2827 = vmax.xlane.f32.xlu0 %v2727
      %v2828 = vpop.xlane.xlu0 %2827
      %2829 = vmax.xlane.f32.xlu0 %v2728
      %v2830 = vpop.xlane.xlu0 %2829
      %2831 = vmax.xlane.f32.xlu0 %v2729
      %v2832 = vpop.xlane.xlu0 %2831
      %2833 = vmax.xlane.f32.xlu0 %v2730
      %v2834 = vpop.xlane.xlu0 %2833
      %2835 = vmax.xlane.f32.xlu0 %v2731
      %v2836 = vpop.xlane.xlu0 %2835
      %2837 = vmax.xlane.f32.xlu0 %v2732
      %v2838 = vpop.xlane.xlu0 %2837
      %2839 = vmax.xlane.f32.xlu0 %v2733
      %v2840 = vpop.xlane.xlu0 %2839
      %2841 = vmax.xlane.f32.xlu0 %v2734
      %v2842 = vpop.xlane.xlu0 %2841
      %2843 = vmax.xlane.f32.xlu0 %v2735
      %v2844 = vpop.xlane.xlu0 %2843
      %2845 = vmax.xlane.f32.xlu0 %v2736
      %v2846 = vpop.xlane.xlu0 %2845
      %2847 = vmax.xlane.f32.xlu0 %v2737
      %v2848 = vpop.xlane.xlu0 %2847
      %2849 = vmax.xlane.f32.xlu0 %v2738
      %v2850 = vpop.xlane.xlu0 %2849
      %v2851 = vsub.f32 %v2683, %v2740
      %v2852 = vsub.f32 %v2684, %v2742
      %v2853 = vsub.f32 %v2685, %v2744
      %v2854 = vsub.f32 %v2686, %v2746
      %v2855 = vsub.f32 %v2687, %v2748
      %v2856 = vsub.f32 %v2688, %v2750
      %v2857 = vsub.f32 %v2689, %v2752
      %v2858 = vsub.f32 %v2690, %v2754
      %v2859 = vsub.f32 %v2691, %v2756
      %v2860 = vsub.f32 %v2692, %v2758
      %v2861 = vsub.f32 %v2693, %v2760
      %v2862 = vsub.f32 %v2694, %v2762
      %v2863 = vsub.f32 %v2695, %v2764
      %v2864 = vsub.f32 %v2696, %v2766
      %v2865 = vsub.f32 %v2697, %v2768
      %v2866 = vsub.f32 %v2698, %v2770
      %v2867 = vsub.f32 %v2699, %v2772
      %v2868 = vsub.f32 %v2700, %v2774
      %v2869 = vsub.f32 %v2701, %v2776
      %v2870 = vsub.f32 %v2702, %v2778
      %v2871 = vsub.f32 %v2703, %v2780
      %v2872 = vsub.f32 %v2704, %v2782
      %v2873 = vsub.f32 %v2705, %v2784
      %v2874 = vsub.f32 %v2706, %v2786
      %v2875 = vsub.f32 %v2707, %v2788
      %v2876 = vsub.f32 %v2708, %v2790
      %v2877 = vsub.f32 %v2709, %v2792
      %v2878 = vsub.f32 %v2710, %v2794
      %v2879 = vsub.f32 %v2711, %v2796
      %v2880 = vsub.f32 %v2712, %v2798
      %v2881 = vsub.f32 %v2713, %v2800
      %v2882 = vsub.f32 %v2714, %v2802
      %v2883 = vsub.f32 %v2715, %v2804
      %v2884 = vsub.f32 %v2716, %v2806
      %v2885 = vsub.f32 %v2717, %v2808
      %v2886 = vsub.f32 %v2718, %v2810
      %v2887 = vsub.f32 %v2719, %v2812
      %v2888 = vsub.f32 %v2720, %v2814
      %v2889 = vsub.f32 %v2721, %v2816
      %v2890 = vsub.f32 %v2722, %v2818
      %v2891 = vsub.f32 %v2723, %v2820
      %v2892 = vsub.f32 %v2724, %v2822
      %v2893 = vsub.f32 %v2725, %v2824
      %v2894 = vsub.f32 %v2726, %v2826
      %v2895 = vsub.f32 %v2727, %v2828
      %v2896 = vsub.f32 %v2728, %v2830
      %v2897 = vsub.f32 %v2729, %v2832
      %v2898 = vsub.f32 %v2730, %v2834
      %v2899 = vsub.f32 %v2731, %v2836
      %v2900 = vsub.f32 %v2732, %v2838
      %v2901 = vsub.f32 %v2733, %v2840
      %v2902 = vsub.f32 %v2734, %v2842
      %v2903 = vsub.f32 %v2735, %v2844
      %v2904 = vsub.f32 %v2736, %v2846
      %v2905 = vsub.f32 %v2737, %v2848
      %v2906 = vsub.f32 %v2738, %v2850
      %v2907 = vmul.f32 %v2851, 1.442695
      %v2908 = vpow.pop %v2907
      %v2909 = vmul.f32 %v2852, 1.442695
      %v2910 = vpow.pop %v2909
      %v2911 = vmul.f32 %v2853, 1.442695
      %v2912 = vpow.pop %v2911
      %v2913 = vmul.f32 %v2854, 1.442695
      %v2914 = vpow.pop %v2913
      %v2915 = vmul.f32 %v2855, 1.442695
      %v2916 = vpow.pop %v2915
      %v2917 = vmul.f32 %v2856, 1.442695
      %v2918 = vpow.pop %v2917
      %v2919 = vmul.f32 %v2857, 1.442695
      %v2920 = vpow.pop %v2919
      %v2921 = vmul.f32 %v2858, 1.442695
      %v2922 = vpow.pop %v2921
      %v2923 = vmul.f32 %v2859, 1.442695
      %v2924 = vpow.pop %v2923
      %v2925 = vmul.f32 %v2860, 1.442695
      %v2926 = vpow.pop %v2925
      %v2927 = vmul.f32 %v2861, 1.442695
      %v2928 = vpow.pop %v2927
      %v2929 = vmul.f32 %v2862, 1.442695
      %v2930 = vpow.pop %v2929
      %v2931 = vmul.f32 %v2863, 1.442695
      %v2932 = vpow.pop %v2931
      %v2933 = vmul.f32 %v2864, 1.442695
      %v2934 = vpow.pop %v2933
      %v2935 = vmul.f32 %v2865, 1.442695
      %v2936 = vpow.pop %v2935
      %v2937 = vmul.f32 %v2866, 1.442695
      %v2938 = vpow.pop %v2937
      %v2939 = vmul.f32 %v2867, 1.442695
      %v2940 = vpow.pop %v2939
      %v2941 = vmul.f32 %v2868, 1.442695
      %v2942 = vpow.pop %v2941
      %v2943 = vmul.f32 %v2869, 1.442695
      %v2944 = vpow.pop %v2943
      %v2945 = vmul.f32 %v2870, 1.442695
      %v2946 = vpow.pop %v2945
      %v2947 = vmul.f32 %v2871, 1.442695
      %v2948 = vpow.pop %v2947
      %v2949 = vmul.f32 %v2872, 1.442695
      %v2950 = vpow.pop %v2949
      %v2951 = vmul.f32 %v2873, 1.442695
      %v2952 = vpow.pop %v2951
      %v2953 = vmul.f32 %v2874, 1.442695
      %v2954 = vpow.pop %v2953
      %v2955 = vmul.f32 %v2875, 1.442695
      %v2956 = vpow.pop %v2955
      %v2957 = vmul.f32 %v2876, 1.442695
      %v2958 = vpow.pop %v2957
      %v2959 = vmul.f32 %v2877, 1.442695
      %v2960 = vpow.pop %v2959
      %v2961 = vmul.f32 %v2878, 1.442695
      %v2962 = vpow.pop %v2961
      %v2963 = vmul.f32 %v2879, 1.442695
      %v2964 = vpow.pop %v2963
      %v2965 = vmul.f32 %v2880, 1.442695
      %v2966 = vpow.pop %v2965
      %v2967 = vmul.f32 %v2881, 1.442695
      %v2968 = vpow.pop %v2967
      %v2969 = vmul.f32 %v2882, 1.442695
      %v2970 = vpow.pop %v2969
      %v2971 = vmul.f32 %v2883, 1.442695
      %v2972 = vpow.pop %v2971
      %v2973 = vmul.f32 %v2884, 1.442695
      %v2974 = vpow.pop %v2973
      %v2975 = vmul.f32 %v2885, 1.442695
      %v2976 = vpow.pop %v2975
      %v2977 = vmul.f32 %v2886, 1.442695
      %v2978 = vpow.pop %v2977
      %v2979 = vmul.f32 %v2887, 1.442695
      %v2980 = vpow.pop %v2979
      %v2981 = vmul.f32 %v2888, 1.442695
      %v2982 = vpow.pop %v2981
      %v2983 = vmul.f32 %v2889, 1.442695
      %v2984 = vpow.pop %v2983
      %v2985 = vmul.f32 %v2890, 1.442695
      %v2986 = vpow.pop %v2985
      %v2987 = vmul.f32 %v2891, 1.442695
      %v2988 = vpow.pop %v2987
      %v2989 = vmul.f32 %v2892, 1.442695
      %v2990 = vpow.pop %v2989
      %v2991 = vmul.f32 %v2893, 1.442695
      %v2992 = vpow.pop %v2991
      %v2993 = vmul.f32 %v2894, 1.442695
      %v2994 = vpow.pop %v2993
      %v2995 = vmul.f32 %v2895, 1.442695
      %v2996 = vpow.pop %v2995
      %v2997 = vmul.f32 %v2896, 1.442695
      %v2998 = vpow.pop %v2997
      %v2999 = vmul.f32 %v2897, 1.442695
      %v3000 = vpow.pop %v2999
      %v3001 = vmul.f32 %v2898, 1.442695
      %v3002 = vpow.pop %v3001
      %v3003 = vmul.f32 %v2899, 1.442695
      %v3004 = vpow.pop %v3003
      %v3005 = vmul.f32 %v2900, 1.442695
      %v3006 = vpow.pop %v3005
      %v3007 = vmul.f32 %v2901, 1.442695
      %v3008 = vpow.pop %v3007
      %v3009 = vmul.f32 %v2902, 1.442695
      %v3010 = vpow.pop %v3009
      %v3011 = vmul.f32 %v2903, 1.442695
      %v3012 = vpow.pop %v3011
      %v3013 = vmul.f32 %v2904, 1.442695
      %v3014 = vpow.pop %v3013
      %v3015 = vmul.f32 %v2905, 1.442695
      %v3016 = vpow.pop %v3015
      %v3017 = vmul.f32 %v2906, 1.442695
      %v3018 = vpow.pop %v3017
      %3019 = vadd.xlane.f32.xlu0 %v2908
      %v3020 = vpop.xlane.xlu0 %3019
      %3021 = vadd.xlane.f32.xlu0 %v2910
      %v3022 = vpop.xlane.xlu0 %3021
      %3023 = vadd.xlane.f32.xlu0 %v2912
      %v3024 = vpop.xlane.xlu0 %3023
      %3025 = vadd.xlane.f32.xlu0 %v2914
      %v3026 = vpop.xlane.xlu0 %3025
      %3027 = vadd.xlane.f32.xlu0 %v2916
      %v3028 = vpop.xlane.xlu0 %3027
      %3029 = vadd.xlane.f32.xlu0 %v2918
      %v3030 = vpop.xlane.xlu0 %3029
      %3031 = vadd.xlane.f32.xlu0 %v2920
      %v3032 = vpop.xlane.xlu0 %3031
      %3033 = vadd.xlane.f32.xlu0 %v2922
      %v3034 = vpop.xlane.xlu0 %3033
      %3035 = vadd.xlane.f32.xlu0 %v2924
      %v3036 = vpop.xlane.xlu0 %3035
      %3037 = vadd.xlane.f32.xlu0 %v2926
      %v3038 = vpop.xlane.xlu0 %3037
      %3039 = vadd.xlane.f32.xlu0 %v2928
      %v3040 = vpop.xlane.xlu0 %3039
      %3041 = vadd.xlane.f32.xlu0 %v2930
      %v3042 = vpop.xlane.xlu0 %3041
      %3043 = vadd.xlane.f32.xlu0 %v2932
      %v3044 = vpop.xlane.xlu0 %3043
      %3045 = vadd.xlane.f32.xlu0 %v2934
      %v3046 = vpop.xlane.xlu0 %3045
      %3047 = vadd.xlane.f32.xlu0 %v2936
      %v3048 = vpop.xlane.xlu0 %3047
      %3049 = vadd.xlane.f32.xlu0 %v2938
      %v3050 = vpop.xlane.xlu0 %3049
      %3051 = vadd.xlane.f32.xlu0 %v2940
      %v3052 = vpop.xlane.xlu0 %3051
      %3053 = vadd.xlane.f32.xlu0 %v2942
      %v3054 = vpop.xlane.xlu0 %3053
      %3055 = vadd.xlane.f32.xlu0 %v2944
      %v3056 = vpop.xlane.xlu0 %3055
      %3057 = vadd.xlane.f32.xlu0 %v2946
      %v3058 = vpop.xlane.xlu0 %3057
      %3059 = vadd.xlane.f32.xlu0 %v2948
      %v3060 = vpop.xlane.xlu0 %3059
      %3061 = vadd.xlane.f32.xlu0 %v2950
      %v3062 = vpop.xlane.xlu0 %3061
      %3063 = vadd.xlane.f32.xlu0 %v2952
      %v3064 = vpop.xlane.xlu0 %3063
      %3065 = vadd.xlane.f32.xlu0 %v2954
      %v3066 = vpop.xlane.xlu0 %3065
      %3067 = vadd.xlane.f32.xlu0 %v2956
      %v3068 = vpop.xlane.xlu0 %3067
      %3069 = vadd.xlane.f32.xlu0 %v2958
      %v3070 = vpop.xlane.xlu0 %3069
      %3071 = vadd.xlane.f32.xlu0 %v2960
      %v3072 = vpop.xlane.xlu0 %3071
      %3073 = vadd.xlane.f32.xlu0 %v2962
      %v3074 = vpop.xlane.xlu0 %3073
      %3075 = vadd.xlane.f32.xlu0 %v2964
      %v3076 = vpop.xlane.xlu0 %3075
      %3077 = vadd.xlane.f32.xlu0 %v2966
      %v3078 = vpop.xlane.xlu0 %3077
      %3079 = vadd.xlane.f32.xlu0 %v2968
      %v3080 = vpop.xlane.xlu0 %3079
      %3081 = vadd.xlane.f32.xlu0 %v2970
      %v3082 = vpop.xlane.xlu0 %3081
      %3083 = vadd.xlane.f32.xlu0 %v2972
      %v3084 = vpop.xlane.xlu0 %3083
      %3085 = vadd.xlane.f32.xlu0 %v2974
      %v3086 = vpop.xlane.xlu0 %3085
      %3087 = vadd.xlane.f32.xlu0 %v2976
      %v3088 = vpop.xlane.xlu0 %3087
      %3089 = vadd.xlane.f32.xlu0 %v2978
      %v3090 = vpop.xlane.xlu0 %3089
      %3091 = vadd.xlane.f32.xlu0 %v2980
      %v3092 = vpop.xlane.xlu0 %3091
      %3093 = vadd.xlane.f32.xlu0 %v2982
      %v3094 = vpop.xlane.xlu0 %3093
      %3095 = vadd.xlane.f32.xlu0 %v2984
      %v3096 = vpop.xlane.xlu0 %3095
      %3097 = vadd.xlane.f32.xlu0 %v2986
      %v3098 = vpop.xlane.xlu0 %3097
      %3099 = vadd.xlane.f32.xlu0 %v2988
      %v3100 = vpop.xlane.xlu0 %3099
      %3101 = vadd.xlane.f32.xlu0 %v2990
      %v3102 = vpop.xlane.xlu0 %3101
      %3103 = vadd.xlane.f32.xlu0 %v2992
      %v3104 = vpop.xlane.xlu0 %3103
      %3105 = vadd.xlane.f32.xlu0 %v2994
      %v3106 = vpop.xlane.xlu0 %3105
      %3107 = vadd.xlane.f32.xlu0 %v2996
      %v3108 = vpop.xlane.xlu0 %3107
      %3109 = vadd.xlane.f32.xlu0 %v2998
      %v3110 = vpop.xlane.xlu0 %3109
      %3111 = vadd.xlane.f32.xlu0 %v3000
      %v3112 = vpop.xlane.xlu0 %3111
      %3113 = vadd.xlane.f32.xlu0 %v3002
      %v3114 = vpop.xlane.xlu0 %3113
      %3115 = vadd.xlane.f32.xlu0 %v3004
      %v3116 = vpop.xlane.xlu0 %3115
      %3117 = vadd.xlane.f32.xlu0 %v3006
      %v3118 = vpop.xlane.xlu0 %3117
      %3119 = vadd.xlane.f32.xlu0 %v3008
      %v3120 = vpop.xlane.xlu0 %3119
      %3121 = vadd.xlane.f32.xlu0 %v3010
      %v3122 = vpop.xlane.xlu0 %3121
      %3123 = vadd.xlane.f32.xlu0 %v3012
      %v3124 = vpop.xlane.xlu0 %3123
      %3125 = vadd.xlane.f32.xlu0 %v3014
      %v3126 = vpop.xlane.xlu0 %3125
      %3127 = vadd.xlane.f32.xlu0 %v3016
      %v3128 = vpop.xlane.xlu0 %3127
      %3129 = vadd.xlane.f32.xlu0 %v3018
      %v3130 = vpop.xlane.xlu0 %3129
      %v3131 = vld [vmem:[%s393] sm:$0xff]
      %v3132 = vld [vmem:[%s393 + $0x8] sm:$0xff]
      %v3133 = vld [vmem:[%s393 + $0x10] sm:$0xff]
      %v3134 = vld [vmem:[%s393 + $0x18] sm:$0xff]
      %v3135 = vld [vmem:[%s393 + $0x20] sm:$0xff]
      %v3136 = vld [vmem:[%s393 + $0x28] sm:$0xff]
      %v3137 = vld [vmem:[%s393 + $0x30] sm:$0xff]
      %v3138 = vld [vmem:[%s393 + $0x38] sm:$0xff]
      %v3139 = vld [vmem:[%s393 + $0x40] sm:$0xff]
      %v3140 = vld [vmem:[%s393 + $0x48] sm:$0xff]
      %v3141 = vld [vmem:[%s393 + $0x50] sm:$0xff]
      %v3142 = vld [vmem:[%s393 + $0x58] sm:$0xff]
      %v3143 = vld [vmem:[%s393 + $0x60] sm:$0xff]
      %v3144 = vld [vmem:[%s393 + $0x68] sm:$0xff]
      %v3145 = vld [vmem:[%s393 + $0x70] sm:$0xff]
      %v3146 = vld [vmem:[%s393 + $0x78] sm:$0xff]
      %v3147 = vld [vmem:[%s393 + $0x80] sm:$0xff]
      %v3148 = vld [vmem:[%s393 + $0x88] sm:$0xff]
      %v3149 = vld [vmem:[%s393 + $0x90] sm:$0xff]
      %v3150 = vld [vmem:[%s393 + $0x98] sm:$0xff]
      %v3151 = vld [vmem:[%s393 + $0xa0] sm:$0xff]
      %v3152 = vld [vmem:[%s393 + $0xa8] sm:$0xff]
      %v3153 = vld [vmem:[%s393 + $0xb0] sm:$0xff]
      %v3154 = vld [vmem:[%s393 + $0xb8] sm:$0xff]
      %v3155 = vld [vmem:[%s393 + $0xc0] sm:$0xff]
      %v3156 = vld [vmem:[%s393 + $0xc8] sm:$0xff]
      %v3157 = vld [vmem:[%s393 + $0xd0] sm:$0xff]
      %v3158 = vld [vmem:[%s393 + $0xd8] sm:$0xff]
      %v3159 = vld [vmem:[%s393 + $0xe0] sm:$0xff]
      %v3160 = vld [vmem:[%s393 + $0xe8] sm:$0xff]
      %v3161 = vld [vmem:[%s393 + $0xf0] sm:$0xff]
      %v3162 = vld [vmem:[%s393 + $0xf8] sm:$0xff]
      %v3163 = vld [vmem:[%s393 + $0x100] sm:$0xff]
      %v3164 = vld [vmem:[%s393 + $0x108] sm:$0xff]
      %v3165 = vld [vmem:[%s393 + $0x110] sm:$0xff]
      %v3166 = vld [vmem:[%s393 + $0x118] sm:$0xff]
      %v3167 = vld [vmem:[%s393 + $0x120] sm:$0xff]
      %v3168 = vld [vmem:[%s393 + $0x128] sm:$0xff]
      %v3169 = vld [vmem:[%s393 + $0x130] sm:$0xff]
      %v3170 = vld [vmem:[%s393 + $0x138] sm:$0xff]
      %v3171 = vld [vmem:[%s393 + $0x140] sm:$0xff]
      %v3172 = vld [vmem:[%s393 + $0x148] sm:$0xff]
      %v3173 = vld [vmem:[%s393 + $0x150] sm:$0xff]
      %v3174 = vld [vmem:[%s393 + $0x158] sm:$0xff]
      %v3175 = vld [vmem:[%s393 + $0x160] sm:$0xff]
      %v3176 = vld [vmem:[%s393 + $0x168] sm:$0xff]
      %v3177 = vld [vmem:[%s393 + $0x170] sm:$0xff]
      %v3178 = vld [vmem:[%s393 + $0x178] sm:$0xff]
      %v3179 = vld [vmem:[%s393 + $0x180] sm:$0xff]
      %v3180 = vld [vmem:[%s393 + $0x188] sm:$0xff]
      %v3181 = vld [vmem:[%s393 + $0x190] sm:$0xff]
      %v3182 = vld [vmem:[%s393 + $0x198] sm:$0xff]
      %v3183 = vld [vmem:[%s393 + $0x1a0] sm:$0xff]
      %v3184 = vld [vmem:[%s393 + $0x1a8] sm:$0xff]
      %v3185 = vld [vmem:[%s393 + $0x1b0] sm:$0xff]
      %v3186 = vld [vmem:[%s393 + $0x1b8] sm:$0xff]
      %3187 = vset.pattern.permute.xlu0 0
      %3188 = vperm.xlu0 %3187, %v3131
      %v3189 = vpop.permute.xlu0 %3188
      %3190 = vset.pattern.permute.xlu0 0
      %3191 = vperm.xlu0 %3190, %v3132
      %v3192 = vpop.permute.xlu0 %3191
      %3193 = vset.pattern.permute.xlu0 0
      %3194 = vperm.xlu0 %3193, %v3133
      %v3195 = vpop.permute.xlu0 %3194
      %3196 = vset.pattern.permute.xlu0 0
      %3197 = vperm.xlu0 %3196, %v3134
      %v3198 = vpop.permute.xlu0 %3197
      %3199 = vset.pattern.permute.xlu0 0
      %3200 = vperm.xlu0 %3199, %v3135
      %v3201 = vpop.permute.xlu0 %3200
      %3202 = vset.pattern.permute.xlu0 0
      %3203 = vperm.xlu0 %3202, %v3136
      %v3204 = vpop.permute.xlu0 %3203
      %3205 = vset.pattern.permute.xlu0 0
      %3206 = vperm.xlu0 %3205, %v3137
      %v3207 = vpop.permute.xlu0 %3206
      %3208 = vset.pattern.permute.xlu0 0
      %3209 = vperm.xlu0 %3208, %v3138
      %v3210 = vpop.permute.xlu0 %3209
      %3211 = vset.pattern.permute.xlu0 0
      %3212 = vperm.xlu0 %3211, %v3139
      %v3213 = vpop.permute.xlu0 %3212
      %3214 = vset.pattern.permute.xlu0 0
      %3215 = vperm.xlu0 %3214, %v3140
      %v3216 = vpop.permute.xlu0 %3215
      %3217 = vset.pattern.permute.xlu0 0
      %3218 = vperm.xlu0 %3217, %v3141
      %v3219 = vpop.permute.xlu0 %3218
      %3220 = vset.pattern.permute.xlu0 0
      %3221 = vperm.xlu0 %3220, %v3142
      %v3222 = vpop.permute.xlu0 %3221
      %3223 = vset.pattern.permute.xlu0 0
      %3224 = vperm.xlu0 %3223, %v3143
      %v3225 = vpop.permute.xlu0 %3224
      %3226 = vset.pattern.permute.xlu0 0
      %3227 = vperm.xlu0 %3226, %v3144
      %v3228 = vpop.permute.xlu0 %3227
      %3229 = vset.pattern.permute.xlu0 0
      %3230 = vperm.xlu0 %3229, %v3145
      %v3231 = vpop.permute.xlu0 %3230
      %3232 = vset.pattern.permute.xlu0 0
      %3233 = vperm.xlu0 %3232, %v3146
      %v3234 = vpop.permute.xlu0 %3233
      %3235 = vset.pattern.permute.xlu0 0
      %3236 = vperm.xlu0 %3235, %v3147
      %v3237 = vpop.permute.xlu0 %3236
      %3238 = vset.pattern.permute.xlu0 0
      %3239 = vperm.xlu0 %3238, %v3148
      %v3240 = vpop.permute.xlu0 %3239
      %3241 = vset.pattern.permute.xlu0 0
      %3242 = vperm.xlu0 %3241, %v3149
      %v3243 = vpop.permute.xlu0 %3242
      %3244 = vset.pattern.permute.xlu0 0
      %3245 = vperm.xlu0 %3244, %v3150
      %v3246 = vpop.permute.xlu0 %3245
      %3247 = vset.pattern.permute.xlu0 0
      %3248 = vperm.xlu0 %3247, %v3151
      %v3249 = vpop.permute.xlu0 %3248
      %3250 = vset.pattern.permute.xlu0 0
      %3251 = vperm.xlu0 %3250, %v3152
      %v3252 = vpop.permute.xlu0 %3251
      %3253 = vset.pattern.permute.xlu0 0
      %3254 = vperm.xlu0 %3253, %v3153
      %v3255 = vpop.permute.xlu0 %3254
      %3256 = vset.pattern.permute.xlu0 0
      %3257 = vperm.xlu0 %3256, %v3154
      %v3258 = vpop.permute.xlu0 %3257
      %3259 = vset.pattern.permute.xlu0 0
      %3260 = vperm.xlu0 %3259, %v3155
      %v3261 = vpop.permute.xlu0 %3260
      %3262 = vset.pattern.permute.xlu0 0
      %3263 = vperm.xlu0 %3262, %v3156
      %v3264 = vpop.permute.xlu0 %3263
      %3265 = vset.pattern.permute.xlu0 0
      %3266 = vperm.xlu0 %3265, %v3157
      %v3267 = vpop.permute.xlu0 %3266
      %3268 = vset.pattern.permute.xlu0 0
      %3269 = vperm.xlu0 %3268, %v3158
      %v3270 = vpop.permute.xlu0 %3269
      %3271 = vset.pattern.permute.xlu0 0
      %3272 = vperm.xlu0 %3271, %v3159
      %v3273 = vpop.permute.xlu0 %3272
      %3274 = vset.pattern.permute.xlu0 0
      %3275 = vperm.xlu0 %3274, %v3160
      %v3276 = vpop.permute.xlu0 %3275
      %3277 = vset.pattern.permute.xlu0 0
      %3278 = vperm.xlu0 %3277, %v3161
      %v3279 = vpop.permute.xlu0 %3278
      %3280 = vset.pattern.permute.xlu0 0
      %3281 = vperm.xlu0 %3280, %v3162
      %v3282 = vpop.permute.xlu0 %3281
      %3283 = vset.pattern.permute.xlu0 0
      %3284 = vperm.xlu0 %3283, %v3163
      %v3285 = vpop.permute.xlu0 %3284
      %3286 = vset.pattern.permute.xlu0 0
      %3287 = vperm.xlu0 %3286, %v3164
      %v3288 = vpop.permute.xlu0 %3287
      %3289 = vset.pattern.permute.xlu0 0
      %3290 = vperm.xlu0 %3289, %v3165
      %v3291 = vpop.permute.xlu0 %3290
      %3292 = vset.pattern.permute.xlu0 0
      %3293 = vperm.xlu0 %3292, %v3166
      %v3294 = vpop.permute.xlu0 %3293
      %3295 = vset.pattern.permute.xlu0 0
      %3296 = vperm.xlu0 %3295, %v3167
      %v3297 = vpop.permute.xlu0 %3296
      %3298 = vset.pattern.permute.xlu0 0
      %3299 = vperm.xlu0 %3298, %v3168
      %v3300 = vpop.permute.xlu0 %3299
      %3301 = vset.pattern.permute.xlu0 0
      %3302 = vperm.xlu0 %3301, %v3169
      %v3303 = vpop.permute.xlu0 %3302
      %3304 = vset.pattern.permute.xlu0 0
      %3305 = vperm.xlu0 %3304, %v3170
      %v3306 = vpop.permute.xlu0 %3305
      %3307 = vset.pattern.permute.xlu0 0
      %3308 = vperm.xlu0 %3307, %v3171
      %v3309 = vpop.permute.xlu0 %3308
      %3310 = vset.pattern.permute.xlu0 0
      %3311 = vperm.xlu0 %3310, %v3172
      %v3312 = vpop.permute.xlu0 %3311
      %3313 = vset.pattern.permute.xlu0 0
      %3314 = vperm.xlu0 %3313, %v3173
      %v3315 = vpop.permute.xlu0 %3314
      %3316 = vset.pattern.permute.xlu0 0
      %3317 = vperm.xlu0 %3316, %v3174
      %v3318 = vpop.permute.xlu0 %3317
      %3319 = vset.pattern.permute.xlu0 0
      %3320 = vperm.xlu0 %3319, %v3175
      %v3321 = vpop.permute.xlu0 %3320
      %3322 = vset.pattern.permute.xlu0 0
      %3323 = vperm.xlu0 %3322, %v3176
      %v3324 = vpop.permute.xlu0 %3323
      %3325 = vset.pattern.permute.xlu0 0
      %3326 = vperm.xlu0 %3325, %v3177
      %v3327 = vpop.permute.xlu0 %3326
      %3328 = vset.pattern.permute.xlu0 0
      %3329 = vperm.xlu0 %3328, %v3178
      %v3330 = vpop.permute.xlu0 %3329
      %3331 = vset.pattern.permute.xlu0 0
      %3332 = vperm.xlu0 %3331, %v3179
      %v3333 = vpop.permute.xlu0 %3332
      %3334 = vset.pattern.permute.xlu0 0
      %3335 = vperm.xlu0 %3334, %v3180
      %v3336 = vpop.permute.xlu0 %3335
      %3337 = vset.pattern.permute.xlu0 0
      %3338 = vperm.xlu0 %3337, %v3181
      %v3339 = vpop.permute.xlu0 %3338
      %3340 = vset.pattern.permute.xlu0 0
      %3341 = vperm.xlu0 %3340, %v3182
      %v3342 = vpop.permute.xlu0 %3341
      %3343 = vset.pattern.permute.xlu0 0
      %3344 = vperm.xlu0 %3343, %v3183
      %v3345 = vpop.permute.xlu0 %3344
      %3346 = vset.pattern.permute.xlu0 0
      %3347 = vperm.xlu0 %3346, %v3184
      %v3348 = vpop.permute.xlu0 %3347
      %3349 = vset.pattern.permute.xlu0 0
      %3350 = vperm.xlu0 %3349, %v3185
      %v3351 = vpop.permute.xlu0 %3350
      %3352 = vset.pattern.permute.xlu0 0
      %3353 = vperm.xlu0 %3352, %v3186
      %v3354 = vpop.permute.xlu0 %3353
      %vm3355 = vcmp.eq.s32.totalorder %v2569, %v3189
      %vm3356 = vcmp.eq.s32.totalorder %v2569, %v3192
      %vm3357 = vcmp.eq.s32.totalorder %v2569, %v3195
      %vm3358 = vcmp.eq.s32.totalorder %v2569, %v3198
      %vm3359 = vcmp.eq.s32.totalorder %v2569, %v3201
      %vm3360 = vcmp.eq.s32.totalorder %v2569, %v3204
      %vm3361 = vcmp.eq.s32.totalorder %v2569, %v3207
      %vm3362 = vcmp.eq.s32.totalorder %v2569, %v3210
      %vm3363 = vcmp.eq.s32.totalorder %v2569, %v3213
      %vm3364 = vcmp.eq.s32.totalorder %v2569, %v3216
      %vm3365 = vcmp.eq.s32.totalorder %v2569, %v3219
      %vm3366 = vcmp.eq.s32.totalorder %v2569, %v3222
      %vm3367 = vcmp.eq.s32.totalorder %v2569, %v3225
      %vm3368 = vcmp.eq.s32.totalorder %v2569, %v3228
      %vm3369 = vcmp.eq.s32.totalorder %v2569, %v3231
      %vm3370 = vcmp.eq.s32.totalorder %v2569, %v3234
      %vm3371 = vcmp.eq.s32.totalorder %v2569, %v3237
      %vm3372 = vcmp.eq.s32.totalorder %v2569, %v3240
      %vm3373 = vcmp.eq.s32.totalorder %v2569, %v3243
      %vm3374 = vcmp.eq.s32.totalorder %v2569, %v3246
      %vm3375 = vcmp.eq.s32.totalorder %v2569, %v3249
      %vm3376 = vcmp.eq.s32.totalorder %v2569, %v3252
      %vm3377 = vcmp.eq.s32.totalorder %v2569, %v3255
      %vm3378 = vcmp.eq.s32.totalorder %v2569, %v3258
      %vm3379 = vcmp.eq.s32.totalorder %v2569, %v3261
      %vm3380 = vcmp.eq.s32.totalorder %v2569, %v3264
      %vm3381 = vcmp.eq.s32.totalorder %v2569, %v3267
      %vm3382 = vcmp.eq.s32.totalorder %v2569, %v3270
      %vm3383 = vcmp.eq.s32.totalorder %v2569, %v3273
      %vm3384 = vcmp.eq.s32.totalorder %v2569, %v3276
      %vm3385 = vcmp.eq.s32.totalorder %v2569, %v3279
      %vm3386 = vcmp.eq.s32.totalorder %v2569, %v3282
      %vm3387 = vcmp.eq.s32.totalorder %v2569, %v3285
      %vm3388 = vcmp.eq.s32.totalorder %v2569, %v3288
      %vm3389 = vcmp.eq.s32.totalorder %v2569, %v3291
      %vm3390 = vcmp.eq.s32.totalorder %v2569, %v3294
      %vm3391 = vcmp.eq.s32.totalorder %v2569, %v3297
      %vm3392 = vcmp.eq.s32.totalorder %v2569, %v3300
      %vm3393 = vcmp.eq.s32.totalorder %v2569, %v3303
      %vm3394 = vcmp.eq.s32.totalorder %v2569, %v3306
      %vm3395 = vcmp.eq.s32.totalorder %v2569, %v3309
      %vm3396 = vcmp.eq.s32.totalorder %v2569, %v3312
      %vm3397 = vcmp.eq.s32.totalorder %v2569, %v3315
      %vm3398 = vcmp.eq.s32.totalorder %v2569, %v3318
      %vm3399 = vcmp.eq.s32.totalorder %v2569, %v3321
      %vm3400 = vcmp.eq.s32.totalorder %v2569, %v3324
      %vm3401 = vcmp.eq.s32.totalorder %v2569, %v3327
      %vm3402 = vcmp.eq.s32.totalorder %v2569, %v3330
      %vm3403 = vcmp.eq.s32.totalorder %v2569, %v3333
      %vm3404 = vcmp.eq.s32.totalorder %v2569, %v3336
      %vm3405 = vcmp.eq.s32.totalorder %v2569, %v3339
      %vm3406 = vcmp.eq.s32.totalorder %v2569, %v3342
      %vm3407 = vcmp.eq.s32.totalorder %v2569, %v3345
      %vm3408 = vcmp.eq.s32.totalorder %v2569, %v3348
      %vm3409 = vcmp.eq.s32.totalorder %v2569, %v3351
      %vm3410 = vcmp.eq.s32.totalorder %v2569, %v3354
      %v3411 = vsel %vm3355, %v2908, 0.0
      %v3412 = vsel %vm3356, %v2910, 0.0
      %v3413 = vsel %vm3357, %v2912, 0.0
      %v3414 = vsel %vm3358, %v2914, 0.0
      %v3415 = vsel %vm3359, %v2916, 0.0
      %v3416 = vsel %vm3360, %v2918, 0.0
      %v3417 = vsel %vm3361, %v2920, 0.0
      %v3418 = vsel %vm3362, %v2922, 0.0
      %v3419 = vsel %vm3363, %v2924, 0.0
      %v3420 = vsel %vm3364, %v2926, 0.0
      %v3421 = vsel %vm3365, %v2928, 0.0
      %v3422 = vsel %vm3366, %v2930, 0.0
      %v3423 = vsel %vm3367, %v2932, 0.0
      %v3424 = vsel %vm3368, %v2934, 0.0
      %v3425 = vsel %vm3369, %v2936, 0.0
      %v3426 = vsel %vm3370, %v2938, 0.0
      %v3427 = vsel %vm3371, %v2940, 0.0
      %v3428 = vsel %vm3372, %v2942, 0.0
      %v3429 = vsel %vm3373, %v2944, 0.0
      %v3430 = vsel %vm3374, %v2946, 0.0
      %v3431 = vsel %vm3375, %v2948, 0.0
      %v3432 = vsel %vm3376, %v2950, 0.0
      %v3433 = vsel %vm3377, %v2952, 0.0
      %v3434 = vsel %vm3378, %v2954, 0.0
      %v3435 = vsel %vm3379, %v2956, 0.0
      %v3436 = vsel %vm3380, %v2958, 0.0
      %v3437 = vsel %vm3381, %v2960, 0.0
      %v3438 = vsel %vm3382, %v2962, 0.0
      %v3439 = vsel %vm3383, %v2964, 0.0
      %v3440 = vsel %vm3384, %v2966, 0.0
      %v3441 = vsel %vm3385, %v2968, 0.0
      %v3442 = vsel %vm3386, %v2970, 0.0
      %v3443 = vsel %vm3387, %v2972, 0.0
      %v3444 = vsel %vm3388, %v2974, 0.0
      %v3445 = vsel %vm3389, %v2976, 0.0
      %v3446 = vsel %vm3390, %v2978, 0.0
      %v3447 = vsel %vm3391, %v2980, 0.0
      %v3448 = vsel %vm3392, %v2982, 0.0
      %v3449 = vsel %vm3393, %v2984, 0.0
      %v3450 = vsel %vm3394, %v2986, 0.0
      %v3451 = vsel %vm3395, %v2988, 0.0
      %v3452 = vsel %vm3396, %v2990, 0.0
      %v3453 = vsel %vm3397, %v2992, 0.0
      %v3454 = vsel %vm3398, %v2994, 0.0
      %v3455 = vsel %vm3399, %v2996, 0.0
      %v3456 = vsel %vm3400, %v2998, 0.0
      %v3457 = vsel %vm3401, %v3000, 0.0
      %v3458 = vsel %vm3402, %v3002, 0.0
      %v3459 = vsel %vm3403, %v3004, 0.0
      %v3460 = vsel %vm3404, %v3006, 0.0
      %v3461 = vsel %vm3405, %v3008, 0.0
      %v3462 = vsel %vm3406, %v3010, 0.0
      %v3463 = vsel %vm3407, %v3012, 0.0
      %v3464 = vsel %vm3408, %v3014, 0.0
      %v3465 = vsel %vm3409, %v3016, 0.0
      %v3466 = vsel %vm3410, %v3018, 0.0
      %3467 = vadd.xlane.f32.xlu0 %v3411
      %v3468 = vpop.xlane.xlu0 %3467
      %3469 = vadd.xlane.f32.xlu0 %v3412
      %v3470 = vpop.xlane.xlu0 %3469
      %3471 = vadd.xlane.f32.xlu0 %v3413
      %v3472 = vpop.xlane.xlu0 %3471
      %3473 = vadd.xlane.f32.xlu0 %v3414
      %v3474 = vpop.xlane.xlu0 %3473
      %3475 = vadd.xlane.f32.xlu0 %v3415
      %v3476 = vpop.xlane.xlu0 %3475
      %3477 = vadd.xlane.f32.xlu0 %v3416
      %v3478 = vpop.xlane.xlu0 %3477
      %3479 = vadd.xlane.f32.xlu0 %v3417
      %v3480 = vpop.xlane.xlu0 %3479
      %3481 = vadd.xlane.f32.xlu0 %v3418
      %v3482 = vpop.xlane.xlu0 %3481
      %3483 = vadd.xlane.f32.xlu0 %v3419
      %v3484 = vpop.xlane.xlu0 %3483
      %3485 = vadd.xlane.f32.xlu0 %v3420
      %v3486 = vpop.xlane.xlu0 %3485
      %3487 = vadd.xlane.f32.xlu0 %v3421
      %v3488 = vpop.xlane.xlu0 %3487
      %3489 = vadd.xlane.f32.xlu0 %v3422
      %v3490 = vpop.xlane.xlu0 %3489
      %3491 = vadd.xlane.f32.xlu0 %v3423
      %v3492 = vpop.xlane.xlu0 %3491
      %3493 = vadd.xlane.f32.xlu0 %v3424
      %v3494 = vpop.xlane.xlu0 %3493
      %3495 = vadd.xlane.f32.xlu0 %v3425
      %v3496 = vpop.xlane.xlu0 %3495
      %3497 = vadd.xlane.f32.xlu0 %v3426
      %v3498 = vpop.xlane.xlu0 %3497
      %3499 = vadd.xlane.f32.xlu0 %v3427
      %v3500 = vpop.xlane.xlu0 %3499
      %3501 = vadd.xlane.f32.xlu0 %v3428
      %v3502 = vpop.xlane.xlu0 %3501
      %3503 = vadd.xlane.f32.xlu0 %v3429
      %v3504 = vpop.xlane.xlu0 %3503
      %3505 = vadd.xlane.f32.xlu0 %v3430
      %v3506 = vpop.xlane.xlu0 %3505
      %3507 = vadd.xlane.f32.xlu0 %v3431
      %v3508 = vpop.xlane.xlu0 %3507
      %3509 = vadd.xlane.f32.xlu0 %v3432
      %v3510 = vpop.xlane.xlu0 %3509
      %3511 = vadd.xlane.f32.xlu0 %v3433
      %v3512 = vpop.xlane.xlu0 %3511
      %3513 = vadd.xlane.f32.xlu0 %v3434
      %v3514 = vpop.xlane.xlu0 %3513
      %3515 = vadd.xlane.f32.xlu0 %v3435
      %v3516 = vpop.xlane.xlu0 %3515
      %3517 = vadd.xlane.f32.xlu0 %v3436
      %v3518 = vpop.xlane.xlu0 %3517
      %3519 = vadd.xlane.f32.xlu0 %v3437
      %v3520 = vpop.xlane.xlu0 %3519
      %3521 = vadd.xlane.f32.xlu0 %v3438
      %v3522 = vpop.xlane.xlu0 %3521
      %3523 = vadd.xlane.f32.xlu0 %v3439
      %v3524 = vpop.xlane.xlu0 %3523
      %3525 = vadd.xlane.f32.xlu0 %v3440
      %v3526 = vpop.xlane.xlu0 %3525
      %3527 = vadd.xlane.f32.xlu0 %v3441
      %v3528 = vpop.xlane.xlu0 %3527
      %3529 = vadd.xlane.f32.xlu0 %v3442
      %v3530 = vpop.xlane.xlu0 %3529
      %3531 = vadd.xlane.f32.xlu0 %v3443
      %v3532 = vpop.xlane.xlu0 %3531
      %3533 = vadd.xlane.f32.xlu0 %v3444
      %v3534 = vpop.xlane.xlu0 %3533
      %3535 = vadd.xlane.f32.xlu0 %v3445
      %v3536 = vpop.xlane.xlu0 %3535
      %3537 = vadd.xlane.f32.xlu0 %v3446
      %v3538 = vpop.xlane.xlu0 %3537
      %3539 = vadd.xlane.f32.xlu0 %v3447
      %v3540 = vpop.xlane.xlu0 %3539
      %3541 = vadd.xlane.f32.xlu0 %v3448
      %v3542 = vpop.xlane.xlu0 %3541
      %3543 = vadd.xlane.f32.xlu0 %v3449
      %v3544 = vpop.xlane.xlu0 %3543
      %3545 = vadd.xlane.f32.xlu0 %v3450
      %v3546 = vpop.xlane.xlu0 %3545
      %3547 = vadd.xlane.f32.xlu0 %v3451
      %v3548 = vpop.xlane.xlu0 %3547
      %3549 = vadd.xlane.f32.xlu0 %v3452
      %v3550 = vpop.xlane.xlu0 %3549
      %3551 = vadd.xlane.f32.xlu0 %v3453
      %v3552 = vpop.xlane.xlu0 %3551
      %3553 = vadd.xlane.f32.xlu0 %v3454
      %v3554 = vpop.xlane.xlu0 %3553
      %3555 = vadd.xlane.f32.xlu0 %v3455
      %v3556 = vpop.xlane.xlu0 %3555
      %3557 = vadd.xlane.f32.xlu0 %v3456
      %v3558 = vpop.xlane.xlu0 %3557
      %3559 = vadd.xlane.f32.xlu0 %v3457
      %v3560 = vpop.xlane.xlu0 %3559
      %3561 = vadd.xlane.f32.xlu0 %v3458
      %v3562 = vpop.xlane.xlu0 %3561
      %3563 = vadd.xlane.f32.xlu0 %v3459
      %v3564 = vpop.xlane.xlu0 %3563
      %3565 = vadd.xlane.f32.xlu0 %v3460
      %v3566 = vpop.xlane.xlu0 %3565
      %3567 = vadd.xlane.f32.xlu0 %v3461
      %v3568 = vpop.xlane.xlu0 %3567
      %3569 = vadd.xlane.f32.xlu0 %v3462
      %v3570 = vpop.xlane.xlu0 %3569
      %3571 = vadd.xlane.f32.xlu0 %v3463
      %v3572 = vpop.xlane.xlu0 %3571
      %3573 = vadd.xlane.f32.xlu0 %v3464
      %v3574 = vpop.xlane.xlu0 %3573
      %3575 = vadd.xlane.f32.xlu0 %v3465
      %v3576 = vpop.xlane.xlu0 %3575
      %3577 = vadd.xlane.f32.xlu0 %v3466
      %v3578 = vpop.xlane.xlu0 %3577
      %v3579 = vrcp.pop %v3020
      %v3580 = vrcp.pop %v3022
      %v3581 = vrcp.pop %v3024
      %v3582 = vrcp.pop %v3026
      %v3583 = vrcp.pop %v3028
      %v3584 = vrcp.pop %v3030
      %v3585 = vrcp.pop %v3032
      %v3586 = vrcp.pop %v3034
      %v3587 = vrcp.pop %v3036
      %v3588 = vrcp.pop %v3038
      %v3589 = vrcp.pop %v3040
      %v3590 = vrcp.pop %v3042
      %v3591 = vrcp.pop %v3044
      %v3592 = vrcp.pop %v3046
      %v3593 = vrcp.pop %v3048
      %v3594 = vrcp.pop %v3050
      %v3595 = vrcp.pop %v3052
      %v3596 = vrcp.pop %v3054
      %v3597 = vrcp.pop %v3056
      %v3598 = vrcp.pop %v3058
      %v3599 = vrcp.pop %v3060
      %v3600 = vrcp.pop %v3062
      %v3601 = vrcp.pop %v3064
      %v3602 = vrcp.pop %v3066
      %v3603 = vrcp.pop %v3068
      %v3604 = vrcp.pop %v3070
      %v3605 = vrcp.pop %v3072
      %v3606 = vrcp.pop %v3074
      %v3607 = vrcp.pop %v3076
      %v3608 = vrcp.pop %v3078
      %v3609 = vrcp.pop %v3080
      %v3610 = vrcp.pop %v3082
      %v3611 = vrcp.pop %v3084
      %v3612 = vrcp.pop %v3086
      %v3613 = vrcp.pop %v3088
      %v3614 = vrcp.pop %v3090
      %v3615 = vrcp.pop %v3092
      %v3616 = vrcp.pop %v3094
      %v3617 = vrcp.pop %v3096
      %v3618 = vrcp.pop %v3098
      %v3619 = vrcp.pop %v3100
      %v3620 = vrcp.pop %v3102
      %v3621 = vrcp.pop %v3104
      %v3622 = vrcp.pop %v3106
      %v3623 = vrcp.pop %v3108
      %v3624 = vrcp.pop %v3110
      %v3625 = vrcp.pop %v3112
      %v3626 = vrcp.pop %v3114
      %v3627 = vrcp.pop %v3116
      %v3628 = vrcp.pop %v3118
      %v3629 = vrcp.pop %v3120
      %v3630 = vrcp.pop %v3122
      %v3631 = vrcp.pop %v3124
      %v3632 = vrcp.pop %v3126
      %v3633 = vrcp.pop %v3128
      %v3634 = vrcp.pop %v3130
      %v3635 = vmul.f32 %v3468, %v3579
      %v3636 = vmul.f32 %v3470, %v3580
      %v3637 = vmul.f32 %v3472, %v3581
      %v3638 = vmul.f32 %v3474, %v3582
      %v3639 = vmul.f32 %v3476, %v3583
      %v3640 = vmul.f32 %v3478, %v3584
      %v3641 = vmul.f32 %v3480, %v3585
      %v3642 = vmul.f32 %v3482, %v3586
      %v3643 = vmul.f32 %v3484, %v3587
      %v3644 = vmul.f32 %v3486, %v3588
      %v3645 = vmul.f32 %v3488, %v3589
      %v3646 = vmul.f32 %v3490, %v3590
      %v3647 = vmul.f32 %v3492, %v3591
      %v3648 = vmul.f32 %v3494, %v3592
      %v3649 = vmul.f32 %v3496, %v3593
      %v3650 = vmul.f32 %v3498, %v3594
      %v3651 = vmul.f32 %v3500, %v3595
      %v3652 = vmul.f32 %v3502, %v3596
      %v3653 = vmul.f32 %v3504, %v3597
      %v3654 = vmul.f32 %v3506, %v3598
      %v3655 = vmul.f32 %v3508, %v3599
      %v3656 = vmul.f32 %v3510, %v3600
      %v3657 = vmul.f32 %v3512, %v3601
      %v3658 = vmul.f32 %v3514, %v3602
      %v3659 = vmul.f32 %v3516, %v3603
      %v3660 = vmul.f32 %v3518, %v3604
      %v3661 = vmul.f32 %v3520, %v3605
      %v3662 = vmul.f32 %v3522, %v3606
      %v3663 = vmul.f32 %v3524, %v3607
      %v3664 = vmul.f32 %v3526, %v3608
      %v3665 = vmul.f32 %v3528, %v3609
      %v3666 = vmul.f32 %v3530, %v3610
      %v3667 = vmul.f32 %v3532, %v3611
      %v3668 = vmul.f32 %v3534, %v3612
      %v3669 = vmul.f32 %v3536, %v3613
      %v3670 = vmul.f32 %v3538, %v3614
      %v3671 = vmul.f32 %v3540, %v3615
      %v3672 = vmul.f32 %v3542, %v3616
      %v3673 = vmul.f32 %v3544, %v3617
      %v3674 = vmul.f32 %v3546, %v3618
      %v3675 = vmul.f32 %v3548, %v3619
      %v3676 = vmul.f32 %v3550, %v3620
      %v3677 = vmul.f32 %v3552, %v3621
      %v3678 = vmul.f32 %v3554, %v3622
      %v3679 = vmul.f32 %v3556, %v3623
      %v3680 = vmul.f32 %v3558, %v3624
      %v3681 = vmul.f32 %v3560, %v3625
      %v3682 = vmul.f32 %v3562, %v3626
      %v3683 = vmul.f32 %v3564, %v3627
      %v3684 = vmul.f32 %v3566, %v3628
      %v3685 = vmul.f32 %v3568, %v3629
      %v3686 = vmul.f32 %v3570, %v3630
      %v3687 = vmul.f32 %v3572, %v3631
      %v3688 = vmul.f32 %v3574, %v3632
      %v3689 = vmul.f32 %v3576, %v3633
      %v3690 = vmul.f32 %v3578, %v3634
      %v3691 = vadd.f32 %v3635, %v3636
      %v3692 = vadd.f32 %v3691, %v3637
      %v3693 = vadd.f32 %v3692, %v3638
      %v3694 = vadd.f32 %v3693, %v3639
      %v3695 = vadd.f32 %v3694, %v3640
      %v3696 = vadd.f32 %v3695, %v3641
      %v3697 = vadd.f32 %v3696, %v3642
      %v3698 = vadd.f32 %v3643, %v3651
      %v3699 = vadd.f32 %v3644, %v3652
      %v3700 = vadd.f32 %v3645, %v3653
      %v3701 = vadd.f32 %v3646, %v3654
      %v3702 = vadd.f32 %v3647, %v3655
      %v3703 = vadd.f32 %v3648, %v3656
      %v3704 = vadd.f32 %v3649, %v3657
      %v3705 = vadd.f32 %v3650, %v3658
      %v3706 = vadd.f32 %v3698, %v3659
      %v3707 = vadd.f32 %v3699, %v3660
      %v3708 = vadd.f32 %v3700, %v3661
      %v3709 = vadd.f32 %v3701, %v3662
      %v3710 = vadd.f32 %v3702, %v3663
      %v3711 = vadd.f32 %v3703, %v3664
      %v3712 = vadd.f32 %v3704, %v3665
      %v3713 = vadd.f32 %v3705, %v3666
      %v3714 = vadd.f32 %v3706, %v3667
      %v3715 = vadd.f32 %v3707, %v3668
      %v3716 = vadd.f32 %v3708, %v3669
      %v3717 = vadd.f32 %v3709, %v3670
      %v3718 = vadd.f32 %v3710, %v3671
      %v3719 = vadd.f32 %v3711, %v3672
      %v3720 = vadd.f32 %v3712, %v3673
      %v3721 = vadd.f32 %v3713, %v3674
      %v3722 = vadd.f32 %v3714, %v3675
      %v3723 = vadd.f32 %v3715, %v3676
      %v3724 = vadd.f32 %v3716, %v3677
      %v3725 = vadd.f32 %v3717, %v3678
      %v3726 = vadd.f32 %v3718, %v3679
      %v3727 = vadd.f32 %v3719, %v3680
      %v3728 = vadd.f32 %v3720, %v3681
      %v3729 = vadd.f32 %v3721, %v3682
      %v3730 = vadd.f32 %v3722, %v3683
      %v3731 = vadd.f32 %v3723, %v3684
      %v3732 = vadd.f32 %v3724, %v3685
      %v3733 = vadd.f32 %v3725, %v3686
      %v3734 = vadd.f32 %v3726, %v3687
      %v3735 = vadd.f32 %v3727, %v3688
      %v3736 = vadd.f32 %v3728, %v3689
      %v3737 = vadd.f32 %v3729, %v3690
      %v3738 = vadd.f32 %v3730, %v3731
      %v3739 = vadd.f32 %v3738, %v3732
      %v3740 = vadd.f32 %v3739, %v3733
      %v3741 = vadd.f32 %v3740, %v3734
      %v3742 = vadd.f32 %v3741, %v3735
      %v3743 = vadd.f32 %v3742, %v3736
      %v3744 = vadd.f32 %v3743, %v3737
      %v3745 = vmul.f32 %v1613, 2.0
      %v3746 = vsub.f32 %v3745, %v3697
      %v3747 = vmul.f32 %v3744, 0.16666667
      %v3748 = vsub.f32 %v3746, %v3747
      %vm3749 = vcmask 7168
      %3750 = vst.msk [vmem:[%s397] sm:$0xff] %vm3749, %v3748
      %p3751 = scmp.lt.s32.totalorder %s21, 1
      %s3752 = scalar_select %p3751, %s21, 1
      %s3753 = smul.addr %s3752, 8
      %s3754 = scalar_lea.vmem %s10, %s3753
      // Predicated region
      $region61: #{aligned_embeddings_forward.1} parent=59 // pred_check
        %p3755 = pneg %p264
      $region62: #{aligned_embeddings_forward.1} parent=59 // pred_check_branch
        %3757 = sbr.rel (%p3755) target = $region64
      $region63: #{aligned_embeddings_forward.1} parent=59 // pred_region
        _
      $region64: #{aligned_embeddings_forward.1} parent=59 // pred_fallthru
        _
    $region60: #{aligned_embeddings_forward.1} parent=5 // pred_fallthru
      _
    %p3758 = scmp.le.s32.totalorder 2, %s16
    // Predicated region
    $region65: #{aligned_embeddings_forward.1} parent=5 // pred_check
      %p3759 = pneg %p3758
    $region66: #{aligned_embeddings_forward.1} parent=5 // pred_check_branch
      %3761 = sbr.rel (%p3759) target = $region68
    $region67: #{aligned_embeddings_forward.1} parent=5 // pred_region
      %s3762 = ssub.s32 %s16, 2
      // Predicated region
      $region69: #{aligned_embeddings_forward.1} parent=67 // pred_check
        %p3763 = pneg %p270
      $region70: #{aligned_embeddings_forward.1} parent=67 // pred_check_branch
        %3765 = sbr.rel (%p3763) target = $region72
      $region71: #{aligned_embeddings_forward.1} parent=67 // pred_region
        %p3766 = scmp.lt.s32.totalorder %s22, 1
        %s3767 = scalar_select %p3766, %s22, 1
        %s3768 = smul.addr %s3767, 8
        %s3769 = scalar_lea.vmem %s10, %s3768
      $region72: #{aligned_embeddings_forward.1} parent=67 // pred_fallthru
        _
    $region68: #{aligned_embeddings_forward.1} parent=5 // pred_fallthru
      _
  $region6: #{aligned_embeddings_forward.1} parent=0 // loop_footer
    %s20 = sadd.s32 1, %s16
  $region7: #{aligned_embeddings_forward.1} parent=0 // loop_footer_branch
    %15 = sbr.rel target = $region3
  $region8: #{aligned_embeddings_forward.1} parent=0 // loop_exit
    _

</llo_original>
